<compile_context>
chip_gen: v5e
topology: v5e:2x2
jax: 0.10.0
libtpu: 0.0.40
codegen_flags: <defaults>
</compile_context>

<pallas_src>
import math
from functools import partial

import numpy as np
import jax
import jax.numpy as jnp
from jax import lax
from jax.experimental import pallas as pl
from jax.experimental.pallas import tpu as pltpu

# ---------------- configuration ----------------
MODEL_DIM = 32
NUM_HEADS = 4
DILATION = 2
WINDOW_W = 8          # windowed_attn_w
LONGTERM_G = 8        # long_term_attn_g
DIM_KV = MODEL_DIM // 2          # 16
HEAD_DIM = DIM_KV // NUM_HEADS   # 4
LANES = 128

# ---- packed weight-slab row offsets (all block starts are multiples of 8) ----
_R_CW = 0       # conv weight   [128, 32]  (3 taps x 32 rows, rows 96:128 zero)
_R_CB = 128     # conv bias     [1, 32]
_R_WQKV = 136   # win qkv W     [32, 48]
_R_WQKVB = 168  # win qkv bias  [1, 48]
_R_WO = 176     # win out W     [16, 32]
_R_WOB = 192    # win out bias  [1, 32]
_R_LQKV = 200   # ltc qkv W     [32, 48]
_R_LQKVB = 232  # ltc qkv bias  [1, 48]
_R_LO = 240     # ltc out W     [16, 32]
_R_LOB = 256    # ltc out bias  [1, 32]
_R_OL = 264     # out_linear W  [32, 32]
_R_OLB = 296    # out_linear b  [1, 32]
_W_ROWS = 304


def _erf(x):
    # Abramowitz-Stegun 7.1.26 (|err| < 1.5e-7): only exp/mul/add/select, all of
    # which lower cleanly on the TPU VPU/EUP (no dependence on a native erf op).
    a1, a2, a3, a4, a5 = 0.254829592, -0.284496736, 1.421413741, -1.453152027, 1.061405429
    p = 0.3275911
    sgn = jnp.where(x < 0.0, -1.0, 1.0)
    ax = jnp.abs(x)
    t = 1.0 / (1.0 + p * ax)
    poly = ((((a5 * t + a4) * t + a3) * t + a2) * t + a1) * t
    return sgn * (1.0 - poly * jnp.exp(-ax * ax))


def _gelu(x):
    # exact (erf-based) GELU, matching nn.GELU() default
    return 0.5 * x * (1.0 + _erf(x * (1.0 / math.sqrt(2.0))))


def _mh_attention(q3, kv_chunks, m2):
    """Multi-head attention with heads folded into the batch dim (one softmax).

    q3:        [Nb, Lq, DIM_KV]
    kv_chunks: list of (k, v), each [Nb, Lc, DIM_KV]; keys are the lane-concat of
               the chunks (used to express overlapping 2W windows without copies).
    m2:        [H*Nb, sum(Lc)] float key mask (head-major: row = h*Nb + n).
    Returns    [Nb, Lq, DIM_KV] with heads combined back onto lanes.
    """
    Nb, Lq, _ = q3.shape
    scale = 1.0 / math.sqrt(HEAD_DIM)

    def fold_heads(t):  # [Nb, L, DK] -> [H*Nb, L, HEAD_DIM]  (head-major on axis 0)
        return jnp.concatenate(
            [t[:, :, h * HEAD_DIM:(h + 1) * HEAD_DIM] for h in range(NUM_HEADS)],
            axis=0)

    qh = fold_heads(q3) * scale
    khs = [fold_heads(k) for k, _ in kv_chunks]
    vhs = [fold_heads(v) for _, v in kv_chunks]

    s = jnp.concatenate(
        [jnp.einsum('nqd,nkd->nqk', qh, kh, preferred_element_type=jnp.float32)
         for kh in khs], axis=-1)                               # [H*Nb, Lq, Lk]
    s = s + (m2[:, None, :] - 1.0) * 1e9                        # additive finite mask
    s = s - jnp.max(s, axis=-1, keepdims=True)
    e = jnp.exp(s)
    p = e * pl.reciprocal(jnp.sum(e, axis=-1, keepdims=True), approx=True)

    o = None
    off = 0
    for kh, vh in zip(khs, vhs):
        lc = kh.shape[1]
        oc = jnp.einsum('nqk,nkd->nqd', p[:, :, off:off + lc], vh,
                        preferred_element_type=jnp.float32)
        o = oc if o is None else o + oc
        off += lc

    # reference zeroes the output of fully-masked (patch, head) rows
    nonempty = (jnp.sum(m2, axis=-1, keepdims=True) > 0.0).astype(jnp.float32)
    o = o * nonempty[:, :, None]
    # combine heads back onto lanes: [H*Nb, Lq, hd] -> [Nb, Lq, DK]
    return jnp.concatenate([o[h * Nb:(h + 1) * Nb] for h in range(NUM_HEADS)], axis=-1)


# ---------------- fused LTCBlock kernel (one batch element per grid step) ------------
def _ltc_block_kernel(x_ref, wm_ref, gm_ref, w_ref, o_ref, ltc_scr, *, seq_len):
    T = seq_len
    D = MODEL_DIM
    DK = DIM_KV
    W = WINDOW_W
    G = LONGTERM_G
    dil = DILATION
    pad_w = (-T) % W
    Tw = T + pad_w
    Nw = Tw // W
    pad_g = (-T) % G
    Tg = T + pad_g
    Ng = Tg // G
    halo = W // 2
    To = T + ((-T) % 4)     # rows padded so the output packs into 128 lanes
    Q4 = To // 4

    slab = x_ref[0]                              # [Tc, 64]: 0:32 = x (halo padded), 32:64 = mask
    x = slab[dil:dil + T, 0:D]                   # original input (final residual)
    m32 = slab[dil:dil + T, D:2 * D]             # [T, 32] mask pre-broadcast to 32 lanes

    # ---- DilatedConv: one K=128 matmul over [tap0 | tap1 | tap2 | junk*0] ----
    xcat = jnp.concatenate(
        [slab[0:T, 0:D], x, slab[2 * dil:2 * dil + T, 0:2 * D]], axis=-1)   # [T, 128]
    h0 = (jnp.dot(xcat, w_ref[_R_CW:_R_CW + 128, 0:D],
                  preferred_element_type=jnp.float32)
          + w_ref[_R_CB:_R_CB + 1, 0:D])
    out0 = _gelu(h0) * m32                                                  # [T, 32]

    # ---- WindowedAttention: q from W-patches, k=v from overlapping 2W-patches ----
    yh = jnp.concatenate(
        [jnp.zeros((halo, D), jnp.float32), out0,
         jnp.zeros((pad_w + halo, D), jnp.float32)], axis=0)                # [(Nw+1)*W, 32]
    proj = (jnp.dot(yh, w_ref[_R_WQKV:_R_WQKV + D, 0:3 * DK],
                    preferred_element_type=jnp.float32)
            + w_ref[_R_WQKVB:_R_WQKVB + 1, 0:3 * DK])                       # [(Nw+1)*W, 48]
    q_all = proj[halo:halo + Tw, 0:DK]
    kr = proj[:, DK:2 * DK].reshape(Nw + 1, W, DK)
    vr = proj[:, 2 * DK:3 * DK].reshape(Nw + 1, W, DK)
    Qw = q_all.reshape(Nw, W, DK)
    # overlapping window n = [half-window n | half-window n+1] (no Nw-unrolled stacks)
    zw = _mh_attention(Qw, [(kr[0:Nw], vr[0:Nw]), (kr[1:Nw + 1], vr[1:Nw + 1])],
                       wm_ref[0])                                           # [Nw, W, 16]
    zw = _gelu(zw.reshape(Tw, DK))
    aw = (jnp.dot(zw, w_ref[_R_WO:_R_WO + DK, 0:D],
                  preferred_element_type=jnp.float32)
          + w_ref[_R_WOB:_R_WOB + 1, 0:D])
    out1 = aw[0:T, :] * m32 + out0                                          # [T, 32]

    # ---- LTContextAttention: stride-G attention over the patch index ----
    yg = out1 if pad_g == 0 else jnp.concatenate(
        [out1, jnp.zeros((pad_g, D), jnp.float32)], axis=0)                 # [Tg, 32]
    projg = (jnp.dot(yg, w_ref[_R_LQKV:_R_LQKV + D, 0:3 * DK],
                     preferred_element_type=jnp.float32)
             + w_ref[_R_LQKVB:_R_LQKVB + 1, 0:3 * DK])                      # [Tg, 48]
    # regroup (n*G + j) rows into offset-major [G, Ng, 48] with G strided VMEM reads
    # (linear cost; replaces the old Tg x Tg 0/1 permutation matmul)
    ltc_scr[...] = projg
    grp = jnp.stack([ltc_scr[pl.ds(j, Ng, stride=G), :] for j in range(G)], axis=0)
    Qg = grp[:, :, 0:DK]
    Kg = grp[:, :, DK:2 * DK]
    Vg = grp[:, :, 2 * DK:3 * DK]
    zg = _mh_attention(Qg, [(Kg, Vg)], gm_ref[0])                           # [G, Ng, 16]
    # flattening (G, Ng) -> Tg gives exactly the reference's '(b w) d n -> b d (w n)'
    # (w-major) row order, so no undo-permute is needed.
    zg = _gelu(zg.reshape(Tg, DK))
    ag = (jnp.dot(zg, w_ref[_R_LO:_R_LO + DK, 0:D],
                  preferred_element_type=jnp.float32)
          + w_ref[_R_LOB:_R_LOB + 1, 0:D])
    out2 = ag[0:T, :] * m32 + out1                                          # [T, 32]

    # ---- out_linear (Conv1d k=1) + dropout(id) + residual(inputs) + mask ----
    out3 = (jnp.dot(out2, w_ref[_R_OL:_R_OL + D, 0:D],
                    preferred_element_type=jnp.float32)
            + w_ref[_R_OLB:_R_OLB + 1, 0:D])
    out3 = (out3 + x) * m32                                                 # [T, 32]

    # ---- lane-dense store: 4 contiguous row chunks packed side-by-side on lanes ----
    if To > T:
        out3 = jnp.concatenate([out3, jnp.zeros((To - T, D), jnp.float32)], axis=0)
    packed = jnp.concatenate(
        [out3[r * Q4:(r + 1) * Q4, :] for r in range(4)], axis=-1)          # [Q4, 128]
    o_ref[0] = packed


# ---------------- wrapper ----------------
def ltc_block_forward(params, inputs, masks):
    # inputs: [B, model_dim, T] (NCW), masks: [B, 1, T] (1.0 valid / 0.0 pad)
    B, D, T = inputs.shape
    assert D == MODEL_DIM
    W, G, H, DK, dil = WINDOW_W, LONGTERM_G, NUM_HEADS, DIM_KV, DILATION
    pad_w = (-T) % W
    Tw = T + pad_w
    Nw = Tw // W
    pad_g = (-T) % G
    Tg = T + pad_g
    Ng = Tg // G
    Tc = T + 2 * dil
    To = T + ((-T) % 4)
    Q4 = To // 4

    x = jnp.transpose(inputs, (0, 2, 1)).astype(jnp.float32)            # [B, T, 32]
    mflat = masks[:, 0, :].astype(jnp.float32)                          # [B, T]
    m32 = jnp.broadcast_to(mflat[:, :, None], (B, T, D))                # [B, T, 32]
    slab = jnp.pad(jnp.concatenate([x, m32], axis=-1),
                   ((0, 0), (dil, dil), (0, 0)))                        # [B, Tc, 64]

    # Windowed key masks (pad to Tw, halo W/2, overlapping 2W windows), including the
    # reference's repeat(num_heads,1,1)-vs-head-major-split modulo quirk; emitted
    # head-major per batch element so the kernel can use them directly.
    mwh = jnp.pad(mflat, ((0, 0), (W // 2, pad_w + W // 2)))            # [B, Tw + W]
    widx = np.arange(Nw)[:, None] * W + np.arange(2 * W)[None, :]
    kmask_w = mwh[:, widx].reshape(B * Nw, 2 * W)
    qidx_w = (np.arange(B * Nw)[:, None] * H + np.arange(H)[None, :]) % (B * Nw)
    wmask = kmask_w[qidx_w].reshape(B, Nw, H, 2 * W)
    wmask = jnp.transpose(wmask, (0, 2, 1, 3)).reshape(B, H * Nw, 2 * W)

    # LTC key masks: per in-patch offset over the patch index, same quirk/ordering.
    mg = jnp.pad(mflat, ((0, 0), (0, pad_g)))                           # [B, Tg]
    kmask_g = mg.reshape(B, Ng, G).transpose(0, 2, 1).reshape(B * G, Ng)
    qidx_g = (np.arange(B * G)[:, None] * H + np.arange(H)[None, :]) % (B * G)
    gmask = kmask_g[qidx_g].reshape(B, G, H, Ng)
    gmask = jnp.transpose(gmask, (0, 2, 1, 3)).reshape(B, H * G, Ng)

    # One packed 128-lane weight slab (single DMA, static in-kernel slices).
    def put(s, r, c, w):
        return s.at[r:r + w.shape[0], c:c + w.shape[1]].set(w)

    pw, pg = params['win'], params['ltc']
    wslab = jnp.zeros((_W_ROWS, LANES), jnp.float32)
    wslab = put(wslab, _R_CW, 0, params['dc_w'].reshape(3 * D, D))
    wslab = put(wslab, _R_CB, 0, params['dc_b'])
    wslab = put(wslab, _R_WQKV, 0, jnp.concatenate([pw['wq'], pw['wk'], pw['wv']], axis=1))
    wslab = put(wslab, _R_WQKVB, 0, jnp.concatenate([pw['bq'], pw['bk'], pw['bv']], axis=1))
    wslab = put(wslab, _R_WO, 0, pw['wo'])
    wslab = put(wslab, _R_WOB, 0, pw['bo'])
    wslab = put(wslab, _R_LQKV, 0, jnp.concatenate([pg['wq'], pg['wk'], pg['wv']], axis=1))
    wslab = put(wslab, _R_LQKVB, 0, jnp.concatenate([pg['bq'], pg['bk'], pg['bv']], axis=1))
    wslab = put(wslab, _R_LO, 0, pg['wo'])
    wslab = put(wslab, _R_LOB, 0, pg['bo'])
    wslab = put(wslab, _R_OL, 0, params['ol_w'])
    wslab = put(wslab, _R_OLB, 0, params['ol_b'])

    kern = partial(_ltc_block_kernel, seq_len=T)
    out_packed = pl.pallas_call(
        kern,
        out_shape=jax.ShapeDtypeStruct((B, Q4, LANES), jnp.float32),
        grid=(B,),
        in_specs=[
            pl.BlockSpec((1, Tc, 2 * D), lambda i: (i, 0, 0)),       # [x | mask] slab
            pl.BlockSpec((1, H * Nw, 2 * W), lambda i: (i, 0, 0)),   # windowed key masks
            pl.BlockSpec((1, H * G, Ng), lambda i: (i, 0, 0)),       # LTC key masks
            pl.BlockSpec((_W_ROWS, LANES), lambda i: (0, 0)),        # packed weight slab
        ],
        out_specs=pl.BlockSpec((1, Q4, LANES), lambda i: (i, 0, 0)),
        scratch_shapes=[pltpu.VMEM((Tg, 3 * DK), jnp.float32)],      # LTC regroup scratch
        compiler_params=pltpu.CompilerParams(
            dimension_semantics=("parallel",),        # >=2 grid steps -> both v7x TCs
            vmem_limit_bytes=32 * 1024 * 1024),       # explicit, safe on v5e/v6e/v7x
    )(slab, wmask, gmask, wslab)

    # undo the lane-dense packing: [B, Q4, 128] -> [B, To, 32] -> [B, 32, T]
    out = out_packed.reshape(B, Q4, 4, D).transpose(0, 2, 1, 3).reshape(B, To, D)
    return jnp.transpose(out[:, :T, :], (0, 2, 1))


# ---------------- deterministic parameter init ----------------
def init_params(key):
    s = 0.08

    def attn_params(k):
        ks = jax.random.split(k, 8)
        return dict(
            wq=jax.random.normal(ks[0], (MODEL_DIM, DIM_KV), jnp.float32) * s,
            bq=jax.random.normal(ks[1], (1, DIM_KV), jnp.float32) * s,
            wk=jax.random.normal(ks[2], (MODEL_DIM, DIM_KV), jnp.float32) * s,
            bk=jax.random.normal(ks[3], (1, DIM_KV), jnp.float32) * s,
            wv=jax.random.normal(ks[4], (MODEL_DIM, DIM_KV), jnp.float32) * s,
            bv=jax.random.normal(ks[5], (1, DIM_KV), jnp.float32) * s,
            wo=jax.random.normal(ks[6], (DIM_KV, MODEL_DIM), jnp.float32) * s,
            bo=jax.random.normal(ks[7], (1, MODEL_DIM), jnp.float32) * s,
        )

    k0, k1, k2, k3, k4, k5 = jax.random.split(key, 6)
    return dict(
        dc_w=jax.random.normal(k0, (3, MODEL_DIM, MODEL_DIM), jnp.float32) * s,  # [tap,in,out]
        dc_b=jax.random.normal(k1, (1, MODEL_DIM), jnp.float32) * s,
        win=attn_params(k2),
        ltc=attn_params(k3),
        ol_w=jax.random.normal(k4, (MODEL_DIM, MODEL_DIM), jnp.float32) * s,
        ol_b=jax.random.normal(k5, (1, MODEL_DIM), jnp.float32) * s,
    )


if __name__ == "__main__":
    key = jax.random.PRNGKey(0)
    pkey, xkey = jax.random.split(key)
    params = init_params(pkey)

    B, T = 2, 16
    inputs = jax.random.normal(xkey, (B, MODEL_DIM, T), jnp.float32)
    valid_len = jnp.array([16, 12])
    masks = (jnp.arange(T)[None, :] < valid_len[:, None]).astype(jnp.float32)[:, None, :]

    fwd = jax.jit(ltc_block_forward)
    out = fwd(params, inputs, masks)
    jax.block_until_ready(out)

    assert out.shape == (B, MODEL_DIM, T)
    assert bool(jnp.all(jnp.isfinite(out)))
    print("KERNEL_OK")
</pallas_src>

<mosaic_0001>
module attributes {stable_mosaic.version = 11 : i64} {
  func.func @_ltc_block_kernel(%arg0: i32, %arg1: memref<1x20x64xf32, #tpu.memory_space<vmem>>, %arg2: memref<1x8x16xf32, #tpu.memory_space<vmem>>, %arg3: memref<1x32x2xf32, #tpu.memory_space<vmem>>, %arg4: memref<304x128xf32, #tpu.memory_space<vmem>>, %arg5: memref<1x4x128xf32, #tpu.memory_space<vmem>>, %arg6: memref<16x48xf32, #tpu.memory_space<vmem>>) attributes {dimension_semantics = [#tpu.dimension_semantics<parallel>], iteration_bounds = array<i64: 2>, scalar_prefetch = 0 : i64, scratch_operands = 1 : i64, tpu.core_type = #tpu.core_type<tc>, window_params = [{transform_indices = @transform_0, window_bounds = array<i64: 1, 20, 64>}, {transform_indices = @transform_1, window_bounds = array<i64: 1, 8, 16>}, {transform_indices = @transform_2, window_bounds = array<i64: 1, 32, 2>}, {pipeline_mode = #tpu.pipeline_mode<synchronous>, transform_indices = @transform_3, window_bounds = array<i64: 304, 128>}, {transform_indices = @transform_4, window_bounds = array<i64: 1, 4, 128>}]} {
    %c0 = arith.constant 0 : index
    %c0_0 = arith.constant 0 : index
    %c0_1 = arith.constant 0 : index
    %0 = vector.load %arg1[%c0, %c0_0, %c0_1] : memref<1x20x64xf32, #tpu.memory_space<vmem>>, vector<1x20x64xf32>
    %1 = vector.shape_cast %0 : vector<1x20x64xf32> to vector<20x64xf32>
    %2 = vector.extract_strided_slice %1 {offsets = [2, 0], sizes = [16, 32], strides = [1, 1]} : vector<20x64xf32> to vector<16x32xf32>
    %3 = vector.extract_strided_slice %1 {offsets = [2, 32], sizes = [16, 32], strides = [1, 1]} : vector<20x64xf32> to vector<16x32xf32>
    %4 = vector.extract_strided_slice %1 {offsets = [0, 0], sizes = [16, 32], strides = [1, 1]} : vector<20x64xf32> to vector<16x32xf32>
    %5 = vector.extract_strided_slice %1 {offsets = [4, 0], sizes = [16, 64], strides = [1, 1]} : vector<20x64xf32> to vector<16x64xf32>
    %6 = tpu.concatenate %4, %2, %5 in 1 : vector<16x32xf32>, vector<16x32xf32>, vector<16x64xf32> -> vector<16x128xf32>
    %c0_2 = arith.constant 0 : index
    %c0_3 = arith.constant 0 : index
    %7 = vector.load %arg4[%c0_2, %c0_3] : memref<304x128xf32, #tpu.memory_space<vmem>>, vector<128x32xf32>
    %cst = arith.constant dense<0.000000e+00> : vector<16x32xf32>
    %8 = tpu.matmul %6, %7, %cst {dimension_numbers = #tpu.dot_dimension_numbers<[1], [0], [0], [1], [0, 0, 1, 1], [], []>} : vector<16x128xf32>, vector<128x32xf32>, vector<16x32xf32> -> vector<16x32xf32>
    %c128 = arith.constant 128 : index
    %c0_4 = arith.constant 0 : index
    %9 = vector.load %arg4[%c128, %c0_4] : memref<304x128xf32, #tpu.memory_space<vmem>>, vector<1x32xf32>
    %10 = vector.broadcast %9 : vector<1x32xf32> to vector<16x32xf32>
    %11 = arith.addf %8, %10 : vector<16x32xf32>
    %cst_5 = arith.constant 5.000000e-01 : f32
    %12 = vector.broadcast %cst_5 : f32 to vector<16x32xf32>
    %13 = arith.mulf %12, %11 : vector<16x32xf32>
    %cst_6 = arith.constant 0.707106769 : f32
    %14 = vector.broadcast %cst_6 : f32 to vector<16x32xf32>
    %15 = arith.mulf %11, %14 : vector<16x32xf32>
    %cst_7 = arith.constant 0.000000e+00 : f32
    %16 = vector.broadcast %cst_7 : f32 to vector<16x32xf32>
    %17 = arith.cmpf olt, %15, %16 : vector<16x32xf32>
    %cst_8 = arith.constant -1.000000e+00 : f32
    %cst_9 = arith.constant 1.000000e+00 : f32
    %18 = vector.broadcast %cst_8 : f32 to vector<16x32xf32>
    %19 = vector.broadcast %cst_9 : f32 to vector<16x32xf32>
    %20 = arith.select %17, %18, %19 : vector<16x32xi1>, vector<16x32xf32>
    %21 = math.absf %15 : vector<16x32xf32>
    %cst_10 = arith.constant 0.327591091 : f32
    %22 = vector.broadcast %cst_10 : f32 to vector<16x32xf32>
    %23 = arith.mulf %22, %21 : vector<16x32xf32>
    %cst_11 = arith.constant 1.000000e+00 : f32
    %24 = vector.broadcast %cst_11 : f32 to vector<16x32xf32>
    %25 = arith.addf %24, %23 : vector<16x32xf32>
    %cst_12 = arith.constant 1.000000e+00 : f32
    %26 = vector.broadcast %cst_12 : f32 to vector<16x32xf32>
    %27 = arith.divf %26, %25 : vector<16x32xf32>
    %cst_13 = arith.constant 1.06140542 : f32
    %28 = vector.broadcast %cst_13 : f32 to vector<16x32xf32>
    %29 = arith.mulf %28, %27 : vector<16x32xf32>
    %cst_14 = arith.constant -1.45315206 : f32
    %30 = vector.broadcast %cst_14 : f32 to vector<16x32xf32>
    %31 = arith.addf %29, %30 : vector<16x32xf32>
    %32 = arith.mulf %31, %27 : vector<16x32xf32>
    %cst_15 = arith.constant 1.42141378 : f32
    %33 = vector.broadcast %cst_15 : f32 to vector<16x32xf32>
    %34 = arith.addf %32, %33 : vector<16x32xf32>
    %35 = arith.mulf %34, %27 : vector<16x32xf32>
    %cst_16 = arith.constant -0.284496725 : f32
    %36 = vector.broadcast %cst_16 : f32 to vector<16x32xf32>
    %37 = arith.addf %35, %36 : vector<16x32xf32>
    %38 = arith.mulf %37, %27 : vector<16x32xf32>
    %cst_17 = arith.constant 0.254829586 : f32
    %39 = vector.broadcast %cst_17 : f32 to vector<16x32xf32>
    %40 = arith.addf %38, %39 : vector<16x32xf32>
    %41 = arith.mulf %40, %27 : vector<16x32xf32>
    %cst_18 = arith.constant 0.000000e+00 : f32
    %42 = vector.broadcast %cst_18 : f32 to vector<16x32xf32>
    %43 = arith.subf %42, %21 : vector<16x32xf32>
    %44 = arith.mulf %43, %21 : vector<16x32xf32>
    %45 = math.exp %44 : vector<16x32xf32>
    %46 = arith.mulf %41, %45 : vector<16x32xf32>
    %cst_19 = arith.constant 1.000000e+00 : f32
    %47 = vector.broadcast %cst_19 : f32 to vector<16x32xf32>
    %48 = arith.subf %47, %46 : vector<16x32xf32>
    %49 = arith.mulf %20, %48 : vector<16x32xf32>
    %cst_20 = arith.constant 1.000000e+00 : f32
    %50 = vector.broadcast %cst_20 : f32 to vector<16x32xf32>
    %51 = arith.addf %50, %49 : vector<16x32xf32>
    %52 = arith.mulf %13, %51 : vector<16x32xf32>
    %53 = arith.mulf %52, %3 : vector<16x32xf32>
    %cst_21 = arith.constant 0.000000e+00 : f32
    %54 = vector.broadcast %cst_21 : f32 to vector<4x32xf32>
    %cst_22 = arith.constant 0.000000e+00 : f32
    %55 = vector.broadcast %cst_22 : f32 to vector<4x32xf32>
    %56 = tpu.concatenate %54, %53, %55 in 0 : vector<4x32xf32>, vector<16x32xf32>, vector<4x32xf32> -> vector<24x32xf32>
    %c136 = arith.constant 136 : index
    %c0_23 = arith.constant 0 : index
    %57 = vector.load %arg4[%c136, %c0_23] : memref<304x128xf32, #tpu.memory_space<vmem>>, vector<32x48xf32>
    %cst_24 = arith.constant dense<0.000000e+00> : vector<24x48xf32>
    %58 = tpu.matmul %56, %57, %cst_24 {dimension_numbers = #tpu.dot_dimension_numbers<[1], [0], [0], [1], [0, 0, 1, 1], [], []>} : vector<24x32xf32>, vector<32x48xf32>, vector<24x48xf32> -> vector<24x48xf32>
    %c168 = arith.constant 168 : index
    %c0_25 = arith.constant 0 : index
    %59 = vector.load %arg4[%c168, %c0_25] : memref<304x128xf32, #tpu.memory_space<vmem>>, vector<1x48xf32>
    %60 = vector.broadcast %59 : vector<1x48xf32> to vector<24x48xf32>
    %61 = arith.addf %58, %60 : vector<24x48xf32>
    %62 = vector.extract_strided_slice %61 {offsets = [4, 0], sizes = [16, 16], strides = [1, 1]} : vector<24x48xf32> to vector<16x16xf32>
    %63 = vector.extract_strided_slice %61 {offsets = [0, 16], sizes = [24, 16], strides = [1, 1]} : vector<24x48xf32> to vector<24x16xf32>
    %64 = vector.shape_cast %63 : vector<24x16xf32> to vector<3x8x16xf32>
    %65 = vector.extract_strided_slice %61 {offsets = [0, 32], sizes = [24, 16], strides = [1, 1]} : vector<24x48xf32> to vector<24x16xf32>
    %66 = vector.shape_cast %65 : vector<24x16xf32> to vector<3x8x16xf32>
    %67 = vector.shape_cast %62 : vector<16x16xf32> to vector<2x8x16xf32>
    %68 = vector.extract_strided_slice %64 {offsets = [0, 0, 0], sizes = [2, 8, 16], strides = [1, 1, 1]} : vector<3x8x16xf32> to vector<2x8x16xf32>
    %69 = vector.extract_strided_slice %66 {offsets = [0, 0, 0], sizes = [2, 8, 16], strides = [1, 1, 1]} : vector<3x8x16xf32> to vector<2x8x16xf32>
    %70 = vector.extract_strided_slice %64 {offsets = [1, 0, 0], sizes = [2, 8, 16], strides = [1, 1, 1]} : vector<3x8x16xf32> to vector<2x8x16xf32>
    %71 = vector.extract_strided_slice %66 {offsets = [1, 0, 0], sizes = [2, 8, 16], strides = [1, 1, 1]} : vector<3x8x16xf32> to vector<2x8x16xf32>
    %c0_26 = arith.constant 0 : index
    %c0_27 = arith.constant 0 : index
    %c0_28 = arith.constant 0 : index
    %72 = vector.load %arg2[%c0_26, %c0_27, %c0_28] : memref<1x8x16xf32, #tpu.memory_space<vmem>>, vector<1x8x16xf32>
    %73 = vector.shape_cast %72 : vector<1x8x16xf32> to vector<8x16xf32>
    %74 = vector.extract_strided_slice %67 {offsets = [0, 0, 0], sizes = [2, 8, 4], strides = [1, 1, 1]} : vector<2x8x16xf32> to vector<2x8x4xf32>
    %75 = vector.extract_strided_slice %67 {offsets = [0, 0, 4], sizes = [2, 8, 4], strides = [1, 1, 1]} : vector<2x8x16xf32> to vector<2x8x4xf32>
    %76 = vector.extract_strided_slice %67 {offsets = [0, 0, 8], sizes = [2, 8, 4], strides = [1, 1, 1]} : vector<2x8x16xf32> to vector<2x8x4xf32>
    %77 = vector.extract_strided_slice %67 {offsets = [0, 0, 12], sizes = [2, 8, 4], strides = [1, 1, 1]} : vector<2x8x16xf32> to vector<2x8x4xf32>
    %78 = tpu.concatenate %74, %75, %76, %77 in 0 : vector<2x8x4xf32>, vector<2x8x4xf32>, vector<2x8x4xf32>, vector<2x8x4xf32> -> vector<8x8x4xf32>
    %cst_29 = arith.constant 5.000000e-01 : f32
    %79 = vector.broadcast %cst_29 : f32 to vector<8x8x4xf32>
    %80 = arith.mulf %78, %79 : vector<8x8x4xf32>
    %81 = vector.extract_strided_slice %68 {offsets = [0, 0, 0], sizes = [2, 8, 4], strides = [1, 1, 1]} : vector<2x8x16xf32> to vector<2x8x4xf32>
    %82 = vector.extract_strided_slice %68 {offsets = [0, 0, 4], sizes = [2, 8, 4], strides = [1, 1, 1]} : vector<2x8x16xf32> to vector<2x8x4xf32>
    %83 = vector.extract_strided_slice %68 {offsets = [0, 0, 8], sizes = [2, 8, 4], strides = [1, 1, 1]} : vector<2x8x16xf32> to vector<2x8x4xf32>
    %84 = vector.extract_strided_slice %68 {offsets = [0, 0, 12], sizes = [2, 8, 4], strides = [1, 1, 1]} : vector<2x8x16xf32> to vector<2x8x4xf32>
    %85 = tpu.concatenate %81, %82, %83, %84 in 0 : vector<2x8x4xf32>, vector<2x8x4xf32>, vector<2x8x4xf32>, vector<2x8x4xf32> -> vector<8x8x4xf32>
    %86 = vector.extract_strided_slice %70 {offsets = [0, 0, 0], sizes = [2, 8, 4], strides = [1, 1, 1]} : vector<2x8x16xf32> to vector<2x8x4xf32>
    %87 = vector.extract_strided_slice %70 {offsets = [0, 0, 4], sizes = [2, 8, 4], strides = [1, 1, 1]} : vector<2x8x16xf32> to vector<2x8x4xf32>
    %88 = vector.extract_strided_slice %70 {offsets = [0, 0, 8], sizes = [2, 8, 4], strides = [1, 1, 1]} : vector<2x8x16xf32> to vector<2x8x4xf32>
    %89 = vector.extract_strided_slice %70 {offsets = [0, 0, 12], sizes = [2, 8, 4], strides = [1, 1, 1]} : vector<2x8x16xf32> to vector<2x8x4xf32>
    %90 = tpu.concatenate %86, %87, %88, %89 in 0 : vector<2x8x4xf32>, vector<2x8x4xf32>, vector<2x8x4xf32>, vector<2x8x4xf32> -> vector<8x8x4xf32>
    %91 = vector.extract_strided_slice %69 {offsets = [0, 0, 0], sizes = [2, 8, 4], strides = [1, 1, 1]} : vector<2x8x16xf32> to vector<2x8x4xf32>
    %92 = vector.extract_strided_slice %69 {offsets = [0, 0, 4], sizes = [2, 8, 4], strides = [1, 1, 1]} : vector<2x8x16xf32> to vector<2x8x4xf32>
    %93 = vector.extract_strided_slice %69 {offsets = [0, 0, 8], sizes = [2, 8, 4], strides = [1, 1, 1]} : vector<2x8x16xf32> to vector<2x8x4xf32>
    %94 = vector.extract_strided_slice %69 {offsets = [0, 0, 12], sizes = [2, 8, 4], strides = [1, 1, 1]} : vector<2x8x16xf32> to vector<2x8x4xf32>
    %95 = tpu.concatenate %91, %92, %93, %94 in 0 : vector<2x8x4xf32>, vector<2x8x4xf32>, vector<2x8x4xf32>, vector<2x8x4xf32> -> vector<8x8x4xf32>
    %96 = vector.extract_strided_slice %71 {offsets = [0, 0, 0], sizes = [2, 8, 4], strides = [1, 1, 1]} : vector<2x8x16xf32> to vector<2x8x4xf32>
    %97 = vector.extract_strided_slice %71 {offsets = [0, 0, 4], sizes = [2, 8, 4], strides = [1, 1, 1]} : vector<2x8x16xf32> to vector<2x8x4xf32>
    %98 = vector.extract_strided_slice %71 {offsets = [0, 0, 8], sizes = [2, 8, 4], strides = [1, 1, 1]} : vector<2x8x16xf32> to vector<2x8x4xf32>
    %99 = vector.extract_strided_slice %71 {offsets = [0, 0, 12], sizes = [2, 8, 4], strides = [1, 1, 1]} : vector<2x8x16xf32> to vector<2x8x4xf32>
    %100 = tpu.concatenate %96, %97, %98, %99 in 0 : vector<2x8x4xf32>, vector<2x8x4xf32>, vector<2x8x4xf32>, vector<2x8x4xf32> -> vector<8x8x4xf32>
    "tpu.trace_start"() <{level = 10 : i32, message = "nqd,nkd->nqk"}> : () -> ()
    %cst_30 = arith.constant dense<0.000000e+00> : vector<8x8x8xf32>
    %101 = tpu.matmul %80, %85, %cst_30 {dimension_numbers = #tpu.dot_dimension_numbers<[2], [2], [1], [1], [0, 0, 0, 1, 1, 1], [0], [0]>} : vector<8x8x4xf32>, vector<8x8x4xf32>, vector<8x8x8xf32> -> vector<8x8x8xf32>
    %cst_31 = arith.constant dense<0.000000e+00> : vector<8x8x8xf32>
    %102 = tpu.matmul %80, %90, %cst_31 {dimension_numbers = #tpu.dot_dimension_numbers<[2], [2], [1], [1], [0, 0, 0, 1, 1, 1], [0], [0]>} : vector<8x8x4xf32>, vector<8x8x4xf32>, vector<8x8x8xf32> -> vector<8x8x8xf32>
    "tpu.trace_stop"() : () -> ()
    %103 = tpu.concatenate %101, %102 in 2 : vector<8x8x8xf32>, vector<8x8x8xf32> -> vector<8x8x16xf32>
    %104 = vector.shape_cast %73 : vector<8x16xf32> to vector<8x1x16xf32>
    %cst_32 = arith.constant 1.000000e+00 : f32
    %105 = vector.broadcast %cst_32 : f32 to vector<8x1x16xf32>
    %106 = arith.subf %104, %105 : vector<8x1x16xf32>
    %cst_33 = arith.constant 1.000000e+09 : f32
    %107 = vector.broadcast %cst_33 : f32 to vector<8x1x16xf32>
    %108 = arith.mulf %106, %107 : vector<8x1x16xf32>
    %109 = vector.broadcast %108 : vector<8x1x16xf32> to vector<8x8x16xf32>
    %110 = arith.addf %103, %109 : vector<8x8x16xf32>
    %cst_34 = arith.constant dense<0xFF800000> : vector<8x8xf32>
    %111 = vector.multi_reduction <maximumf>, %110, %cst_34 [2] : vector<8x8x16xf32> to vector<8x8xf32>
    %112 = vector.shape_cast %111 : vector<8x8xf32> to vector<8x8x1xf32>
    %113 = vector.broadcast %112 : vector<8x8x1xf32> to vector<8x8x16xf32>
    %114 = arith.subf %110, %113 : vector<8x8x16xf32>
    %115 = math.exp %114 : vector<8x8x16xf32>
    %cst_35 = arith.constant dense<0.000000e+00> : vector<8x8xf32>
    %116 = vector.multi_reduction <add>, %115, %cst_35 [2] : vector<8x8x16xf32> to vector<8x8xf32>
    %117 = vector.shape_cast %116 : vector<8x8xf32> to vector<8x8x1xf32>
    %118 = tpu.reciprocal %117 {approx = true} : vector<8x8x1xf32> -> vector<8x8x1xf32>
    %119 = vector.broadcast %118 : vector<8x8x1xf32> to vector<8x8x16xf32>
    %120 = arith.mulf %115, %119 : vector<8x8x16xf32>
    %121 = vector.extract_strided_slice %120 {offsets = [0, 0, 0], sizes = [8, 8, 8], strides = [1, 1, 1]} : vector<8x8x16xf32> to vector<8x8x8xf32>
    "tpu.trace_start"() <{level = 10 : i32, message = "nqk,nkd->nqd"}> : () -> ()
    %cst_36 = arith.constant dense<0.000000e+00> : vector<8x8x4xf32>
    %122 = tpu.matmul %121, %95, %cst_36 {dimension_numbers = #tpu.dot_dimension_numbers<[2], [1], [1], [2], [0, 0, 0, 1, 1, 2], [0], [0]>} : vector<8x8x8xf32>, vector<8x8x4xf32>, vector<8x8x4xf32> -> vector<8x8x4xf32>
    "tpu.trace_stop"() : () -> ()
    %123 = vector.extract_strided_slice %120 {offsets = [0, 0, 8], sizes = [8, 8, 8], strides = [1, 1, 1]} : vector<8x8x16xf32> to vector<8x8x8xf32>
    "tpu.trace_start"() <{level = 10 : i32, message = "nqk,nkd->nqd"}> : () -> ()
    %cst_37 = arith.constant dense<0.000000e+00> : vector<8x8x4xf32>
    %124 = tpu.matmul %123, %100, %cst_37 {dimension_numbers = #tpu.dot_dimension_numbers<[2], [1], [1], [2], [0, 0, 0, 1, 1, 2], [0], [0]>} : vector<8x8x8xf32>, vector<8x8x4xf32>, vector<8x8x4xf32> -> vector<8x8x4xf32>
    "tpu.trace_stop"() : () -> ()
    %125 = arith.addf %122, %124 : vector<8x8x4xf32>
    %cst_38 = arith.constant dense<0.000000e+00> : vector<8xf32>
    %126 = vector.multi_reduction <add>, %73, %cst_38 [1] : vector<8x16xf32> to vector<8xf32>
    %127 = vector.shape_cast %126 : vector<8xf32> to vector<8x1xf32>
    %cst_39 = arith.constant 0.000000e+00 : f32
    %128 = vector.broadcast %cst_39 : f32 to vector<8x1xf32>
    %129 = arith.cmpf ogt, %127, %128 : vector<8x1xf32>
    %130 = arith.extui %129 : vector<8x1xi1> to vector<8x1xi32>
    %131 = arith.sitofp %130 : vector<8x1xi32> to vector<8x1xf32>
    %132 = vector.shape_cast %131 : vector<8x1xf32> to vector<8x1x1xf32>
    %133 = vector.broadcast %132 : vector<8x1x1xf32> to vector<8x8x4xf32>
    %134 = arith.mulf %125, %133 : vector<8x8x4xf32>
    %135 = vector.extract_strided_slice %134 {offsets = [0, 0, 0], sizes = [2, 8, 4], strides = [1, 1, 1]} : vector<8x8x4xf32> to vector<2x8x4xf32>
    %136 = vector.extract_strided_slice %134 {offsets = [2, 0, 0], sizes = [2, 8, 4], strides = [1, 1, 1]} : vector<8x8x4xf32> to vector<2x8x4xf32>
    %137 = vector.extract_strided_slice %134 {offsets = [4, 0, 0], sizes = [2, 8, 4], strides = [1, 1, 1]} : vector<8x8x4xf32> to vector<2x8x4xf32>
    %138 = vector.extract_strided_slice %134 {offsets = [6, 0, 0], sizes = [2, 8, 4], strides = [1, 1, 1]} : vector<8x8x4xf32> to vector<2x8x4xf32>
    %139 = tpu.concatenate %135, %136, %137, %138 in 2 : vector<2x8x4xf32>, vector<2x8x4xf32>, vector<2x8x4xf32>, vector<2x8x4xf32> -> vector<2x8x16xf32>
    %140 = vector.shape_cast %139 : vector<2x8x16xf32> to vector<16x16xf32>
    %cst_40 = arith.constant 5.000000e-01 : f32
    %141 = vector.broadcast %cst_40 : f32 to vector<16x16xf32>
    %142 = arith.mulf %141, %140 : vector<16x16xf32>
    %cst_41 = arith.constant 0.707106769 : f32
    %143 = vector.broadcast %cst_41 : f32 to vector<16x16xf32>
    %144 = arith.mulf %140, %143 : vector<16x16xf32>
    %cst_42 = arith.constant 0.000000e+00 : f32
    %145 = vector.broadcast %cst_42 : f32 to vector<16x16xf32>
    %146 = arith.cmpf olt, %144, %145 : vector<16x16xf32>
    %cst_43 = arith.constant -1.000000e+00 : f32
    %cst_44 = arith.constant 1.000000e+00 : f32
    %147 = vector.broadcast %cst_43 : f32 to vector<16x16xf32>
    %148 = vector.broadcast %cst_44 : f32 to vector<16x16xf32>
    %149 = arith.select %146, %147, %148 : vector<16x16xi1>, vector<16x16xf32>
    %150 = math.absf %144 : vector<16x16xf32>
    %cst_45 = arith.constant 0.327591091 : f32
    %151 = vector.broadcast %cst_45 : f32 to vector<16x16xf32>
    %152 = arith.mulf %151, %150 : vector<16x16xf32>
    %cst_46 = arith.constant 1.000000e+00 : f32
    %153 = vector.broadcast %cst_46 : f32 to vector<16x16xf32>
    %154 = arith.addf %153, %152 : vector<16x16xf32>
    %cst_47 = arith.constant 1.000000e+00 : f32
    %155 = vector.broadcast %cst_47 : f32 to vector<16x16xf32>
    %156 = arith.divf %155, %154 : vector<16x16xf32>
    %cst_48 = arith.constant 1.06140542 : f32
    %157 = vector.broadcast %cst_48 : f32 to vector<16x16xf32>
    %158 = arith.mulf %157, %156 : vector<16x16xf32>
    %cst_49 = arith.constant -1.45315206 : f32
    %159 = vector.broadcast %cst_49 : f32 to vector<16x16xf32>
    %160 = arith.addf %158, %159 : vector<16x16xf32>
    %161 = arith.mulf %160, %156 : vector<16x16xf32>
    %cst_50 = arith.constant 1.42141378 : f32
    %162 = vector.broadcast %cst_50 : f32 to vector<16x16xf32>
    %163 = arith.addf %161, %162 : vector<16x16xf32>
    %164 = arith.mulf %163, %156 : vector<16x16xf32>
    %cst_51 = arith.constant -0.284496725 : f32
    %165 = vector.broadcast %cst_51 : f32 to vector<16x16xf32>
    %166 = arith.addf %164, %165 : vector<16x16xf32>
    %167 = arith.mulf %166, %156 : vector<16x16xf32>
    %cst_52 = arith.constant 0.254829586 : f32
    %168 = vector.broadcast %cst_52 : f32 to vector<16x16xf32>
    %169 = arith.addf %167, %168 : vector<16x16xf32>
    %170 = arith.mulf %169, %156 : vector<16x16xf32>
    %cst_53 = arith.constant 0.000000e+00 : f32
    %171 = vector.broadcast %cst_53 : f32 to vector<16x16xf32>
    %172 = arith.subf %171, %150 : vector<16x16xf32>
    %173 = arith.mulf %172, %150 : vector<16x16xf32>
    %174 = math.exp %173 : vector<16x16xf32>
    %175 = arith.mulf %170, %174 : vector<16x16xf32>
    %cst_54 = arith.constant 1.000000e+00 : f32
    %176 = vector.broadcast %cst_54 : f32 to vector<16x16xf32>
    %177 = arith.subf %176, %175 : vector<16x16xf32>
    %178 = arith.mulf %149, %177 : vector<16x16xf32>
    %cst_55 = arith.constant 1.000000e+00 : f32
    %179 = vector.broadcast %cst_55 : f32 to vector<16x16xf32>
    %180 = arith.addf %179, %178 : vector<16x16xf32>
    %181 = arith.mulf %142, %180 : vector<16x16xf32>
    %c176 = arith.constant 176 : index
    %c0_56 = arith.constant 0 : index
    %182 = vector.load %arg4[%c176, %c0_56] : memref<304x128xf32, #tpu.memory_space<vmem>>, vector<16x32xf32>
    %cst_57 = arith.constant dense<0.000000e+00> : vector<16x32xf32>
    %183 = tpu.matmul %181, %182, %cst_57 {dimension_numbers = #tpu.dot_dimension_numbers<[1], [0], [0], [1], [0, 0, 1, 1], [], []>} : vector<16x16xf32>, vector<16x32xf32>, vector<16x32xf32> -> vector<16x32xf32>
    %c192 = arith.constant 192 : index
    %c0_58 = arith.constant 0 : index
    %184 = vector.load %arg4[%c192, %c0_58] : memref<304x128xf32, #tpu.memory_space<vmem>>, vector<1x32xf32>
    %185 = vector.broadcast %184 : vector<1x32xf32> to vector<16x32xf32>
    %186 = arith.addf %183, %185 : vector<16x32xf32>
    %187 = arith.mulf %186, %3 : vector<16x32xf32>
    %188 = arith.addf %187, %53 : vector<16x32xf32>
    %c200 = arith.constant 200 : index
    %c0_59 = arith.constant 0 : index
    %189 = vector.load %arg4[%c200, %c0_59] : memref<304x128xf32, #tpu.memory_space<vmem>>, vector<32x48xf32>
    %cst_60 = arith.constant dense<0.000000e+00> : vector<16x48xf32>
    %190 = tpu.matmul %188, %189, %cst_60 {dimension_numbers = #tpu.dot_dimension_numbers<[1], [0], [0], [1], [0, 0, 1, 1], [], []>} : vector<16x32xf32>, vector<32x48xf32>, vector<16x48xf32> -> vector<16x48xf32>
    %c232 = arith.constant 232 : index
    %c0_61 = arith.constant 0 : index
    %191 = vector.load %arg4[%c232, %c0_61] : memref<304x128xf32, #tpu.memory_space<vmem>>, vector<1x48xf32>
    %192 = vector.broadcast %191 : vector<1x48xf32> to vector<16x48xf32>
    %193 = arith.addf %190, %192 : vector<16x48xf32>
    %c0_62 = arith.constant 0 : index
    %c0_63 = arith.constant 0 : index
    %194 = vector.load %arg6[%c0_62, %c0_63] : memref<16x48xf32, #tpu.memory_space<vmem>>, vector<16x48xf32>
    tpu.vector_store %arg6[%c0_62, %c0_63], %193 {strides = array<i32>} : memref<16x48xf32, #tpu.memory_space<vmem>>, vector<16x48xf32>,
    %c0_64 = arith.constant 0 : index
    %c0_65 = arith.constant 0 : index
    %195 = tpu.strided_load %arg6[%c0_64, %c0_65] {strides = array<i32: 8, 1>} : memref<16x48xf32, #tpu.memory_space<vmem>>, vector<2x48xf32>
    %c1 = arith.constant 1 : index
    %c0_66 = arith.constant 0 : index
    %196 = tpu.strided_load %arg6[%c1, %c0_66] {strides = array<i32: 8, 1>} : memref<16x48xf32, #tpu.memory_space<vmem>>, vector<2x48xf32>
    %c2 = arith.constant 2 : index
    %c0_67 = arith.constant 0 : index
    %197 = tpu.strided_load %arg6[%c2, %c0_67] {strides = array<i32: 8, 1>} : memref<16x48xf32, #tpu.memory_space<vmem>>, vector<2x48xf32>
    %c3 = arith.constant 3 : index
    %c0_68 = arith.constant 0 : index
    %198 = tpu.strided_load %arg6[%c3, %c0_68] {strides = array<i32: 8, 1>} : memref<16x48xf32, #tpu.memory_space<vmem>>, vector<2x48xf32>
    %c4 = arith.constant 4 : index
    %c0_69 = arith.constant 0 : index
    %199 = tpu.strided_load %arg6[%c4, %c0_69] {strides = array<i32: 8, 1>} : memref<16x48xf32, #tpu.memory_space<vmem>>, vector<2x48xf32>
    %c5 = arith.constant 5 : index
    %c0_70 = arith.constant 0 : index
    %200 = tpu.strided_load %arg6[%c5, %c0_70] {strides = array<i32: 8, 1>} : memref<16x48xf32, #tpu.memory_space<vmem>>, vector<2x48xf32>
    %c6 = arith.constant 6 : index
    %c0_71 = arith.constant 0 : index
    %201 = tpu.strided_load %arg6[%c6, %c0_71] {strides = array<i32: 8, 1>} : memref<16x48xf32, #tpu.memory_space<vmem>>, vector<2x48xf32>
    %c7 = arith.constant 7 : index
    %c0_72 = arith.constant 0 : index
    %202 = tpu.strided_load %arg6[%c7, %c0_72] {strides = array<i32: 8, 1>} : memref<16x48xf32, #tpu.memory_space<vmem>>, vector<2x48xf32>
    %203 = vector.shape_cast %195 : vector<2x48xf32> to vector<1x2x48xf32>
    %204 = vector.shape_cast %196 : vector<2x48xf32> to vector<1x2x48xf32>
    %205 = vector.shape_cast %197 : vector<2x48xf32> to vector<1x2x48xf32>
    %206 = vector.shape_cast %198 : vector<2x48xf32> to vector<1x2x48xf32>
    %207 = vector.shape_cast %199 : vector<2x48xf32> to vector<1x2x48xf32>
    %208 = vector.shape_cast %200 : vector<2x48xf32> to vector<1x2x48xf32>
    %209 = vector.shape_cast %201 : vector<2x48xf32> to vector<1x2x48xf32>
    %210 = vector.shape_cast %202 : vector<2x48xf32> to vector<1x2x48xf32>
    %211 = tpu.concatenate %203, %204, %205, %206, %207, %208, %209, %210 in 0 : vector<1x2x48xf32>, vector<1x2x48xf32>, vector<1x2x48xf32>, vector<1x2x48xf32>, vector<1x2x48xf32>, vector<1x2x48xf32>, vector<1x2x48xf32>, vector<1x2x48xf32> -> vector<8x2x48xf32>
    %212 = vector.extract_strided_slice %211 {offsets = [0, 0, 0], sizes = [8, 2, 16], strides = [1, 1, 1]} : vector<8x2x48xf32> to vector<8x2x16xf32>
    %213 = vector.extract_strided_slice %211 {offsets = [0, 0, 16], sizes = [8, 2, 16], strides = [1, 1, 1]} : vector<8x2x48xf32> to vector<8x2x16xf32>
    %214 = vector.extract_strided_slice %211 {offsets = [0, 0, 32], sizes = [8, 2, 16], strides = [1, 1, 1]} : vector<8x2x48xf32> to vector<8x2x16xf32>
    %c0_73 = arith.constant 0 : index
    %c0_74 = arith.constant 0 : index
    %c0_75 = arith.constant 0 : index
    %215 = vector.load %arg3[%c0_73, %c0_74, %c0_75] : memref<1x32x2xf32, #tpu.memory_space<vmem>>, vector<1x32x2xf32>
    %216 = vector.shape_cast %215 : vector<1x32x2xf32> to vector<32x2xf32>
    %217 = vector.extract_strided_slice %212 {offsets = [0, 0, 0], sizes = [8, 2, 4], strides = [1, 1, 1]} : vector<8x2x16xf32> to vector<8x2x4xf32>
    %218 = vector.extract_strided_slice %212 {offsets = [0, 0, 4], sizes = [8, 2, 4], strides = [1, 1, 1]} : vector<8x2x16xf32> to vector<8x2x4xf32>
    %219 = vector.extract_strided_slice %212 {offsets = [0, 0, 8], sizes = [8, 2, 4], strides = [1, 1, 1]} : vector<8x2x16xf32> to vector<8x2x4xf32>
    %220 = vector.extract_strided_slice %212 {offsets = [0, 0, 12], sizes = [8, 2, 4], strides = [1, 1, 1]} : vector<8x2x16xf32> to vector<8x2x4xf32>
    %221 = tpu.concatenate %217, %218, %219, %220 in 0 : vector<8x2x4xf32>, vector<8x2x4xf32>, vector<8x2x4xf32>, vector<8x2x4xf32> -> vector<32x2x4xf32>
    %cst_76 = arith.constant 5.000000e-01 : f32
    %222 = vector.broadcast %cst_76 : f32 to vector<32x2x4xf32>
    %223 = arith.mulf %221, %222 : vector<32x2x4xf32>
    %224 = vector.extract_strided_slice %213 {offsets = [0, 0, 0], sizes = [8, 2, 4], strides = [1, 1, 1]} : vector<8x2x16xf32> to vector<8x2x4xf32>
    %225 = vector.extract_strided_slice %213 {offsets = [0, 0, 4], sizes = [8, 2, 4], strides = [1, 1, 1]} : vector<8x2x16xf32> to vector<8x2x4xf32>
    %226 = vector.extract_strided_slice %213 {offsets = [0, 0, 8], sizes = [8, 2, 4], strides = [1, 1, 1]} : vector<8x2x16xf32> to vector<8x2x4xf32>
    %227 = vector.extract_strided_slice %213 {offsets = [0, 0, 12], sizes = [8, 2, 4], strides = [1, 1, 1]} : vector<8x2x16xf32> to vector<8x2x4xf32>
    %228 = tpu.concatenate %224, %225, %226, %227 in 0 : vector<8x2x4xf32>, vector<8x2x4xf32>, vector<8x2x4xf32>, vector<8x2x4xf32> -> vector<32x2x4xf32>
    %229 = vector.extract_strided_slice %214 {offsets = [0, 0, 0], sizes = [8, 2, 4], strides = [1, 1, 1]} : vector<8x2x16xf32> to vector<8x2x4xf32>
    %230 = vector.extract_strided_slice %214 {offsets = [0, 0, 4], sizes = [8, 2, 4], strides = [1, 1, 1]} : vector<8x2x16xf32> to vector<8x2x4xf32>
    %231 = vector.extract_strided_slice %214 {offsets = [0, 0, 8], sizes = [8, 2, 4], strides = [1, 1, 1]} : vector<8x2x16xf32> to vector<8x2x4xf32>
    %232 = vector.extract_strided_slice %214 {offsets = [0, 0, 12], sizes = [8, 2, 4], strides = [1, 1, 1]} : vector<8x2x16xf32> to vector<8x2x4xf32>
    %233 = tpu.concatenate %229, %230, %231, %232 in 0 : vector<8x2x4xf32>, vector<8x2x4xf32>, vector<8x2x4xf32>, vector<8x2x4xf32> -> vector<32x2x4xf32>
    "tpu.trace_start"() <{level = 10 : i32, message = "nqd,nkd->nqk"}> : () -> ()
    %cst_77 = arith.constant dense<0.000000e+00> : vector<32x2x2xf32>
    %234 = tpu.matmul %223, %228, %cst_77 {dimension_numbers = #tpu.dot_dimension_numbers<[2], [2], [1], [1], [0, 0, 0, 1, 1, 1], [0], [0]>} : vector<32x2x4xf32>, vector<32x2x4xf32>, vector<32x2x2xf32> -> vector<32x2x2xf32>
    "tpu.trace_stop"() : () -> ()
    %235 = vector.shape_cast %216 : vector<32x2xf32> to vector<32x1x2xf32>
    %cst_78 = arith.constant 1.000000e+00 : f32
    %236 = vector.broadcast %cst_78 : f32 to vector<32x1x2xf32>
    %237 = arith.subf %235, %236 : vector<32x1x2xf32>
    %cst_79 = arith.constant 1.000000e+09 : f32
    %238 = vector.broadcast %cst_79 : f32 to vector<32x1x2xf32>
    %239 = arith.mulf %237, %238 : vector<32x1x2xf32>
    %240 = vector.broadcast %239 : vector<32x1x2xf32> to vector<32x2x2xf32>
    %241 = arith.addf %234, %240 : vector<32x2x2xf32>
    %cst_80 = arith.constant dense<0xFF800000> : vector<32x2xf32>
    %242 = vector.multi_reduction <maximumf>, %241, %cst_80 [2] : vector<32x2x2xf32> to vector<32x2xf32>
    %243 = vector.shape_cast %242 : vector<32x2xf32> to vector<32x2x1xf32>
    %244 = vector.broadcast %243 : vector<32x2x1xf32> to vector<32x2x2xf32>
    %245 = arith.subf %241, %244 : vector<32x2x2xf32>
    %246 = math.exp %245 : vector<32x2x2xf32>
    %cst_81 = arith.constant dense<0.000000e+00> : vector<32x2xf32>
    %247 = vector.multi_reduction <add>, %246, %cst_81 [2] : vector<32x2x2xf32> to vector<32x2xf32>
    %248 = vector.shape_cast %247 : vector<32x2xf32> to vector<32x2x1xf32>
    %249 = tpu.reciprocal %248 {approx = true} : vector<32x2x1xf32> -> vector<32x2x1xf32>
    %250 = vector.broadcast %249 : vector<32x2x1xf32> to vector<32x2x2xf32>
    %251 = arith.mulf %246, %250 : vector<32x2x2xf32>
    "tpu.trace_start"() <{level = 10 : i32, message = "nqk,nkd->nqd"}> : () -> ()
    %cst_82 = arith.constant dense<0.000000e+00> : vector<32x2x4xf32>
    %252 = tpu.matmul %251, %233, %cst_82 {dimension_numbers = #tpu.dot_dimension_numbers<[2], [1], [1], [2], [0, 0, 0, 1, 1, 2], [0], [0]>} : vector<32x2x2xf32>, vector<32x2x4xf32>, vector<32x2x4xf32> -> vector<32x2x4xf32>
    "tpu.trace_stop"() : () -> ()
    %cst_83 = arith.constant dense<0.000000e+00> : vector<32xf32>
    %253 = vector.multi_reduction <add>, %216, %cst_83 [1] : vector<32x2xf32> to vector<32xf32>
    %254 = vector.shape_cast %253 : vector<32xf32> to vector<32x1xf32>
    %cst_84 = arith.constant 0.000000e+00 : f32
    %255 = vector.broadcast %cst_84 : f32 to vector<32x1xf32>
    %256 = arith.cmpf ogt, %254, %255 : vector<32x1xf32>
    %257 = arith.extui %256 : vector<32x1xi1> to vector<32x1xi32>
    %258 = arith.sitofp %257 : vector<32x1xi32> to vector<32x1xf32>
    %259 = vector.shape_cast %258 : vector<32x1xf32> to vector<32x1x1xf32>
    %260 = vector.broadcast %259 : vector<32x1x1xf32> to vector<32x2x4xf32>
    %261 = arith.mulf %252, %260 : vector<32x2x4xf32>
    %262 = vector.extract_strided_slice %261 {offsets = [0, 0, 0], sizes = [8, 2, 4], strides = [1, 1, 1]} : vector<32x2x4xf32> to vector<8x2x4xf32>
    %263 = vector.extract_strided_slice %261 {offsets = [8, 0, 0], sizes = [8, 2, 4], strides = [1, 1, 1]} : vector<32x2x4xf32> to vector<8x2x4xf32>
    %264 = vector.extract_strided_slice %261 {offsets = [16, 0, 0], sizes = [8, 2, 4], strides = [1, 1, 1]} : vector<32x2x4xf32> to vector<8x2x4xf32>
    %265 = vector.extract_strided_slice %261 {offsets = [24, 0, 0], sizes = [8, 2, 4], strides = [1, 1, 1]} : vector<32x2x4xf32> to vector<8x2x4xf32>
    %266 = tpu.concatenate %262, %263, %264, %265 in 2 : vector<8x2x4xf32>, vector<8x2x4xf32>, vector<8x2x4xf32>, vector<8x2x4xf32> -> vector<8x2x16xf32>
    %267 = vector.shape_cast %266 : vector<8x2x16xf32> to vector<16x16xf32>
    %cst_85 = arith.constant 5.000000e-01 : f32
    %268 = vector.broadcast %cst_85 : f32 to vector<16x16xf32>
    %269 = arith.mulf %268, %267 : vector<16x16xf32>
    %cst_86 = arith.constant 0.707106769 : f32
    %270 = vector.broadcast %cst_86 : f32 to vector<16x16xf32>
    %271 = arith.mulf %267, %270 : vector<16x16xf32>
    %cst_87 = arith.constant 0.000000e+00 : f32
    %272 = vector.broadcast %cst_87 : f32 to vector<16x16xf32>
    %273 = arith.cmpf olt, %271, %272 : vector<16x16xf32>
    %cst_88 = arith.constant -1.000000e+00 : f32
    %cst_89 = arith.constant 1.000000e+00 : f32
    %274 = vector.broadcast %cst_88 : f32 to vector<16x16xf32>
    %275 = vector.broadcast %cst_89 : f32 to vector<16x16xf32>
    %276 = arith.select %273, %274, %275 : vector<16x16xi1>, vector<16x16xf32>
    %277 = math.absf %271 : vector<16x16xf32>
    %cst_90 = arith.constant 0.327591091 : f32
    %278 = vector.broadcast %cst_90 : f32 to vector<16x16xf32>
    %279 = arith.mulf %278, %277 : vector<16x16xf32>
    %cst_91 = arith.constant 1.000000e+00 : f32
    %280 = vector.broadcast %cst_91 : f32 to vector<16x16xf32>
    %281 = arith.addf %280, %279 : vector<16x16xf32>
    %cst_92 = arith.constant 1.000000e+00 : f32
    %282 = vector.broadcast %cst_92 : f32 to vector<16x16xf32>
    %283 = arith.divf %282, %281 : vector<16x16xf32>
    %cst_93 = arith.constant 1.06140542 : f32
    %284 = vector.broadcast %cst_93 : f32 to vector<16x16xf32>
    %285 = arith.mulf %284, %283 : vector<16x16xf32>
    %cst_94 = arith.constant -1.45315206 : f32
    %286 = vector.broadcast %cst_94 : f32 to vector<16x16xf32>
    %287 = arith.addf %285, %286 : vector<16x16xf32>
    %288 = arith.mulf %287, %283 : vector<16x16xf32>
    %cst_95 = arith.constant 1.42141378 : f32
    %289 = vector.broadcast %cst_95 : f32 to vector<16x16xf32>
    %290 = arith.addf %288, %289 : vector<16x16xf32>
    %291 = arith.mulf %290, %283 : vector<16x16xf32>
    %cst_96 = arith.constant -0.284496725 : f32
    %292 = vector.broadcast %cst_96 : f32 to vector<16x16xf32>
    %293 = arith.addf %291, %292 : vector<16x16xf32>
    %294 = arith.mulf %293, %283 : vector<16x16xf32>
    %cst_97 = arith.constant 0.254829586 : f32
    %295 = vector.broadcast %cst_97 : f32 to vector<16x16xf32>
    %296 = arith.addf %294, %295 : vector<16x16xf32>
    %297 = arith.mulf %296, %283 : vector<16x16xf32>
    %cst_98 = arith.constant 0.000000e+00 : f32
    %298 = vector.broadcast %cst_98 : f32 to vector<16x16xf32>
    %299 = arith.subf %298, %277 : vector<16x16xf32>
    %300 = arith.mulf %299, %277 : vector<16x16xf32>
    %301 = math.exp %300 : vector<16x16xf32>
    %302 = arith.mulf %297, %301 : vector<16x16xf32>
    %cst_99 = arith.constant 1.000000e+00 : f32
    %303 = vector.broadcast %cst_99 : f32 to vector<16x16xf32>
    %304 = arith.subf %303, %302 : vector<16x16xf32>
    %305 = arith.mulf %276, %304 : vector<16x16xf32>
    %cst_100 = arith.constant 1.000000e+00 : f32
    %306 = vector.broadcast %cst_100 : f32 to vector<16x16xf32>
    %307 = arith.addf %306, %305 : vector<16x16xf32>
    %308 = arith.mulf %269, %307 : vector<16x16xf32>
    %c240 = arith.constant 240 : index
    %c0_101 = arith.constant 0 : index
    %309 = vector.load %arg4[%c240, %c0_101] : memref<304x128xf32, #tpu.memory_space<vmem>>, vector<16x32xf32>
    %cst_102 = arith.constant dense<0.000000e+00> : vector<16x32xf32>
    %310 = tpu.matmul %308, %309, %cst_102 {dimension_numbers = #tpu.dot_dimension_numbers<[1], [0], [0], [1], [0, 0, 1, 1], [], []>} : vector<16x16xf32>, vector<16x32xf32>, vector<16x32xf32> -> vector<16x32xf32>
    %c256 = arith.constant 256 : index
    %c0_103 = arith.constant 0 : index
    %311 = vector.load %arg4[%c256, %c0_103] : memref<304x128xf32, #tpu.memory_space<vmem>>, vector<1x32xf32>
    %312 = vector.broadcast %311 : vector<1x32xf32> to vector<16x32xf32>
    %313 = arith.addf %310, %312 : vector<16x32xf32>
    %314 = arith.mulf %313, %3 : vector<16x32xf32>
    %315 = arith.addf %314, %188 : vector<16x32xf32>
    %c264 = arith.constant 264 : index
    %c0_104 = arith.constant 0 : index
    %316 = vector.load %arg4[%c264, %c0_104] : memref<304x128xf32, #tpu.memory_space<vmem>>, vector<32x32xf32>
    %cst_105 = arith.constant dense<0.000000e+00> : vector<16x32xf32>
    %317 = tpu.matmul %315, %316, %cst_105 {dimension_numbers = #tpu.dot_dimension_numbers<[1], [0], [0], [1], [0, 0, 1, 1], [], []>} : vector<16x32xf32>, vector<32x32xf32>, vector<16x32xf32> -> vector<16x32xf32>
    %c296 = arith.constant 296 : index
    %c0_106 = arith.constant 0 : index
    %318 = vector.load %arg4[%c296, %c0_106] : memref<304x128xf32, #tpu.memory_space<vmem>>, vector<1x32xf32>
    %319 = vector.broadcast %318 : vector<1x32xf32> to vector<16x32xf32>
    %320 = arith.addf %317, %319 : vector<16x32xf32>
    %321 = arith.addf %320, %2 : vector<16x32xf32>
    %322 = arith.mulf %321, %3 : vector<16x32xf32>
    %323 = vector.extract_strided_slice %322 {offsets = [0, 0], sizes = [4, 32], strides = [1, 1]} : vector<16x32xf32> to vector<4x32xf32>
    %324 = vector.extract_strided_slice %322 {offsets = [4, 0], sizes = [4, 32], strides = [1, 1]} : vector<16x32xf32> to vector<4x32xf32>
    %325 = vector.extract_strided_slice %322 {offsets = [8, 0], sizes = [4, 32], strides = [1, 1]} : vector<16x32xf32> to vector<4x32xf32>
    %326 = vector.extract_strided_slice %322 {offsets = [12, 0], sizes = [4, 32], strides = [1, 1]} : vector<16x32xf32> to vector<4x32xf32>
    %327 = tpu.concatenate %323, %324, %325, %326 in 1 : vector<4x32xf32>, vector<4x32xf32>, vector<4x32xf32>, vector<4x32xf32> -> vector<4x128xf32>
    %c0_107 = arith.constant 0 : index
    %c0_108 = arith.constant 0 : index
    %c0_109 = arith.constant 0 : index
    %328 = vector.load %arg5[%c0_107, %c0_108, %c0_109] : memref<1x4x128xf32, #tpu.memory_space<vmem>>, vector<1x4x128xf32>
    %329 = vector.shape_cast %328 : vector<1x4x128xf32> to vector<4x128xf32>
    %330 = vector.shape_cast %327 : vector<4x128xf32> to vector<1x4x128xf32>
    tpu.vector_store %arg5[%c0_107, %c0_108, %c0_109], %330 {strides = array<i32>} : memref<1x4x128xf32, #tpu.memory_space<vmem>>, vector<1x4x128xf32>,
    return
  }
  func.func @transform_0(%arg0: i32) -> (i32, i32, i32) {
    %c0_i32 = arith.constant 0 : i32
    %c0_i32_0 = arith.constant 0 : i32
    %c0_i32_1 = arith.constant 0 : i32
    return %arg0, %c0_i32, %c0_i32_0 : i32, i32, i32
  }
  func.func @transform_1(%arg0: i32) -> (i32, i32, i32) {
    %c0_i32 = arith.constant 0 : i32
    %c0_i32_0 = arith.constant 0 : i32
    %c0_i32_1 = arith.constant 0 : i32
    return %arg0, %c0_i32, %c0_i32_0 : i32, i32, i32
  }
  func.func @transform_2(%arg0: i32) -> (i32, i32, i32) {
    %c0_i32 = arith.constant 0 : i32
    %c0_i32_0 = arith.constant 0 : i32
    %c0_i32_1 = arith.constant 0 : i32
    return %arg0, %c0_i32, %c0_i32_0 : i32, i32, i32
  }
  func.func @transform_3(%arg0: i32) -> (i32, i32) {
    %c0_i32 = arith.constant 0 : i32
    %c0_i32_0 = arith.constant 0 : i32
    %c0_i32_1 = arith.constant 0 : i32
    return %c0_i32, %c0_i32_0 : i32, i32
  }
  func.func @transform_4(%arg0: i32) -> (i32, i32, i32) {
    %c0_i32 = arith.constant 0 : i32
    %c0_i32_0 = arith.constant 0 : i32
    %c0_i32_1 = arith.constant 0 : i32
    return %arg0, %c0_i32, %c0_i32_0 : i32, i32, i32
  }
}

</mosaic_0001>

<llo_original>
// kernel: ltc_block_forward.1
$region0: #{ltc_block_forward.1}
  #allocation0 [shape = 'u32[]', space=smem, size = 0x4, offset = 0x4, fixed_abs, tag = 'smem constant byte address 0x4 - core index']
  #allocation1 [shape = 'u32[72,128]{1,0:T(1,128)}', space=vmem, size = 0x9000, scoped, tag = 'internal scratch']
  #allocation2 [shape = 'f32[16,48]{1,0:T(8,128)}', space=vmem, size = 0x2000, scoped, tag = 'scratch operand']
  %s0 = inlined_call_operand.vmem [shape: f32[2,20,64], index: 0, kind: input, shape index: {}]
  %s1 = inlined_call_operand.vmem [shape: f32[2,8,16], index: 1, kind: input, shape index: {}]
  %s2 = inlined_call_operand.vmem [shape: f32[2,32,2], index: 2, kind: input, shape index: {}]
  %s3 = inlined_call_operand.vmem [shape: f32[304,128], index: 3, kind: input, shape index: {}]
  %s4 = inlined_call_operand.vmem [shape: f32[2,4,128], index: 4, kind: output, shape index: {}]
  %s5 = sld [smem:[#allocation0]]
  $region49: #{ltc_block_forward.1} parent=0
    _
  %s7 = ssub.s32 1, %s5
  %s8 = scalar_select 0, %s7, %s5
  loop: start=0, step=1, limit=4
  $region2: #{ltc_block_forward.1} parent=0 // loop_pre_header
    _
  $region3: #{ltc_block_forward.1} parent=0 // loop_header
    %s10 = sphi 0, %s14
    %p11 = scmp.ge.s32.totalorder %s10, 4
    %s20 = sphi 0, %s22
    %s23 = sphi 0, %s20
    %s24 = sphi 0, %s23
    %s40 = sphi 0, %s24
    %s46 = sphi 0, %s48
    %s49 = sphi 0, %s46
    %s50 = sphi 0, %s49
    %s66 = sphi 0, %s50
    %s72 = sphi 0, %s74
    %s75 = sphi 0, %s72
    %s76 = sphi 0, %s75
    %s92 = sphi 0, %s76
    %s96 = sphi 0, %s96
    %s98 = sphi 0, %s96
    %s99 = sphi 0, %s98
    %s113 = sphi 0, %s99
    %s119 = sphi 0, %s121
    %s122 = sphi 0, %s119
    %s123 = sphi 0, %s122
    %s139 = sphi 0, %s123
  $region4: #{ltc_block_forward.1} parent=0 // loop_header_branch
    %13 = sbr.rel (%p11) target = $region8
  $region5: #{ltc_block_forward.1} parent=0 // loop_body
    %s15 = ssub.s32 %s10, 1
    %s16 = ssub.s32 %s10, 2
    %s17 = sadd.s32 %s10, 1
    %s18 = ssub.s32 %s10, %s17
    %p19 = scmp.eq.s32.totalorder %s18, 0
    %s21 = sadd.s32 %s20, 1
    %s22 = scalar_select %p19, %s20, %s21
    %p25 = pneg %p19
    %p26 = scmp.eq.s32.totalorder %s10, 1
    %p27 = por %p25, %p26
    %p28 = scmp.ne.s32.totalorder %s20, %s23
    %p29 = scmp.eq.s32.totalorder %s10, 0
    %p30 = por %p28, %p29
    %p31 = scmp.ne.s32.totalorder %s20, %s23
    %p32 = scmp.eq.s32.totalorder %s15, 1
    %p33 = por %p31, %p32
    %p34 = scmp.ne.s32.totalorder %s23, %s24
    %p35 = scmp.eq.s32.totalorder %s15, 0
    %p36 = por %p34, %p35
    %p37 = scmp.ne.s32.totalorder %s23, %s24
    %p38 = scmp.eq.s32.totalorder %s16, 1
    %p39 = por %p37, %p38
    %p41 = scmp.ne.s32.totalorder %s24, %s40
    %p42 = scmp.eq.s32.totalorder %s16, 0
    %p43 = por %p41, %p42
    %s44 = ssub.s32 %s10, %s17
    %p45 = scmp.eq.s32.totalorder %s44, 0
    %s47 = sadd.s32 %s46, 1
    %s48 = scalar_select %p45, %s46, %s47
    %p51 = pneg %p45
    %p52 = scmp.eq.s32.totalorder %s10, 1
    %p53 = por %p51, %p52
    %p54 = scmp.ne.s32.totalorder %s46, %s49
    %p55 = scmp.eq.s32.totalorder %s10, 0
    %p56 = por %p54, %p55
    %p57 = scmp.ne.s32.totalorder %s46, %s49
    %p58 = scmp.eq.s32.totalorder %s15, 1
    %p59 = por %p57, %p58
    %p60 = scmp.ne.s32.totalorder %s49, %s50
    %p61 = scmp.eq.s32.totalorder %s15, 0
    %p62 = por %p60, %p61
    %p63 = scmp.ne.s32.totalorder %s49, %s50
    %p64 = scmp.eq.s32.totalorder %s16, 1
    %p65 = por %p63, %p64
    %p67 = scmp.ne.s32.totalorder %s50, %s66
    %p68 = scmp.eq.s32.totalorder %s16, 0
    %p69 = por %p67, %p68
    %s70 = ssub.s32 %s10, %s17
    %p71 = scmp.eq.s32.totalorder %s70, 0
    %s73 = sadd.s32 %s72, 1
    %s74 = scalar_select %p71, %s72, %s73
    %p77 = pneg %p71
    %p78 = scmp.eq.s32.totalorder %s10, 1
    %p79 = por %p77, %p78
    %p80 = scmp.ne.s32.totalorder %s72, %s75
    %p81 = scmp.eq.s32.totalorder %s10, 0
    %p82 = por %p80, %p81
    %p83 = scmp.ne.s32.totalorder %s72, %s75
    %p84 = scmp.eq.s32.totalorder %s15, 1
    %p85 = por %p83, %p84
    %p86 = scmp.ne.s32.totalorder %s75, %s76
    %p87 = scmp.eq.s32.totalorder %s15, 0
    %p88 = por %p86, %p87
    %p89 = scmp.ne.s32.totalorder %s75, %s76
    %p90 = scmp.eq.s32.totalorder %s16, 1
    %p91 = por %p89, %p90
    %p93 = scmp.ne.s32.totalorder %s76, %s92
    %p94 = scmp.eq.s32.totalorder %s16, 0
    %p95 = por %p93, %p94
    %s97 = sadd.s32 %s96, 1
    %p100 = scmp.eq.s32.totalorder %s10, 1
    %p101 = scmp.ne.s32.totalorder %s96, %s98
    %p102 = scmp.eq.s32.totalorder %s10, 0
    %p103 = por %p101, %p102
    %p104 = scmp.ne.s32.totalorder %s96, %s98
    %p105 = scmp.eq.s32.totalorder %s15, 1
    %p106 = por %p104, %p105
    %p107 = scmp.ne.s32.totalorder %s98, %s99
    %p108 = scmp.eq.s32.totalorder %s15, 0
    %p109 = por %p107, %p108
    %p110 = scmp.ne.s32.totalorder %s98, %s99
    %p111 = scmp.eq.s32.totalorder %s16, 1
    %p112 = por %p110, %p111
    %p114 = scmp.ne.s32.totalorder %s99, %s113
    %p115 = scmp.eq.s32.totalorder %s16, 0
    %p116 = por %p114, %p115
    %s117 = ssub.s32 %s10, %s17
    %p118 = scmp.eq.s32.totalorder %s117, 0
    %s120 = sadd.s32 %s119, 1
    %s121 = scalar_select %p118, %s119, %s120
    %p124 = pneg %p118
    %p125 = scmp.eq.s32.totalorder %s10, 1
    %p126 = por %p124, %p125
    %p127 = scmp.ne.s32.totalorder %s119, %s122
    %p128 = scmp.eq.s32.totalorder %s10, 0
    %p129 = por %p127, %p128
    %p130 = scmp.ne.s32.totalorder %s119, %s122
    %p131 = scmp.eq.s32.totalorder %s15, 1
    %p132 = por %p130, %p131
    %p133 = scmp.ne.s32.totalorder %s122, %s123
    %p134 = scmp.eq.s32.totalorder %s15, 0
    %p135 = por %p133, %p134
    %p136 = scmp.ne.s32.totalorder %s122, %s123
    %p137 = scmp.eq.s32.totalorder %s16, 1
    %p138 = por %p136, %p137
    %p140 = scmp.ne.s32.totalorder %s123, %s139
    %p141 = scmp.eq.s32.totalorder %s16, 0
    %p142 = por %p140, %p141
    %p143 = scmp.le.s32.totalorder 1, %s10
    %p144 = scmp.lt.s32.totalorder %s10, 3
    %p145 = pnand %p143, %p144
    %p146 = pneg %p145
    // Predicated region
    $region9: #{ltc_block_forward.1} parent=5 // pred_check
      _
    $region10: #{ltc_block_forward.1} parent=5 // pred_check_branch
      %148 = sbr.rel (%p145) target = $region12
    $region11: #{ltc_block_forward.1} parent=5 // pred_region
      %s149 = ssub.s32 %s10, 1
      // Predicated region
      $region13: #{ltc_block_forward.1} parent=11 // pred_check
        %p150 = pneg %p109
      $region14: #{ltc_block_forward.1} parent=11 // pred_check_branch
        %152 = sbr.rel (%p150) target = $region16
      $region15: #{ltc_block_forward.1} parent=11 // pred_region
        _
      $region16: #{ltc_block_forward.1} parent=11 // pred_fallthru
        _
    $region12: #{ltc_block_forward.1} parent=5 // pred_fallthru
      _
    %p153 = scmp.lt.s32.totalorder %s10, 2
    // Predicated region
    $region17: #{ltc_block_forward.1} parent=5 // pred_check
      %p154 = pneg %p153
    $region18: #{ltc_block_forward.1} parent=5 // pred_check_branch
      %156 = sbr.rel (%p154) target = $region20
    $region19: #{ltc_block_forward.1} parent=5 // pred_region
      // Predicated region
      $region21: #{ltc_block_forward.1} parent=19 // pred_check
        %p157 = pneg %p30
      $region22: #{ltc_block_forward.1} parent=19 // pred_check_branch
        %159 = sbr.rel (%p157) target = $region24
      $region23: #{ltc_block_forward.1} parent=19 // pred_region
        %p160 = scmp.lt.s32.totalorder %s10, 1
        %s161 = scalar_select %p160, %s10, 1
        %s162 = smul.addr %s161, 3
        %s163 = smul.addr %s162, 8
        %s164 = scalar_lea.vmem %s0, %s163
      $region24: #{ltc_block_forward.1} parent=19 // pred_fallthru
        _
      // Predicated region
      $region25: #{ltc_block_forward.1} parent=19 // pred_check
        %p165 = pneg %p56
      $region26: #{ltc_block_forward.1} parent=19 // pred_check_branch
        %167 = sbr.rel (%p165) target = $region28
      $region27: #{ltc_block_forward.1} parent=19 // pred_region
        %p168 = scmp.lt.s32.totalorder %s10, 1
        %s169 = scalar_select %p168, %s10, 1
        %s170 = smul.addr %s169, 8
        %s171 = scalar_lea.vmem %s1, %s170
      $region28: #{ltc_block_forward.1} parent=19 // pred_fallthru
        _
      // Predicated region
      $region29: #{ltc_block_forward.1} parent=19 // pred_check
        %p172 = pneg %p82
      $region30: #{ltc_block_forward.1} parent=19 // pred_check_branch
        %174 = sbr.rel (%p172) target = $region32
      $region31: #{ltc_block_forward.1} parent=19 // pred_region
        %p175 = scmp.lt.s32.totalorder %s10, 1
        %s176 = scalar_select %p175, %s10, 1
        %s177 = smul.addr %s176, 4
        %s178 = smul.addr %s177, 8
        %s179 = scalar_lea.vmem %s2, %s178
      $region32: #{ltc_block_forward.1} parent=19 // pred_fallthru
        _
    $region20: #{ltc_block_forward.1} parent=5 // pred_fallthru
      _
    %p180 = scmp.le.s32.totalorder 1, %s10
    %p181 = scmp.lt.s32.totalorder %s10, 3
    %p182 = pnand %p180, %p181
    %p183 = pneg %p182
    // Predicated region
    $region33: #{ltc_block_forward.1} parent=5 // pred_check
      _
    $region34: #{ltc_block_forward.1} parent=5 // pred_check_branch
      %185 = sbr.rel (%p182) target = $region36
    $region35: #{ltc_block_forward.1} parent=5 // pred_region
      %s186 = ssub.s32 %s10, 1
      %p187 = scmp.lt.s32.totalorder %s15, 1
      %s188 = scalar_select %p187, %s15, 1
      %s189 = smul.addr %s188, 3
      %s190 = smul.addr %s189, 8
      %s191 = scalar_lea.vmem %s0, %s190
      %p192 = pneg %p36
      %p193 = pneg %p33
      %p194 = scmp.lt.s32.totalorder %s15, 1
      %s195 = scalar_select %p194, %s15, 1
      %s196 = smul.addr %s195, 8
      %s197 = scalar_lea.vmem %s1, %s196
      %p198 = pneg %p62
      %p199 = pneg %p59
      %p200 = scmp.lt.s32.totalorder %s15, 1
      %s201 = scalar_select %p200, %s15, 1
      %s202 = smul.addr %s201, 4
      %s203 = smul.addr %s202, 8
      %s204 = scalar_lea.vmem %s2, %s203
      %p205 = pneg %p88
      %p206 = pneg %p85
      %p207 = pneg %p109
      %p208 = pneg %p106
      %p209 = pneg %p135
      %p210 = pneg %p132
      %p211 = scmp.lt.s32.totalorder %s15, 1
      %s212 = scalar_select %p211, %s15, 1
      %s213 = smul.addr %s212, 4
      %s214 = scalar_lea.vmem %s4, %s213
      %p215 = scmp.lt.s32.totalorder %s15, 1
      %s216 = scalar_select %p215, %s15, 1
      %s217 = smul.addr %s216, 3
      %s218 = smul.addr %s217, 8
      %s219 = scalar_lea.vmem %s0, %s218
      %p220 = scmp.lt.s32.totalorder %s15, 1
      %s221 = scalar_select %p220, %s15, 1
      %s222 = smul.addr %s221, 8
      %s223 = scalar_lea.vmem %s1, %s222
      %p224 = scmp.lt.s32.totalorder %s15, 1
      %s225 = scalar_select %p224, %s15, 1
      %s226 = smul.addr %s225, 4
      %s227 = smul.addr %s226, 8
      %s228 = scalar_lea.vmem %s2, %s227
      %p229 = scmp.lt.s32.totalorder %s15, 1
      %s230 = scalar_select %p229, %s15, 1
      %s231 = smul.addr %s230, 4
      %s232 = scalar_lea.vmem %s4, %s231
      %v233 = vld [vmem:[%s219] sm:$0xff]
      %v234 = vld [vmem:[%s219 + $0x8] sm:$0xff]
      %v235 = vld [vmem:[%s219 + $0x10] sm:$0xf]
      %vm239 = vcmask 1045504
      %v240 = vrot.slane %v233, 2
      %v241 = vrot.slane %v234, 2
      %v242 = vsel %vm239, %v240, %v241
      %v243 = vrot.slane %v235, 2
      %v244 = vsel %vm239, %v241, %v243
      %245 = vrot.lane.b32.xlu0 %v242, 32
      %v246 = vpop.permute.xlu0 %245
      %247 = vrot.lane.b32.xlu0 %v244, 32
      %v248 = vpop.permute.xlu0 %247
      %vm251 = vcmask 1043456
      %v252 = vrot.slane %v233, 4
      %v253 = vrot.slane %v234, 4
      %v254 = vsel %vm251, %v252, %v253
      %v255 = vrot.slane %v235, 4
      %v256 = vsel %vm251, %v253, %v255
      %257 = vrot.lane.b32.xlu0 %v254, 64
      %v258 = vpop.permute.xlu0 %257
      %259 = vrot.lane.b32.xlu0 %v256, 64
      %v260 = vpop.permute.xlu0 %259
      %vm263 = vcmask 261120
      %v264 = vsel %vm263, %v233, %v246
      %v265 = vsel %vm263, %v234, %v248
      %vm266 = vcmask 523264
      %v267 = vsel %vm266, %v264, %v258
      %v268 = vsel %vm266, %v265, %v260
      %v269 = vld [vmem:[%s3] sm:$0xff]
      %v270 = vld [vmem:[%s3 + $0x8] sm:$0xff]
      %v271 = vld [vmem:[%s3 + $0x10] sm:$0xff]
      %v272 = vld [vmem:[%s3 + $0x18] sm:$0xff]
      %v273 = vld [vmem:[%s3 + $0x20] sm:$0xff]
      %v274 = vld [vmem:[%s3 + $0x28] sm:$0xff]
      %v275 = vld [vmem:[%s3 + $0x30] sm:$0xff]
      %v276 = vld [vmem:[%s3 + $0x38] sm:$0xff]
      %v277 = vld [vmem:[%s3 + $0x40] sm:$0xff]
      %v278 = vld [vmem:[%s3 + $0x48] sm:$0xff]
      %v279 = vld [vmem:[%s3 + $0x50] sm:$0xff]
      %v280 = vld [vmem:[%s3 + $0x58] sm:$0xff]
      %v281 = vld [vmem:[%s3 + $0x60] sm:$0xff]
      %v282 = vld [vmem:[%s3 + $0x68] sm:$0xff]
      %v283 = vld [vmem:[%s3 + $0x70] sm:$0xff]
      %v284 = vld [vmem:[%s3 + $0x78] sm:$0xff]
      %v285 = vld [vmem:[%s3 + $0x80] sm:$0x1]
      %v286 = vperm.slane %v285, 0
      %287 = vmatpush.msra.mxu0 %v284
      %288 = vmatpush.msra.mxu0 %v283
      %289 = vmatpush.msra.mxu0 %v282
      %290 = vmatpush.msra.mxu0 %v281
      %291 = vmatpush.msra.mxu0 %v280
      %292 = vmatpush.msra.mxu0 %v279
      %293 = vmatpush.msra.mxu0 %v278
      %294 = vmatpush.msra.mxu0 %v277
      %295 = vmatpush.msra.mxu0 %v276
      %296 = vmatpush.msra.mxu0 %v275
      %297 = vmatpush.msra.mxu0 %v274
      %298 = vmatpush.msra.mxu0 %v273
      %299 = vmatpush.msra.mxu0 %v272
      %300 = vmatpush.msra.mxu0 %v271
      %301 = vmatpush.msra.mxu0 %v270
      %302 = vmatpush.msra.mxu0 %v269
      %303 = vmatmul.f32.gmra.mxu0 %v267
      %v304 = vpop.f32.mrf.mxu0
      %v305 = vadd.f32 %v286, %v304
      %306 = vmatmul.f32.gmra.mxu0 %v268
      %v307 = vpop.f32.mrf.mxu0
      %v308 = vadd.f32 %v286, %v307
      %309 = vdwg.mxu0
      %v310 = vmul.f32 %v305, 0.5
      %v311 = vmul.f32 %v308, 0.5
      %v312 = vmul.f32 %v305, 0.70710677
      %v313 = vmul.f32 %v308, 0.70710677
      %vm314 = vcmp.lt.f32.partialorder %v312, 0.0
      %vm315 = vcmp.lt.f32.partialorder %v313, 0.0
      %v316 = vsel %vm314, -1.0, 1.0
      %v317 = vsel %vm315, -1.0, 1.0
      %v318 = vand.u32 2147483647, %v312
      %v319 = vand.u32 2147483647, %v313
      %v320 = vmul.f32 %v318, 0.3275911
      %v321 = vmul.f32 %v319, 0.3275911
      %v322 = vadd.f32 %v320, 1.0
      %v323 = vadd.f32 %v321, 1.0
      %v324 = vrcp.pop %v322
      %v325 = vmul.f32 %v322, %v324
      %v326 = vsub.f32 1.0, %v325
      %v327 = vmul.f32 %v324, %v326
      %v328 = vadd.f32 %v324, %v327
      %vm329 = vweird.f32 %v322
      %vm330 = vweird.f32 %v324
      %vm331 = vmor %vm329, %vm330
      %v332 = vsel %vm331, %v324, %v328
      %v333 = vand.u32 2147483647, %v322
      %vm334 = vcmp.eq.f32.partialorder %v333, 8.507059e+37
      %v335 = vand.u32 %v322, 2147483648
      %v336 = vor.u32 1.1754944e-38, %v335
      %v337 = vsel %vm334, %v336, %v332
      %v338 = vmul.f32 1.0, %v337
      %v339 = vrcp.pop %v323
      %v340 = vmul.f32 %v323, %v339
      %v341 = vsub.f32 1.0, %v340
      %v342 = vmul.f32 %v339, %v341
      %v343 = vadd.f32 %v339, %v342
      %vm344 = vweird.f32 %v323
      %vm345 = vweird.f32 %v339
      %vm346 = vmor %vm344, %vm345
      %v347 = vsel %vm346, %v339, %v343
      %v348 = vand.u32 2147483647, %v323
      %vm349 = vcmp.eq.f32.partialorder %v348, 8.507059e+37
      %v350 = vand.u32 %v323, 2147483648
      %v351 = vor.u32 1.1754944e-38, %v350
      %v352 = vsel %vm349, %v351, %v347
      %v353 = vmul.f32 1.0, %v352
      %v354 = vmul.f32 %v338, 1.0614054
      %v355 = vmul.f32 %v353, 1.0614054
      %v356 = vadd.f32 %v354, -1.4531521
      %v357 = vadd.f32 %v355, -1.4531521
      %v358 = vmul.f32 %v356, %v338
      %v359 = vmul.f32 %v357, %v353
      %v360 = vadd.f32 %v358, 1.4214138
      %v361 = vadd.f32 %v359, 1.4214138
      %v362 = vmul.f32 %v360, %v338
      %v363 = vmul.f32 %v361, %v353
      %v364 = vadd.f32 %v362, -0.28449672
      %v365 = vadd.f32 %v363, -0.28449672
      %v366 = vmul.f32 %v364, %v338
      %v367 = vmul.f32 %v365, %v353
      %v368 = vadd.f32 %v366, 0.2548296
      %v369 = vadd.f32 %v367, 0.2548296
      %v370 = vmul.f32 %v368, %v338
      %v371 = vmul.f32 %v369, %v353
      %v372 = vsub.f32 0.0, %v318
      %v373 = vsub.f32 0.0, %v319
      %v374 = vmul.f32 %v372, %v318
      %v375 = vmul.f32 %v373, %v319
      %v376 = vmul.f32 %v374, 1.442695
      %v377 = vpow.pop %v376
      %v378 = vmul.f32 %v375, 1.442695
      %v379 = vpow.pop %v378
      %v380 = vmul.f32 %v370, %v377
      %v381 = vmul.f32 %v371, %v379
      %v382 = vsub.f32 1.0, %v380
      %v383 = vsub.f32 1.0, %v381
      %v384 = vmul.f32 %v316, %v382
      %v385 = vmul.f32 %v317, %v383
      %v386 = vadd.f32 %v384, 1.0
      %v387 = vadd.f32 %v385, 1.0
      %v388 = vmul.f32 %v310, %v386
      %v389 = vmul.f32 %v311, %v387
      %390 = vrot.lane.b32.xlu0 %v242, 96
      %v391 = vpop.permute.xlu0 %390
      %392 = vrot.lane.b32.xlu0 %v244, 96
      %v393 = vpop.permute.xlu0 %392
      %v396 = vmul.f32 %v388, %v391
      %v397 = vmul.f32 %v389, %v393
      %v400 = vrot.slane %v396, 4
      %v401 = vrot.slane %v397, 4
      %v402 = vsel %vm251, %v400, %v401
      %v405 = vsel %vm251, 0.0, %v400
      %v406 = vsel %vm251, %v401, 0.0
      %v407 = vld [vmem:[%s3 + $0x88] sm:$0xff]
      %v408 = vld [vmem:[%s3 + $0x90] sm:$0xff]
      %v409 = vld [vmem:[%s3 + $0x98] sm:$0xff]
      %v410 = vld [vmem:[%s3 + $0xa0] sm:$0xff]
      %v411 = vld [vmem:[%s3 + $0xa8] sm:$0x1]
      %v412 = vperm.slane %v411, 0
      %v414 = vsel %vm263, %v405, 0
      %v416 = vsel %vm263, %v402, 0
      %v419 = vsel %vm263, %v406, 0
      %421 = vmatpush.msra.mxu0 0.0
      %422 = vmatpush.msra.mxu0 0.0
      %423 = vmatpush.msra.mxu0 0.0
      %424 = vmatpush.msra.mxu0 0.0
      %425 = vmatpush.msra.mxu0 0.0
      %426 = vmatpush.msra.mxu0 0.0
      %427 = vmatpush.msra.mxu0 0.0
      %428 = vmatpush.msra.mxu0 0.0
      %429 = vmatpush.msra.mxu0 0.0
      %430 = vmatpush.msra.mxu0 0.0
      %431 = vmatpush.msra.mxu0 0.0
      %432 = vmatpush.msra.mxu0 0.0
      %433 = vmatpush.msra.mxu0 %v410
      %434 = vmatpush.msra.mxu0 %v409
      %435 = vmatpush.msra.mxu0 %v408
      %436 = vmatpush.msra.mxu0 %v407
      %437 = vmatmul.f32.gmra.mxu0 %v414
      %v438 = vpop.f32.mrf.mxu0
      %v439 = vadd.f32 %v412, %v438
      %440 = vmatmul.f32.gmra.mxu0 %v416
      %v441 = vpop.f32.mrf.mxu0
      %v442 = vadd.f32 %v412, %v441
      %443 = vmatmul.f32.gmra.mxu0 %v419
      %v444 = vpop.f32.mrf.mxu0
      %v445 = vadd.f32 %v412, %v444
      %446 = vdwg.mxu0
      %v450 = vrot.slane %v439, 4
      %v451 = vrot.slane %v442, 4
      %v452 = vsel %vm251, %v450, %v451
      %v453 = vrot.slane %v445, 4
      %v454 = vsel %vm251, %v451, %v453
      %v457 = vld [vmem:[%s223] sm:$0xff]
      %458 = vrot.lane.b32.xlu0 %v452, 124
      %v459 = vpop.permute.xlu0 %458
      %460 = vrot.lane.b32.xlu0 %v454, 124
      %v461 = vpop.permute.xlu0 %460
      %464 = vrot.lane.b32.xlu0 %v452, 120
      %v465 = vpop.permute.xlu0 %464
      %466 = vrot.lane.b32.xlu0 %v454, 120
      %v467 = vpop.permute.xlu0 %466
      %470 = vrot.lane.b32.xlu0 %v452, 116
      %v471 = vpop.permute.xlu0 %470
      %472 = vrot.lane.b32.xlu0 %v454, 116
      %v473 = vpop.permute.xlu0 %472
      %v476 = vmul.f32 %v452, 0.5
      %v477 = vmul.f32 %v454, 0.5
      %v478 = vmul.f32 %v459, 0.5
      %v479 = vmul.f32 %v461, 0.5
      %v480 = vmul.f32 %v465, 0.5
      %v481 = vmul.f32 %v467, 0.5
      %v482 = vmul.f32 %v471, 0.5
      %v483 = vmul.f32 %v473, 0.5
      %484 = vrot.lane.b32.xlu0 %v439, 124
      %v485 = vpop.permute.xlu0 %484
      %486 = vrot.lane.b32.xlu0 %v442, 124
      %v487 = vpop.permute.xlu0 %486
      %488 = vrot.lane.b32.xlu0 %v439, 120
      %v489 = vpop.permute.xlu0 %488
      %490 = vrot.lane.b32.xlu0 %v442, 120
      %v491 = vpop.permute.xlu0 %490
      %492 = vrot.lane.b32.xlu0 %v439, 116
      %v493 = vpop.permute.xlu0 %492
      %494 = vrot.lane.b32.xlu0 %v442, 116
      %v495 = vpop.permute.xlu0 %494
      %496 = vrot.lane.b32.xlu0 %v445, 124
      %v497 = vpop.permute.xlu0 %496
      %498 = vrot.lane.b32.xlu0 %v445, 120
      %v499 = vpop.permute.xlu0 %498
      %500 = vrot.lane.b32.xlu0 %v445, 116
      %v501 = vpop.permute.xlu0 %500
      %502 = vrot.lane.b32.xlu0 %v439, 112
      %v503 = vpop.permute.xlu0 %502
      %vm504 = vcmask 31744
      %v506 = vsel %vm504, %v476, 0
      %v508 = vsel %vm504, %v503, 0
      %510 = vmatpush.xpose.msra.mxu0 0.0
      %511 = vmatpush.xpose.msra.mxu0 0.0
      %512 = vmatpush.xpose.msra.mxu0 0.0
      %513 = vmatpush.xpose.msra.mxu0 0.0
      %514 = vmatpush.xpose.msra.mxu0 0.0
      %515 = vmatpush.xpose.msra.mxu0 0.0
      %516 = vmatpush.xpose.msra.mxu0 0.0
      %517 = vmatpush.xpose.msra.mxu0 0.0
      %518 = vmatpush.xpose.msra.mxu0 0.0
      %519 = vmatpush.xpose.msra.mxu0 0.0
      %520 = vmatpush.xpose.msra.mxu0 0.0
      %521 = vmatpush.xpose.msra.mxu0 0.0
      %522 = vmatpush.xpose.msra.mxu0 0.0
      %523 = vmatpush.xpose.msra.mxu0 0.0
      %524 = vmatpush.xpose.msra.mxu0 0.0
      %525 = vmatpush.xpose.msra.mxu0 %v508
      %526 = vmatmul.f32.gmra.mxu0 %v506
      %v527 = vpop.f32.mrf.mxu0
      %v528 = vadd.f32 0.0, %v527
      %529 = vdwg.mxu0
      %530 = vrot.lane.b32.xlu0 %v442, 112
      %v531 = vpop.permute.xlu0 %530
      %v533 = vsel %vm504, %v477, 0
      %v535 = vsel %vm504, %v531, 0
      %537 = vmatpush.xpose.msra.mxu0 0.0
      %538 = vmatpush.xpose.msra.mxu0 0.0
      %539 = vmatpush.xpose.msra.mxu0 0.0
      %540 = vmatpush.xpose.msra.mxu0 0.0
      %541 = vmatpush.xpose.msra.mxu0 0.0
      %542 = vmatpush.xpose.msra.mxu0 0.0
      %543 = vmatpush.xpose.msra.mxu0 0.0
      %544 = vmatpush.xpose.msra.mxu0 0.0
      %545 = vmatpush.xpose.msra.mxu0 0.0
      %546 = vmatpush.xpose.msra.mxu0 0.0
      %547 = vmatpush.xpose.msra.mxu0 0.0
      %548 = vmatpush.xpose.msra.mxu0 0.0
      %549 = vmatpush.xpose.msra.mxu0 0.0
      %550 = vmatpush.xpose.msra.mxu0 0.0
      %551 = vmatpush.xpose.msra.mxu0 0.0
      %552 = vmatpush.xpose.msra.mxu0 %v535
      %553 = vmatmul.f32.gmra.mxu0 %v533
      %v554 = vpop.f32.mrf.mxu0
      %v555 = vadd.f32 0.0, %v554
      %556 = vdwg.mxu0
      %557 = vrot.lane.b32.xlu0 %v485, 112
      %v558 = vpop.permute.xlu0 %557
      %v560 = vsel %vm504, %v478, 0
      %v562 = vsel %vm504, %v558, 0
      %564 = vmatpush.xpose.msra.mxu0 0.0
      %565 = vmatpush.xpose.msra.mxu0 0.0
      %566 = vmatpush.xpose.msra.mxu0 0.0
      %567 = vmatpush.xpose.msra.mxu0 0.0
      %568 = vmatpush.xpose.msra.mxu0 0.0
      %569 = vmatpush.xpose.msra.mxu0 0.0
      %570 = vmatpush.xpose.msra.mxu0 0.0
      %571 = vmatpush.xpose.msra.mxu0 0.0
      %572 = vmatpush.xpose.msra.mxu0 0.0
      %573 = vmatpush.xpose.msra.mxu0 0.0
      %574 = vmatpush.xpose.msra.mxu0 0.0
      %575 = vmatpush.xpose.msra.mxu0 0.0
      %576 = vmatpush.xpose.msra.mxu0 0.0
      %577 = vmatpush.xpose.msra.mxu0 0.0
      %578 = vmatpush.xpose.msra.mxu0 0.0
      %579 = vmatpush.xpose.msra.mxu0 %v562
      %580 = vmatmul.f32.gmra.mxu0 %v560
      %v581 = vpop.f32.mrf.mxu0
      %v582 = vadd.f32 0.0, %v581
      %583 = vdwg.mxu0
      %584 = vrot.lane.b32.xlu0 %v487, 112
      %v585 = vpop.permute.xlu0 %584
      %v587 = vsel %vm504, %v479, 0
      %v589 = vsel %vm504, %v585, 0
      %591 = vmatpush.xpose.msra.mxu0 0.0
      %592 = vmatpush.xpose.msra.mxu0 0.0
      %593 = vmatpush.xpose.msra.mxu0 0.0
      %594 = vmatpush.xpose.msra.mxu0 0.0
      %595 = vmatpush.xpose.msra.mxu0 0.0
      %596 = vmatpush.xpose.msra.mxu0 0.0
      %597 = vmatpush.xpose.msra.mxu0 0.0
      %598 = vmatpush.xpose.msra.mxu0 0.0
      %599 = vmatpush.xpose.msra.mxu0 0.0
      %600 = vmatpush.xpose.msra.mxu0 0.0
      %601 = vmatpush.xpose.msra.mxu0 0.0
      %602 = vmatpush.xpose.msra.mxu0 0.0
      %603 = vmatpush.xpose.msra.mxu0 0.0
      %604 = vmatpush.xpose.msra.mxu0 0.0
      %605 = vmatpush.xpose.msra.mxu0 0.0
      %606 = vmatpush.xpose.msra.mxu0 %v589
      %607 = vmatmul.f32.gmra.mxu0 %v587
      %v608 = vpop.f32.mrf.mxu0
      %v609 = vadd.f32 0.0, %v608
      %610 = vdwg.mxu0
      %611 = vrot.lane.b32.xlu0 %v489, 112
      %v612 = vpop.permute.xlu0 %611
      %v614 = vsel %vm504, %v480, 0
      %v616 = vsel %vm504, %v612, 0
      %618 = vmatpush.xpose.msra.mxu0 0.0
      %619 = vmatpush.xpose.msra.mxu0 0.0
      %620 = vmatpush.xpose.msra.mxu0 0.0
      %621 = vmatpush.xpose.msra.mxu0 0.0
      %622 = vmatpush.xpose.msra.mxu0 0.0
      %623 = vmatpush.xpose.msra.mxu0 0.0
      %624 = vmatpush.xpose.msra.mxu0 0.0
      %625 = vmatpush.xpose.msra.mxu0 0.0
      %626 = vmatpush.xpose.msra.mxu0 0.0
      %627 = vmatpush.xpose.msra.mxu0 0.0
      %628 = vmatpush.xpose.msra.mxu0 0.0
      %629 = vmatpush.xpose.msra.mxu0 0.0
      %630 = vmatpush.xpose.msra.mxu0 0.0
      %631 = vmatpush.xpose.msra.mxu0 0.0
      %632 = vmatpush.xpose.msra.mxu0 0.0
      %633 = vmatpush.xpose.msra.mxu0 %v616
      %634 = vmatmul.f32.gmra.mxu0 %v614
      %v635 = vpop.f32.mrf.mxu0
      %v636 = vadd.f32 0.0, %v635
      %637 = vdwg.mxu0
      %638 = vrot.lane.b32.xlu0 %v491, 112
      %v639 = vpop.permute.xlu0 %638
      %v641 = vsel %vm504, %v481, 0
      %v643 = vsel %vm504, %v639, 0
      %645 = vmatpush.xpose.msra.mxu0 0.0
      %646 = vmatpush.xpose.msra.mxu0 0.0
      %647 = vmatpush.xpose.msra.mxu0 0.0
      %648 = vmatpush.xpose.msra.mxu0 0.0
      %649 = vmatpush.xpose.msra.mxu0 0.0
      %650 = vmatpush.xpose.msra.mxu0 0.0
      %651 = vmatpush.xpose.msra.mxu0 0.0
      %652 = vmatpush.xpose.msra.mxu0 0.0
      %653 = vmatpush.xpose.msra.mxu0 0.0
      %654 = vmatpush.xpose.msra.mxu0 0.0
      %655 = vmatpush.xpose.msra.mxu0 0.0
      %656 = vmatpush.xpose.msra.mxu0 0.0
      %657 = vmatpush.xpose.msra.mxu0 0.0
      %658 = vmatpush.xpose.msra.mxu0 0.0
      %659 = vmatpush.xpose.msra.mxu0 0.0
      %660 = vmatpush.xpose.msra.mxu0 %v643
      %661 = vmatmul.f32.gmra.mxu0 %v641
      %v662 = vpop.f32.mrf.mxu0
      %v663 = vadd.f32 0.0, %v662
      %664 = vdwg.mxu0
      %665 = vrot.lane.b32.xlu0 %v493, 112
      %v666 = vpop.permute.xlu0 %665
      %v668 = vsel %vm504, %v482, 0
      %v670 = vsel %vm504, %v666, 0
      %672 = vmatpush.xpose.msra.mxu0 0.0
      %673 = vmatpush.xpose.msra.mxu0 0.0
      %674 = vmatpush.xpose.msra.mxu0 0.0
      %675 = vmatpush.xpose.msra.mxu0 0.0
      %676 = vmatpush.xpose.msra.mxu0 0.0
      %677 = vmatpush.xpose.msra.mxu0 0.0
      %678 = vmatpush.xpose.msra.mxu0 0.0
      %679 = vmatpush.xpose.msra.mxu0 0.0
      %680 = vmatpush.xpose.msra.mxu0 0.0
      %681 = vmatpush.xpose.msra.mxu0 0.0
      %682 = vmatpush.xpose.msra.mxu0 0.0
      %683 = vmatpush.xpose.msra.mxu0 0.0
      %684 = vmatpush.xpose.msra.mxu0 0.0
      %685 = vmatpush.xpose.msra.mxu0 0.0
      %686 = vmatpush.xpose.msra.mxu0 0.0
      %687 = vmatpush.xpose.msra.mxu0 %v670
      %688 = vmatmul.f32.gmra.mxu0 %v668
      %v689 = vpop.f32.mrf.mxu0
      %v690 = vadd.f32 0.0, %v689
      %691 = vdwg.mxu0
      %692 = vrot.lane.b32.xlu0 %v495, 112
      %v693 = vpop.permute.xlu0 %692
      %v695 = vsel %vm504, %v483, 0
      %v697 = vsel %vm504, %v693, 0
      %699 = vmatpush.xpose.msra.mxu0 0.0
      %700 = vmatpush.xpose.msra.mxu0 0.0
      %701 = vmatpush.xpose.msra.mxu0 0.0
      %702 = vmatpush.xpose.msra.mxu0 0.0
      %703 = vmatpush.xpose.msra.mxu0 0.0
      %704 = vmatpush.xpose.msra.mxu0 0.0
      %705 = vmatpush.xpose.msra.mxu0 0.0
      %706 = vmatpush.xpose.msra.mxu0 0.0
      %707 = vmatpush.xpose.msra.mxu0 0.0
      %708 = vmatpush.xpose.msra.mxu0 0.0
      %709 = vmatpush.xpose.msra.mxu0 0.0
      %710 = vmatpush.xpose.msra.mxu0 0.0
      %711 = vmatpush.xpose.msra.mxu0 0.0
      %712 = vmatpush.xpose.msra.mxu0 0.0
      %713 = vmatpush.xpose.msra.mxu0 0.0
      %714 = vmatpush.xpose.msra.mxu0 %v697
      %715 = vmatmul.f32.gmra.mxu0 %v695
      %v716 = vpop.f32.mrf.mxu0
      %v717 = vadd.f32 0.0, %v716
      %718 = vdwg.mxu0
      %719 = vmatpush.xpose.msra.mxu0 0.0
      %720 = vmatpush.xpose.msra.mxu0 0.0
      %721 = vmatpush.xpose.msra.mxu0 0.0
      %722 = vmatpush.xpose.msra.mxu0 0.0
      %723 = vmatpush.xpose.msra.mxu0 0.0
      %724 = vmatpush.xpose.msra.mxu0 0.0
      %725 = vmatpush.xpose.msra.mxu0 0.0
      %726 = vmatpush.xpose.msra.mxu0 0.0
      %727 = vmatpush.xpose.msra.mxu0 0.0
      %728 = vmatpush.xpose.msra.mxu0 0.0
      %729 = vmatpush.xpose.msra.mxu0 0.0
      %730 = vmatpush.xpose.msra.mxu0 0.0
      %731 = vmatpush.xpose.msra.mxu0 0.0
      %732 = vmatpush.xpose.msra.mxu0 0.0
      %733 = vmatpush.xpose.msra.mxu0 0.0
      %734 = vmatpush.xpose.msra.mxu0 %v535
      %735 = vmatmul.f32.gmra.mxu0 %v506
      %v736 = vpop.f32.mrf.mxu0
      %v737 = vadd.f32 0.0, %v736
      %738 = vdwg.mxu0
      %739 = vrot.lane.b32.xlu0 %v445, 112
      %v740 = vpop.permute.xlu0 %739
      %v741 = vsel %vm504, %v740, 0
      %743 = vmatpush.xpose.msra.mxu0 0.0
      %744 = vmatpush.xpose.msra.mxu0 0.0
      %745 = vmatpush.xpose.msra.mxu0 0.0
      %746 = vmatpush.xpose.msra.mxu0 0.0
      %747 = vmatpush.xpose.msra.mxu0 0.0
      %748 = vmatpush.xpose.msra.mxu0 0.0
      %749 = vmatpush.xpose.msra.mxu0 0.0
      %750 = vmatpush.xpose.msra.mxu0 0.0
      %751 = vmatpush.xpose.msra.mxu0 0.0
      %752 = vmatpush.xpose.msra.mxu0 0.0
      %753 = vmatpush.xpose.msra.mxu0 0.0
      %754 = vmatpush.xpose.msra.mxu0 0.0
      %755 = vmatpush.xpose.msra.mxu0 0.0
      %756 = vmatpush.xpose.msra.mxu0 0.0
      %757 = vmatpush.xpose.msra.mxu0 0.0
      %758 = vmatpush.xpose.msra.mxu0 %v741
      %759 = vmatmul.f32.gmra.mxu0 %v533
      %v760 = vpop.f32.mrf.mxu0
      %v761 = vadd.f32 0.0, %v760
      %762 = vdwg.mxu0
      %763 = vmatpush.xpose.msra.mxu0 0.0
      %764 = vmatpush.xpose.msra.mxu0 0.0
      %765 = vmatpush.xpose.msra.mxu0 0.0
      %766 = vmatpush.xpose.msra.mxu0 0.0
      %767 = vmatpush.xpose.msra.mxu0 0.0
      %768 = vmatpush.xpose.msra.mxu0 0.0
      %769 = vmatpush.xpose.msra.mxu0 0.0
      %770 = vmatpush.xpose.msra.mxu0 0.0
      %771 = vmatpush.xpose.msra.mxu0 0.0
      %772 = vmatpush.xpose.msra.mxu0 0.0
      %773 = vmatpush.xpose.msra.mxu0 0.0
      %774 = vmatpush.xpose.msra.mxu0 0.0
      %775 = vmatpush.xpose.msra.mxu0 0.0
      %776 = vmatpush.xpose.msra.mxu0 0.0
      %777 = vmatpush.xpose.msra.mxu0 0.0
      %778 = vmatpush.xpose.msra.mxu0 %v589
      %779 = vmatmul.f32.gmra.mxu0 %v560
      %v780 = vpop.f32.mrf.mxu0
      %v781 = vadd.f32 0.0, %v780
      %782 = vdwg.mxu0
      %783 = vrot.lane.b32.xlu0 %v497, 112
      %v784 = vpop.permute.xlu0 %783
      %v785 = vsel %vm504, %v784, 0
      %787 = vmatpush.xpose.msra.mxu0 0.0
      %788 = vmatpush.xpose.msra.mxu0 0.0
      %789 = vmatpush.xpose.msra.mxu0 0.0
      %790 = vmatpush.xpose.msra.mxu0 0.0
      %791 = vmatpush.xpose.msra.mxu0 0.0
      %792 = vmatpush.xpose.msra.mxu0 0.0
      %793 = vmatpush.xpose.msra.mxu0 0.0
      %794 = vmatpush.xpose.msra.mxu0 0.0
      %795 = vmatpush.xpose.msra.mxu0 0.0
      %796 = vmatpush.xpose.msra.mxu0 0.0
      %797 = vmatpush.xpose.msra.mxu0 0.0
      %798 = vmatpush.xpose.msra.mxu0 0.0
      %799 = vmatpush.xpose.msra.mxu0 0.0
      %800 = vmatpush.xpose.msra.mxu0 0.0
      %801 = vmatpush.xpose.msra.mxu0 0.0
      %802 = vmatpush.xpose.msra.mxu0 %v785
      %803 = vmatmul.f32.gmra.mxu0 %v587
      %v804 = vpop.f32.mrf.mxu0
      %v805 = vadd.f32 0.0, %v804
      %806 = vdwg.mxu0
      %807 = vmatpush.xpose.msra.mxu0 0.0
      %808 = vmatpush.xpose.msra.mxu0 0.0
      %809 = vmatpush.xpose.msra.mxu0 0.0
      %810 = vmatpush.xpose.msra.mxu0 0.0
      %811 = vmatpush.xpose.msra.mxu0 0.0
      %812 = vmatpush.xpose.msra.mxu0 0.0
      %813 = vmatpush.xpose.msra.mxu0 0.0
      %814 = vmatpush.xpose.msra.mxu0 0.0
      %815 = vmatpush.xpose.msra.mxu0 0.0
      %816 = vmatpush.xpose.msra.mxu0 0.0
      %817 = vmatpush.xpose.msra.mxu0 0.0
      %818 = vmatpush.xpose.msra.mxu0 0.0
      %819 = vmatpush.xpose.msra.mxu0 0.0
      %820 = vmatpush.xpose.msra.mxu0 0.0
      %821 = vmatpush.xpose.msra.mxu0 0.0
      %822 = vmatpush.xpose.msra.mxu0 %v643
      %823 = vmatmul.f32.gmra.mxu0 %v614
      %v824 = vpop.f32.mrf.mxu0
      %v825 = vadd.f32 0.0, %v824
      %826 = vdwg.mxu0
      %827 = vrot.lane.b32.xlu0 %v499, 112
      %v828 = vpop.permute.xlu0 %827
      %v829 = vsel %vm504, %v828, 0
      %831 = vmatpush.xpose.msra.mxu0 0.0
      %832 = vmatpush.xpose.msra.mxu0 0.0
      %833 = vmatpush.xpose.msra.mxu0 0.0
      %834 = vmatpush.xpose.msra.mxu0 0.0
      %835 = vmatpush.xpose.msra.mxu0 0.0
      %836 = vmatpush.xpose.msra.mxu0 0.0
      %837 = vmatpush.xpose.msra.mxu0 0.0
      %838 = vmatpush.xpose.msra.mxu0 0.0
      %839 = vmatpush.xpose.msra.mxu0 0.0
      %840 = vmatpush.xpose.msra.mxu0 0.0
      %841 = vmatpush.xpose.msra.mxu0 0.0
      %842 = vmatpush.xpose.msra.mxu0 0.0
      %843 = vmatpush.xpose.msra.mxu0 0.0
      %844 = vmatpush.xpose.msra.mxu0 0.0
      %845 = vmatpush.xpose.msra.mxu0 0.0
      %846 = vmatpush.xpose.msra.mxu0 %v829
      %847 = vmatmul.f32.gmra.mxu0 %v641
      %v848 = vpop.f32.mrf.mxu0
      %v849 = vadd.f32 0.0, %v848
      %850 = vdwg.mxu0
      %851 = vmatpush.xpose.msra.mxu0 0.0
      %852 = vmatpush.xpose.msra.mxu0 0.0
      %853 = vmatpush.xpose.msra.mxu0 0.0
      %854 = vmatpush.xpose.msra.mxu0 0.0
      %855 = vmatpush.xpose.msra.mxu0 0.0
      %856 = vmatpush.xpose.msra.mxu0 0.0
      %857 = vmatpush.xpose.msra.mxu0 0.0
      %858 = vmatpush.xpose.msra.mxu0 0.0
      %859 = vmatpush.xpose.msra.mxu0 0.0
      %860 = vmatpush.xpose.msra.mxu0 0.0
      %861 = vmatpush.xpose.msra.mxu0 0.0
      %862 = vmatpush.xpose.msra.mxu0 0.0
      %863 = vmatpush.xpose.msra.mxu0 0.0
      %864 = vmatpush.xpose.msra.mxu0 0.0
      %865 = vmatpush.xpose.msra.mxu0 0.0
      %866 = vmatpush.xpose.msra.mxu0 %v697
      %867 = vmatmul.f32.gmra.mxu0 %v668
      %v868 = vpop.f32.mrf.mxu0
      %v869 = vadd.f32 0.0, %v868
      %870 = vdwg.mxu0
      %871 = vrot.lane.b32.xlu0 %v501, 112
      %v872 = vpop.permute.xlu0 %871
      %v873 = vsel %vm504, %v872, 0
      %875 = vmatpush.xpose.msra.mxu0 0.0
      %876 = vmatpush.xpose.msra.mxu0 0.0
      %877 = vmatpush.xpose.msra.mxu0 0.0
      %878 = vmatpush.xpose.msra.mxu0 0.0
      %879 = vmatpush.xpose.msra.mxu0 0.0
      %880 = vmatpush.xpose.msra.mxu0 0.0
      %881 = vmatpush.xpose.msra.mxu0 0.0
      %882 = vmatpush.xpose.msra.mxu0 0.0
      %883 = vmatpush.xpose.msra.mxu0 0.0
      %884 = vmatpush.xpose.msra.mxu0 0.0
      %885 = vmatpush.xpose.msra.mxu0 0.0
      %886 = vmatpush.xpose.msra.mxu0 0.0
      %887 = vmatpush.xpose.msra.mxu0 0.0
      %888 = vmatpush.xpose.msra.mxu0 0.0
      %889 = vmatpush.xpose.msra.mxu0 0.0
      %890 = vmatpush.xpose.msra.mxu0 %v873
      %891 = vmatmul.f32.gmra.mxu0 %v695
      %v892 = vpop.f32.mrf.mxu0
      %v893 = vadd.f32 0.0, %v892
      %894 = vdwg.mxu0
      %903 = vrot.lane.b32.xlu0 %v737, 8
      %v904 = vpop.permute.xlu0 %903
      %905 = vrot.lane.b32.xlu0 %v761, 8
      %v906 = vpop.permute.xlu0 %905
      %907 = vrot.lane.b32.xlu0 %v781, 8
      %v908 = vpop.permute.xlu0 %907
      %909 = vrot.lane.b32.xlu0 %v805, 8
      %v910 = vpop.permute.xlu0 %909
      %911 = vrot.lane.b32.xlu0 %v825, 8
      %v912 = vpop.permute.xlu0 %911
      %913 = vrot.lane.b32.xlu0 %v849, 8
      %v914 = vpop.permute.xlu0 %913
      %915 = vrot.lane.b32.xlu0 %v869, 8
      %v916 = vpop.permute.xlu0 %915
      %917 = vrot.lane.b32.xlu0 %v893, 8
      %v918 = vpop.permute.xlu0 %917
      %vm927 = vcmask 64512
      %v928 = vsel %vm927, %v528, %v904
      %v929 = vsel %vm927, %v555, %v906
      %v930 = vsel %vm927, %v582, %v908
      %v931 = vsel %vm927, %v609, %v910
      %v932 = vsel %vm927, %v636, %v912
      %v933 = vsel %vm927, %v663, %v914
      %v934 = vsel %vm927, %v690, %v916
      %v935 = vsel %vm927, %v717, %v918
      %v937 = vrot.slane %v457, 1
      %v938 = vrot.slane %v457, 2
      %v939 = vrot.slane %v457, 3
      %v940 = vrot.slane %v457, 4
      %v941 = vrot.slane %v457, 5
      %v942 = vrot.slane %v457, 6
      %v943 = vrot.slane %v457, 7
      %v951 = vsub.f32 %v457, 1.0
      %v952 = vsub.f32 %v937, 1.0
      %v953 = vsub.f32 %v938, 1.0
      %v954 = vsub.f32 %v939, 1.0
      %v955 = vsub.f32 %v940, 1.0
      %v956 = vsub.f32 %v941, 1.0
      %v957 = vsub.f32 %v942, 1.0
      %v958 = vsub.f32 %v943, 1.0
      %v959 = vmul.f32 %v951, 1e+09
      %v960 = vmul.f32 %v952, 1e+09
      %v961 = vmul.f32 %v953, 1e+09
      %v962 = vmul.f32 %v954, 1e+09
      %v963 = vmul.f32 %v955, 1e+09
      %v964 = vmul.f32 %v956, 1e+09
      %v965 = vmul.f32 %v957, 1e+09
      %v966 = vmul.f32 %v958, 1e+09
      %v975 = vperm.slane %v959, 0
      %v976 = vperm.slane %v960, 0
      %v977 = vperm.slane %v961, 0
      %v978 = vperm.slane %v962, 0
      %v979 = vperm.slane %v963, 0
      %v980 = vperm.slane %v964, 0
      %v981 = vperm.slane %v965, 0
      %v982 = vperm.slane %v966, 0
      %v991 = vadd.f32 %v928, %v975
      %v992 = vadd.f32 %v929, %v976
      %v993 = vadd.f32 %v930, %v977
      %v994 = vadd.f32 %v931, %v978
      %v995 = vadd.f32 %v932, %v979
      %v996 = vadd.f32 %v933, %v980
      %v997 = vadd.f32 %v934, %v981
      %v998 = vadd.f32 %v935, %v982
      %vm999 = vcmask 130048
      %v1000 = vsel %vm999, %v991, -inf
      %1001 = vmax.xlane.f32.xlu0 %v1000
      %v1002 = vpop.xlane.xlu0 %1001
      %v1003 = vsel %vm999, %v992, -inf
      %1004 = vmax.xlane.f32.xlu0 %v1003
      %v1005 = vpop.xlane.xlu0 %1004
      %v1006 = vsel %vm999, %v993, -inf
      %1007 = vmax.xlane.f32.xlu0 %v1006
      %v1008 = vpop.xlane.xlu0 %1007
      %v1009 = vsel %vm999, %v994, -inf
      %1010 = vmax.xlane.f32.xlu0 %v1009
      %v1011 = vpop.xlane.xlu0 %1010
      %v1012 = vsel %vm999, %v995, -inf
      %1013 = vmax.xlane.f32.xlu0 %v1012
      %v1014 = vpop.xlane.xlu0 %1013
      %v1015 = vsel %vm999, %v996, -inf
      %1016 = vmax.xlane.f32.xlu0 %v1015
      %v1017 = vpop.xlane.xlu0 %1016
      %v1018 = vsel %vm999, %v997, -inf
      %1019 = vmax.xlane.f32.xlu0 %v1018
      %v1020 = vpop.xlane.xlu0 %1019
      %v1021 = vsel %vm999, %v998, -inf
      %1022 = vmax.xlane.f32.xlu0 %v1021
      %v1023 = vpop.xlane.xlu0 %1022
      %v1024 = vsub.f32 %v991, %v1002
      %v1025 = vsub.f32 %v992, %v1005
      %v1026 = vsub.f32 %v993, %v1008
      %v1027 = vsub.f32 %v994, %v1011
      %v1028 = vsub.f32 %v995, %v1014
      %v1029 = vsub.f32 %v996, %v1017
      %v1030 = vsub.f32 %v997, %v1020
      %v1031 = vsub.f32 %v998, %v1023
      %v1032 = vmul.f32 %v1024, 1.442695
      %v1033 = vpow.pop %v1032
      %v1034 = vmul.f32 %v1025, 1.442695
      %v1035 = vpow.pop %v1034
      %v1036 = vmul.f32 %v1026, 1.442695
      %v1037 = vpow.pop %v1036
      %v1038 = vmul.f32 %v1027, 1.442695
      %v1039 = vpow.pop %v1038
      %v1040 = vmul.f32 %v1028, 1.442695
      %v1041 = vpow.pop %v1040
      %v1042 = vmul.f32 %v1029, 1.442695
      %v1043 = vpow.pop %v1042
      %v1044 = vmul.f32 %v1030, 1.442695
      %v1045 = vpow.pop %v1044
      %v1046 = vmul.f32 %v1031, 1.442695
      %v1047 = vpow.pop %v1046
      %v1048 = vsel %vm999, %v1033, 0.0
      %1049 = vadd.xlane.f32.xlu0 %v1048
      %v1050 = vpop.xlane.xlu0 %1049
      %v1051 = vsel %vm999, %v1035, 0.0
      %1052 = vadd.xlane.f32.xlu0 %v1051
      %v1053 = vpop.xlane.xlu0 %1052
      %v1054 = vsel %vm999, %v1037, 0.0
      %1055 = vadd.xlane.f32.xlu0 %v1054
      %v1056 = vpop.xlane.xlu0 %1055
      %v1057 = vsel %vm999, %v1039, 0.0
      %1058 = vadd.xlane.f32.xlu0 %v1057
      %v1059 = vpop.xlane.xlu0 %1058
      %v1060 = vsel %vm999, %v1041, 0.0
      %1061 = vadd.xlane.f32.xlu0 %v1060
      %v1062 = vpop.xlane.xlu0 %1061
      %v1063 = vsel %vm999, %v1043, 0.0
      %1064 = vadd.xlane.f32.xlu0 %v1063
      %v1065 = vpop.xlane.xlu0 %1064
      %v1066 = vsel %vm999, %v1045, 0.0
      %1067 = vadd.xlane.f32.xlu0 %v1066
      %v1068 = vpop.xlane.xlu0 %1067
      %v1069 = vsel %vm999, %v1047, 0.0
      %1070 = vadd.xlane.f32.xlu0 %v1069
      %v1071 = vpop.xlane.xlu0 %1070
      %v1072 = vrcp.pop %v1050
      %v1073 = vrcp.pop %v1053
      %v1074 = vrcp.pop %v1056
      %v1075 = vrcp.pop %v1059
      %v1076 = vrcp.pop %v1062
      %v1077 = vrcp.pop %v1065
      %v1078 = vrcp.pop %v1068
      %v1079 = vrcp.pop %v1071
      %v1080 = vmul.f32 %v1033, %v1072
      %v1081 = vmul.f32 %v1035, %v1073
      %v1082 = vmul.f32 %v1037, %v1074
      %v1083 = vmul.f32 %v1039, %v1075
      %v1084 = vmul.f32 %v1041, %v1076
      %v1085 = vmul.f32 %v1043, %v1077
      %v1086 = vmul.f32 %v1045, %v1078
      %v1087 = vmul.f32 %v1047, %v1079
      %1089 = vrot.lane.b32.xlu0 %v1080, 120
      %v1090 = vpop.permute.xlu0 %1089
      %1091 = vrot.lane.b32.xlu0 %v442, 96
      %v1092 = vpop.permute.xlu0 %1091
      %v1094 = vsel %vm927, %v1090, 0
      %1096 = vmatpush.msra.mxu0 0.0
      %1097 = vmatpush.msra.mxu0 0.0
      %1098 = vmatpush.msra.mxu0 0.0
      %1099 = vmatpush.msra.mxu0 0.0
      %1100 = vmatpush.msra.mxu0 0.0
      %1101 = vmatpush.msra.mxu0 0.0
      %1102 = vmatpush.msra.mxu0 0.0
      %1103 = vmatpush.msra.mxu0 0.0
      %1104 = vmatpush.msra.mxu0 0.0
      %1105 = vmatpush.msra.mxu0 0.0
      %1106 = vmatpush.msra.mxu0 0.0
      %1107 = vmatpush.msra.mxu0 0.0
      %1108 = vmatpush.msra.mxu0 0.0
      %1109 = vmatpush.msra.mxu0 0.0
      %1110 = vmatpush.msra.mxu0 0.0
      %1111 = vmatpush.msra.mxu0 %v1092
      %1112 = vmatmul.f32.gmra.mxu0 %v1094
      %v1113 = vpop.f32.mrf.mxu0
      %v1114 = vadd.f32 0.0, %v1113
      %1115 = vdwg.mxu0
      %1117 = vrot.lane.b32.xlu0 %v1081, 120
      %v1118 = vpop.permute.xlu0 %1117
      %1119 = vrot.lane.b32.xlu0 %v445, 96
      %v1120 = vpop.permute.xlu0 %1119
      %v1122 = vsel %vm927, %v1118, 0
      %1124 = vmatpush.msra.mxu0 0.0
      %1125 = vmatpush.msra.mxu0 0.0
      %1126 = vmatpush.msra.mxu0 0.0
      %1127 = vmatpush.msra.mxu0 0.0
      %1128 = vmatpush.msra.mxu0 0.0
      %1129 = vmatpush.msra.mxu0 0.0
      %1130 = vmatpush.msra.mxu0 0.0
      %1131 = vmatpush.msra.mxu0 0.0
      %1132 = vmatpush.msra.mxu0 0.0
      %1133 = vmatpush.msra.mxu0 0.0
      %1134 = vmatpush.msra.mxu0 0.0
      %1135 = vmatpush.msra.mxu0 0.0
      %1136 = vmatpush.msra.mxu0 0.0
      %1137 = vmatpush.msra.mxu0 0.0
      %1138 = vmatpush.msra.mxu0 0.0
      %1139 = vmatpush.msra.mxu0 %v1120
      %1140 = vmatmul.f32.gmra.mxu0 %v1122
      %v1141 = vpop.f32.mrf.mxu0
      %v1142 = vadd.f32 0.0, %v1141
      %1143 = vdwg.mxu0
      %1145 = vrot.lane.b32.xlu0 %v1082, 120
      %v1146 = vpop.permute.xlu0 %1145
      %1147 = vrot.lane.b32.xlu0 %v487, 96
      %v1148 = vpop.permute.xlu0 %1147
      %v1150 = vsel %vm927, %v1146, 0
      %1152 = vmatpush.msra.mxu0 0.0
      %1153 = vmatpush.msra.mxu0 0.0
      %1154 = vmatpush.msra.mxu0 0.0
      %1155 = vmatpush.msra.mxu0 0.0
      %1156 = vmatpush.msra.mxu0 0.0
      %1157 = vmatpush.msra.mxu0 0.0
      %1158 = vmatpush.msra.mxu0 0.0
      %1159 = vmatpush.msra.mxu0 0.0
      %1160 = vmatpush.msra.mxu0 0.0
      %1161 = vmatpush.msra.mxu0 0.0
      %1162 = vmatpush.msra.mxu0 0.0
      %1163 = vmatpush.msra.mxu0 0.0
      %1164 = vmatpush.msra.mxu0 0.0
      %1165 = vmatpush.msra.mxu0 0.0
      %1166 = vmatpush.msra.mxu0 0.0
      %1167 = vmatpush.msra.mxu0 %v1148
      %1168 = vmatmul.f32.gmra.mxu0 %v1150
      %v1169 = vpop.f32.mrf.mxu0
      %v1170 = vadd.f32 0.0, %v1169
      %1171 = vdwg.mxu0
      %1173 = vrot.lane.b32.xlu0 %v1083, 120
      %v1174 = vpop.permute.xlu0 %1173
      %1175 = vrot.lane.b32.xlu0 %v497, 96
      %v1176 = vpop.permute.xlu0 %1175
      %v1178 = vsel %vm927, %v1174, 0
      %1180 = vmatpush.msra.mxu0 0.0
      %1181 = vmatpush.msra.mxu0 0.0
      %1182 = vmatpush.msra.mxu0 0.0
      %1183 = vmatpush.msra.mxu0 0.0
      %1184 = vmatpush.msra.mxu0 0.0
      %1185 = vmatpush.msra.mxu0 0.0
      %1186 = vmatpush.msra.mxu0 0.0
      %1187 = vmatpush.msra.mxu0 0.0
      %1188 = vmatpush.msra.mxu0 0.0
      %1189 = vmatpush.msra.mxu0 0.0
      %1190 = vmatpush.msra.mxu0 0.0
      %1191 = vmatpush.msra.mxu0 0.0
      %1192 = vmatpush.msra.mxu0 0.0
      %1193 = vmatpush.msra.mxu0 0.0
      %1194 = vmatpush.msra.mxu0 0.0
      %1195 = vmatpush.msra.mxu0 %v1176
      %1196 = vmatmul.f32.gmra.mxu0 %v1178
      %v1197 = vpop.f32.mrf.mxu0
      %v1198 = vadd.f32 0.0, %v1197
      %1199 = vdwg.mxu0
      %1201 = vrot.lane.b32.xlu0 %v1084, 120
      %v1202 = vpop.permute.xlu0 %1201
      %1203 = vrot.lane.b32.xlu0 %v491, 96
      %v1204 = vpop.permute.xlu0 %1203
      %v1206 = vsel %vm927, %v1202, 0
      %1208 = vmatpush.msra.mxu0 0.0
      %1209 = vmatpush.msra.mxu0 0.0
      %1210 = vmatpush.msra.mxu0 0.0
      %1211 = vmatpush.msra.mxu0 0.0
      %1212 = vmatpush.msra.mxu0 0.0
      %1213 = vmatpush.msra.mxu0 0.0
      %1214 = vmatpush.msra.mxu0 0.0
      %1215 = vmatpush.msra.mxu0 0.0
      %1216 = vmatpush.msra.mxu0 0.0
      %1217 = vmatpush.msra.mxu0 0.0
      %1218 = vmatpush.msra.mxu0 0.0
      %1219 = vmatpush.msra.mxu0 0.0
      %1220 = vmatpush.msra.mxu0 0.0
      %1221 = vmatpush.msra.mxu0 0.0
      %1222 = vmatpush.msra.mxu0 0.0
      %1223 = vmatpush.msra.mxu0 %v1204
      %1224 = vmatmul.f32.gmra.mxu0 %v1206
      %v1225 = vpop.f32.mrf.mxu0
      %v1226 = vadd.f32 0.0, %v1225
      %1227 = vdwg.mxu0
      %1229 = vrot.lane.b32.xlu0 %v1085, 120
      %v1230 = vpop.permute.xlu0 %1229
      %1231 = vrot.lane.b32.xlu0 %v499, 96
      %v1232 = vpop.permute.xlu0 %1231
      %v1234 = vsel %vm927, %v1230, 0
      %1236 = vmatpush.msra.mxu0 0.0
      %1237 = vmatpush.msra.mxu0 0.0
      %1238 = vmatpush.msra.mxu0 0.0
      %1239 = vmatpush.msra.mxu0 0.0
      %1240 = vmatpush.msra.mxu0 0.0
      %1241 = vmatpush.msra.mxu0 0.0
      %1242 = vmatpush.msra.mxu0 0.0
      %1243 = vmatpush.msra.mxu0 0.0
      %1244 = vmatpush.msra.mxu0 0.0
      %1245 = vmatpush.msra.mxu0 0.0
      %1246 = vmatpush.msra.mxu0 0.0
      %1247 = vmatpush.msra.mxu0 0.0
      %1248 = vmatpush.msra.mxu0 0.0
      %1249 = vmatpush.msra.mxu0 0.0
      %1250 = vmatpush.msra.mxu0 0.0
      %1251 = vmatpush.msra.mxu0 %v1232
      %1252 = vmatmul.f32.gmra.mxu0 %v1234
      %v1253 = vpop.f32.mrf.mxu0
      %v1254 = vadd.f32 0.0, %v1253
      %1255 = vdwg.mxu0
      %1257 = vrot.lane.b32.xlu0 %v1086, 120
      %v1258 = vpop.permute.xlu0 %1257
      %1259 = vrot.lane.b32.xlu0 %v495, 96
      %v1260 = vpop.permute.xlu0 %1259
      %v1262 = vsel %vm927, %v1258, 0
      %1264 = vmatpush.msra.mxu0 0.0
      %1265 = vmatpush.msra.mxu0 0.0
      %1266 = vmatpush.msra.mxu0 0.0
      %1267 = vmatpush.msra.mxu0 0.0
      %1268 = vmatpush.msra.mxu0 0.0
      %1269 = vmatpush.msra.mxu0 0.0
      %1270 = vmatpush.msra.mxu0 0.0
      %1271 = vmatpush.msra.mxu0 0.0
      %1272 = vmatpush.msra.mxu0 0.0
      %1273 = vmatpush.msra.mxu0 0.0
      %1274 = vmatpush.msra.mxu0 0.0
      %1275 = vmatpush.msra.mxu0 0.0
      %1276 = vmatpush.msra.mxu0 0.0
      %1277 = vmatpush.msra.mxu0 0.0
      %1278 = vmatpush.msra.mxu0 0.0
      %1279 = vmatpush.msra.mxu0 %v1260
      %1280 = vmatmul.f32.gmra.mxu0 %v1262
      %v1281 = vpop.f32.mrf.mxu0
      %v1282 = vadd.f32 0.0, %v1281
      %1283 = vdwg.mxu0
      %1285 = vrot.lane.b32.xlu0 %v1087, 120
      %v1286 = vpop.permute.xlu0 %1285
      %1287 = vrot.lane.b32.xlu0 %v501, 96
      %v1288 = vpop.permute.xlu0 %1287
      %v1290 = vsel %vm927, %v1286, 0
      %1292 = vmatpush.msra.mxu0 0.0
      %1293 = vmatpush.msra.mxu0 0.0
      %1294 = vmatpush.msra.mxu0 0.0
      %1295 = vmatpush.msra.mxu0 0.0
      %1296 = vmatpush.msra.mxu0 0.0
      %1297 = vmatpush.msra.mxu0 0.0
      %1298 = vmatpush.msra.mxu0 0.0
      %1299 = vmatpush.msra.mxu0 0.0
      %1300 = vmatpush.msra.mxu0 0.0
      %1301 = vmatpush.msra.mxu0 0.0
      %1302 = vmatpush.msra.mxu0 0.0
      %1303 = vmatpush.msra.mxu0 0.0
      %1304 = vmatpush.msra.mxu0 0.0
      %1305 = vmatpush.msra.mxu0 0.0
      %1306 = vmatpush.msra.mxu0 0.0
      %1307 = vmatpush.msra.mxu0 %v1288
      %1308 = vmatmul.f32.gmra.mxu0 %v1290
      %v1309 = vpop.f32.mrf.mxu0
      %v1310 = vadd.f32 0.0, %v1309
      %1311 = vdwg.mxu0
      %1312 = vrot.lane.b32.xlu0 %v439, 96
      %v1313 = vpop.permute.xlu0 %1312
      %v1315 = vsel %vm927, %v1080, 0
      %1317 = vmatpush.msra.mxu0 0.0
      %1318 = vmatpush.msra.mxu0 0.0
      %1319 = vmatpush.msra.mxu0 0.0
      %1320 = vmatpush.msra.mxu0 0.0
      %1321 = vmatpush.msra.mxu0 0.0
      %1322 = vmatpush.msra.mxu0 0.0
      %1323 = vmatpush.msra.mxu0 0.0
      %1324 = vmatpush.msra.mxu0 0.0
      %1325 = vmatpush.msra.mxu0 0.0
      %1326 = vmatpush.msra.mxu0 0.0
      %1327 = vmatpush.msra.mxu0 0.0
      %1328 = vmatpush.msra.mxu0 0.0
      %1329 = vmatpush.msra.mxu0 0.0
      %1330 = vmatpush.msra.mxu0 0.0
      %1331 = vmatpush.msra.mxu0 0.0
      %1332 = vmatpush.msra.mxu0 %v1313
      %1333 = vmatmul.f32.gmra.mxu0 %v1315
      %v1334 = vpop.f32.mrf.mxu0
      %v1335 = vadd.f32 %v1114, %v1334
      %1336 = vdwg.mxu0
      %v1337 = vsel %vm927, %v1081, 0
      %1339 = vmatpush.msra.mxu0 0.0
      %1340 = vmatpush.msra.mxu0 0.0
      %1341 = vmatpush.msra.mxu0 0.0
      %1342 = vmatpush.msra.mxu0 0.0
      %1343 = vmatpush.msra.mxu0 0.0
      %1344 = vmatpush.msra.mxu0 0.0
      %1345 = vmatpush.msra.mxu0 0.0
      %1346 = vmatpush.msra.mxu0 0.0
      %1347 = vmatpush.msra.mxu0 0.0
      %1348 = vmatpush.msra.mxu0 0.0
      %1349 = vmatpush.msra.mxu0 0.0
      %1350 = vmatpush.msra.mxu0 0.0
      %1351 = vmatpush.msra.mxu0 0.0
      %1352 = vmatpush.msra.mxu0 0.0
      %1353 = vmatpush.msra.mxu0 0.0
      %1354 = vmatpush.msra.mxu0 %v1092
      %1355 = vmatmul.f32.gmra.mxu0 %v1337
      %v1356 = vpop.f32.mrf.mxu0
      %v1357 = vadd.f32 %v1142, %v1356
      %1358 = vdwg.mxu0
      %1359 = vrot.lane.b32.xlu0 %v485, 96
      %v1360 = vpop.permute.xlu0 %1359
      %v1362 = vsel %vm927, %v1082, 0
      %1364 = vmatpush.msra.mxu0 0.0
      %1365 = vmatpush.msra.mxu0 0.0
      %1366 = vmatpush.msra.mxu0 0.0
      %1367 = vmatpush.msra.mxu0 0.0
      %1368 = vmatpush.msra.mxu0 0.0
      %1369 = vmatpush.msra.mxu0 0.0
      %1370 = vmatpush.msra.mxu0 0.0
      %1371 = vmatpush.msra.mxu0 0.0
      %1372 = vmatpush.msra.mxu0 0.0
      %1373 = vmatpush.msra.mxu0 0.0
      %1374 = vmatpush.msra.mxu0 0.0
      %1375 = vmatpush.msra.mxu0 0.0
      %1376 = vmatpush.msra.mxu0 0.0
      %1377 = vmatpush.msra.mxu0 0.0
      %1378 = vmatpush.msra.mxu0 0.0
      %1379 = vmatpush.msra.mxu0 %v1360
      %1380 = vmatmul.f32.gmra.mxu0 %v1362
      %v1381 = vpop.f32.mrf.mxu0
      %v1382 = vadd.f32 %v1170, %v1381
      %1383 = vdwg.mxu0
      %v1384 = vsel %vm927, %v1083, 0
      %1386 = vmatpush.msra.mxu0 0.0
      %1387 = vmatpush.msra.mxu0 0.0
      %1388 = vmatpush.msra.mxu0 0.0
      %1389 = vmatpush.msra.mxu0 0.0
      %1390 = vmatpush.msra.mxu0 0.0
      %1391 = vmatpush.msra.mxu0 0.0
      %1392 = vmatpush.msra.mxu0 0.0
      %1393 = vmatpush.msra.mxu0 0.0
      %1394 = vmatpush.msra.mxu0 0.0
      %1395 = vmatpush.msra.mxu0 0.0
      %1396 = vmatpush.msra.mxu0 0.0
      %1397 = vmatpush.msra.mxu0 0.0
      %1398 = vmatpush.msra.mxu0 0.0
      %1399 = vmatpush.msra.mxu0 0.0
      %1400 = vmatpush.msra.mxu0 0.0
      %1401 = vmatpush.msra.mxu0 %v1148
      %1402 = vmatmul.f32.gmra.mxu0 %v1384
      %v1403 = vpop.f32.mrf.mxu0
      %v1404 = vadd.f32 %v1198, %v1403
      %1405 = vdwg.mxu0
      %1406 = vrot.lane.b32.xlu0 %v489, 96
      %v1407 = vpop.permute.xlu0 %1406
      %v1409 = vsel %vm927, %v1084, 0
      %1411 = vmatpush.msra.mxu0 0.0
      %1412 = vmatpush.msra.mxu0 0.0
      %1413 = vmatpush.msra.mxu0 0.0
      %1414 = vmatpush.msra.mxu0 0.0
      %1415 = vmatpush.msra.mxu0 0.0
      %1416 = vmatpush.msra.mxu0 0.0
      %1417 = vmatpush.msra.mxu0 0.0
      %1418 = vmatpush.msra.mxu0 0.0
      %1419 = vmatpush.msra.mxu0 0.0
      %1420 = vmatpush.msra.mxu0 0.0
      %1421 = vmatpush.msra.mxu0 0.0
      %1422 = vmatpush.msra.mxu0 0.0
      %1423 = vmatpush.msra.mxu0 0.0
      %1424 = vmatpush.msra.mxu0 0.0
      %1425 = vmatpush.msra.mxu0 0.0
      %1426 = vmatpush.msra.mxu0 %v1407
      %1427 = vmatmul.f32.gmra.mxu0 %v1409
      %v1428 = vpop.f32.mrf.mxu0
      %v1429 = vadd.f32 %v1226, %v1428
      %1430 = vdwg.mxu0
      %v1431 = vsel %vm927, %v1085, 0
      %1433 = vmatpush.msra.mxu0 0.0
      %1434 = vmatpush.msra.mxu0 0.0
      %1435 = vmatpush.msra.mxu0 0.0
      %1436 = vmatpush.msra.mxu0 0.0
      %1437 = vmatpush.msra.mxu0 0.0
      %1438 = vmatpush.msra.mxu0 0.0
      %1439 = vmatpush.msra.mxu0 0.0
      %1440 = vmatpush.msra.mxu0 0.0
      %1441 = vmatpush.msra.mxu0 0.0
      %1442 = vmatpush.msra.mxu0 0.0
      %1443 = vmatpush.msra.mxu0 0.0
      %1444 = vmatpush.msra.mxu0 0.0
      %1445 = vmatpush.msra.mxu0 0.0
      %1446 = vmatpush.msra.mxu0 0.0
      %1447 = vmatpush.msra.mxu0 0.0
      %1448 = vmatpush.msra.mxu0 %v1204
      %1449 = vmatmul.f32.gmra.mxu0 %v1431
      %v1450 = vpop.f32.mrf.mxu0
      %v1451 = vadd.f32 %v1254, %v1450
      %1452 = vdwg.mxu0
      %1453 = vrot.lane.b32.xlu0 %v493, 96
      %v1454 = vpop.permute.xlu0 %1453
      %v1456 = vsel %vm927, %v1086, 0
      %1458 = vmatpush.msra.mxu0 0.0
      %1459 = vmatpush.msra.mxu0 0.0
      %1460 = vmatpush.msra.mxu0 0.0
      %1461 = vmatpush.msra.mxu0 0.0
      %1462 = vmatpush.msra.mxu0 0.0
      %1463 = vmatpush.msra.mxu0 0.0
      %1464 = vmatpush.msra.mxu0 0.0
      %1465 = vmatpush.msra.mxu0 0.0
      %1466 = vmatpush.msra.mxu0 0.0
      %1467 = vmatpush.msra.mxu0 0.0
      %1468 = vmatpush.msra.mxu0 0.0
      %1469 = vmatpush.msra.mxu0 0.0
      %1470 = vmatpush.msra.mxu0 0.0
      %1471 = vmatpush.msra.mxu0 0.0
      %1472 = vmatpush.msra.mxu0 0.0
      %1473 = vmatpush.msra.mxu0 %v1454
      %1474 = vmatmul.f32.gmra.mxu0 %v1456
      %v1475 = vpop.f32.mrf.mxu0
      %v1476 = vadd.f32 %v1282, %v1475
      %1477 = vdwg.mxu0
      %v1478 = vsel %vm927, %v1087, 0
      %1480 = vmatpush.msra.mxu0 0.0
      %1481 = vmatpush.msra.mxu0 0.0
      %1482 = vmatpush.msra.mxu0 0.0
      %1483 = vmatpush.msra.mxu0 0.0
      %1484 = vmatpush.msra.mxu0 0.0
      %1485 = vmatpush.msra.mxu0 0.0
      %1486 = vmatpush.msra.mxu0 0.0
      %1487 = vmatpush.msra.mxu0 0.0
      %1488 = vmatpush.msra.mxu0 0.0
      %1489 = vmatpush.msra.mxu0 0.0
      %1490 = vmatpush.msra.mxu0 0.0
      %1491 = vmatpush.msra.mxu0 0.0
      %1492 = vmatpush.msra.mxu0 0.0
      %1493 = vmatpush.msra.mxu0 0.0
      %1494 = vmatpush.msra.mxu0 0.0
      %1495 = vmatpush.msra.mxu0 %v1260
      %1496 = vmatmul.f32.gmra.mxu0 %v1478
      %v1497 = vpop.f32.mrf.mxu0
      %v1498 = vadd.f32 %v1310, %v1497
      %1499 = vdwg.mxu0
      %v1500 = vsel %vm999, %v457, 0.0
      %1501 = vadd.xlane.f32.xlu0 %v1500
      %v1502 = vpop.xlane.xlu0 %1501
      %vm1503 = vcmp.gt.f32.partialorder %v1502, 0.0
      %v1504 = vsel %vm1503, 1, 0
      %v1505 = vcvt.s32.f32 %v1504
      %v1507 = vperm.slane %v1505, 0
      %v1508 = vperm.slane %v1505, 1
      %v1509 = vperm.slane %v1505, 2
      %v1510 = vperm.slane %v1505, 3
      %v1511 = vperm.slane %v1505, 4
      %v1512 = vperm.slane %v1505, 5
      %v1513 = vperm.slane %v1505, 6
      %v1514 = vperm.slane %v1505, 7
      %v1523 = vmul.f32 %v1335, %v1507
      %v1524 = vmul.f32 %v1357, %v1508
      %v1525 = vmul.f32 %v1382, %v1509
      %v1526 = vmul.f32 %v1404, %v1510
      %v1527 = vmul.f32 %v1429, %v1511
      %v1528 = vmul.f32 %v1451, %v1512
      %v1529 = vmul.f32 %v1476, %v1513
      %v1530 = vmul.f32 %v1498, %v1514
      %1533 = vrot.lane.b32.xlu0 %v1525, 4
      %v1534 = vpop.permute.xlu0 %1533
      %1535 = vrot.lane.b32.xlu0 %v1526, 4
      %v1536 = vpop.permute.xlu0 %1535
      %1541 = vrot.lane.b32.xlu0 %v1527, 8
      %v1542 = vpop.permute.xlu0 %1541
      %1543 = vrot.lane.b32.xlu0 %v1528, 8
      %v1544 = vpop.permute.xlu0 %1543
      %1549 = vrot.lane.b32.xlu0 %v1529, 12
      %v1550 = vpop.permute.xlu0 %1549
      %1551 = vrot.lane.b32.xlu0 %v1530, 12
      %v1552 = vpop.permute.xlu0 %1551
      %v1555 = vsel %vm504, %v1523, %v1534
      %v1556 = vsel %vm504, %v1524, %v1536
      %v1557 = vsel %vm927, %v1555, %v1542
      %v1558 = vsel %vm927, %v1556, %v1544
      %vm1559 = vcmask 97280
      %v1560 = vsel %vm1559, %v1557, %v1550
      %v1561 = vsel %vm1559, %v1558, %v1552
      %v1562 = vmul.f32 %v1560, 0.5
      %v1563 = vmul.f32 %v1561, 0.5
      %v1564 = vmul.f32 %v1560, 0.70710677
      %v1565 = vmul.f32 %v1561, 0.70710677
      %vm1566 = vcmp.lt.f32.partialorder %v1564, 0.0
      %vm1567 = vcmp.lt.f32.partialorder %v1565, 0.0
      %v1568 = vsel %vm1566, -1.0, 1.0
      %v1569 = vsel %vm1567, -1.0, 1.0
      %v1570 = vand.u32 2147483647, %v1564
      %v1571 = vand.u32 2147483647, %v1565
      %v1572 = vmul.f32 %v1570, 0.3275911
      %v1573 = vmul.f32 %v1571, 0.3275911
      %v1574 = vadd.f32 %v1572, 1.0
      %v1575 = vadd.f32 %v1573, 1.0
      %v1576 = vrcp.pop %v1574
      %v1577 = vmul.f32 %v1574, %v1576
      %v1578 = vsub.f32 1.0, %v1577
      %v1579 = vmul.f32 %v1576, %v1578
      %v1580 = vadd.f32 %v1576, %v1579
      %vm1581 = vweird.f32 %v1574
      %vm1582 = vweird.f32 %v1576
      %vm1583 = vmor %vm1581, %vm1582
      %v1584 = vsel %vm1583, %v1576, %v1580
      %v1585 = vand.u32 2147483647, %v1574
      %vm1586 = vcmp.eq.f32.partialorder %v1585, 8.507059e+37
      %v1587 = vand.u32 %v1574, 2147483648
      %v1588 = vor.u32 1.1754944e-38, %v1587
      %v1589 = vsel %vm1586, %v1588, %v1584
      %v1590 = vmul.f32 1.0, %v1589
      %v1591 = vrcp.pop %v1575
      %v1592 = vmul.f32 %v1575, %v1591
      %v1593 = vsub.f32 1.0, %v1592
      %v1594 = vmul.f32 %v1591, %v1593
      %v1595 = vadd.f32 %v1591, %v1594
      %vm1596 = vweird.f32 %v1575
      %vm1597 = vweird.f32 %v1591
      %vm1598 = vmor %vm1596, %vm1597
      %v1599 = vsel %vm1598, %v1591, %v1595
      %v1600 = vand.u32 2147483647, %v1575
      %vm1601 = vcmp.eq.f32.partialorder %v1600, 8.507059e+37
      %v1602 = vand.u32 %v1575, 2147483648
      %v1603 = vor.u32 1.1754944e-38, %v1602
      %v1604 = vsel %vm1601, %v1603, %v1599
      %v1605 = vmul.f32 1.0, %v1604
      %v1606 = vmul.f32 %v1590, 1.0614054
      %v1607 = vmul.f32 %v1605, 1.0614054
      %v1608 = vadd.f32 %v1606, -1.4531521
      %v1609 = vadd.f32 %v1607, -1.4531521
      %v1610 = vmul.f32 %v1608, %v1590
      %v1611 = vmul.f32 %v1609, %v1605
      %v1612 = vadd.f32 %v1610, 1.4214138
      %v1613 = vadd.f32 %v1611, 1.4214138
      %v1614 = vmul.f32 %v1612, %v1590
      %v1615 = vmul.f32 %v1613, %v1605
      %v1616 = vadd.f32 %v1614, -0.28449672
      %v1617 = vadd.f32 %v1615, -0.28449672
      %v1618 = vmul.f32 %v1616, %v1590
      %v1619 = vmul.f32 %v1617, %v1605
      %v1620 = vadd.f32 %v1618, 0.2548296
      %v1621 = vadd.f32 %v1619, 0.2548296
      %v1622 = vmul.f32 %v1620, %v1590
      %v1623 = vmul.f32 %v1621, %v1605
      %v1624 = vsub.f32 0.0, %v1570
      %v1625 = vsub.f32 0.0, %v1571
      %v1626 = vmul.f32 %v1624, %v1570
      %v1627 = vmul.f32 %v1625, %v1571
      %v1628 = vmul.f32 %v1626, 1.442695
      %v1629 = vpow.pop %v1628
      %v1630 = vmul.f32 %v1627, 1.442695
      %v1631 = vpow.pop %v1630
      %v1632 = vmul.f32 %v1622, %v1629
      %v1633 = vmul.f32 %v1623, %v1631
      %v1634 = vsub.f32 1.0, %v1632
      %v1635 = vsub.f32 1.0, %v1633
      %v1636 = vmul.f32 %v1568, %v1634
      %v1637 = vmul.f32 %v1569, %v1635
      %v1638 = vadd.f32 %v1636, 1.0
      %v1639 = vadd.f32 %v1637, 1.0
      %v1640 = vmul.f32 %v1562, %v1638
      %v1641 = vmul.f32 %v1563, %v1639
      %v1642 = vld [vmem:[%s3 + $0xb0] sm:$0xff]
      %v1643 = vld [vmem:[%s3 + $0xb8] sm:$0xff]
      %v1644 = vld [vmem:[%s3 + $0xc0] sm:$0x1]
      %v1645 = vperm.slane %v1644, 0
      %v1647 = vsel %vm999, %v1640, 0
      %v1650 = vsel %vm999, %v1641, 0
      %1652 = vmatpush.msra.mxu0 0.0
      %1653 = vmatpush.msra.mxu0 0.0
      %1654 = vmatpush.msra.mxu0 0.0
      %1655 = vmatpush.msra.mxu0 0.0
      %1656 = vmatpush.msra.mxu0 0.0
      %1657 = vmatpush.msra.mxu0 0.0
      %1658 = vmatpush.msra.mxu0 0.0
      %1659 = vmatpush.msra.mxu0 0.0
      %1660 = vmatpush.msra.mxu0 0.0
      %1661 = vmatpush.msra.mxu0 0.0
      %1662 = vmatpush.msra.mxu0 0.0
      %1663 = vmatpush.msra.mxu0 0.0
      %1664 = vmatpush.msra.mxu0 0.0
      %1665 = vmatpush.msra.mxu0 0.0
      %1666 = vmatpush.msra.mxu0 %v1643
      %1667 = vmatpush.msra.mxu0 %v1642
      %1668 = vmatmul.f32.gmra.mxu0 %v1647
      %v1669 = vpop.f32.mrf.mxu0
      %v1670 = vadd.f32 %v1645, %v1669
      %1671 = vmatmul.f32.gmra.mxu0 %v1650
      %v1672 = vpop.f32.mrf.mxu0
      %v1673 = vadd.f32 %v1645, %v1672
      %1674 = vdwg.mxu0
      %v1675 = vmul.f32 %v1670, %v391
      %v1676 = vmul.f32 %v1673, %v393
      %v1677 = vadd.f32 %v1675, %v396
      %v1678 = vadd.f32 %v1676, %v397
      %v1679 = vld [vmem:[%s3 + $0xc8] sm:$0xff]
      %v1680 = vld [vmem:[%s3 + $0xd0] sm:$0xff]
      %v1681 = vld [vmem:[%s3 + $0xd8] sm:$0xff]
      %v1682 = vld [vmem:[%s3 + $0xe0] sm:$0xff]
      %v1683 = vld [vmem:[%s3 + $0xe8] sm:$0x1]
      %v1684 = vperm.slane %v1683, 0
      %v1686 = vsel %vm263, %v1677, 0
      %v1689 = vsel %vm263, %v1678, 0
      %1691 = vmatpush.msra.mxu0 0.0
      %1692 = vmatpush.msra.mxu0 0.0
      %1693 = vmatpush.msra.mxu0 0.0
      %1694 = vmatpush.msra.mxu0 0.0
      %1695 = vmatpush.msra.mxu0 0.0
      %1696 = vmatpush.msra.mxu0 0.0
      %1697 = vmatpush.msra.mxu0 0.0
      %1698 = vmatpush.msra.mxu0 0.0
      %1699 = vmatpush.msra.mxu0 0.0
      %1700 = vmatpush.msra.mxu0 0.0
      %1701 = vmatpush.msra.mxu0 0.0
      %1702 = vmatpush.msra.mxu0 0.0
      %1703 = vmatpush.msra.mxu0 %v1682
      %1704 = vmatpush.msra.mxu0 %v1681
      %1705 = vmatpush.msra.mxu0 %v1680
      %1706 = vmatpush.msra.mxu0 %v1679
      %1707 = vmatmul.f32.gmra.mxu0 %v1686
      %v1708 = vpop.f32.mrf.mxu0
      %v1709 = vadd.f32 %v1684, %v1708
      %1710 = vmatmul.f32.gmra.mxu0 %v1689
      %v1711 = vpop.f32.mrf.mxu0
      %v1712 = vadd.f32 %v1684, %v1711
      %1713 = vdwg.mxu0
      %vm1714 = vcmask 392192
      %1715 = vst.msk [vmem:[#allocation2] sm:$0xff] %vm1714, %v1709
      %1716 = vst.msk [vmem:[#allocation2 + $0x8] sm:$0xff] %vm1714, %v1712
      %v1717 = vld [vmem:[#allocation2] ss:$8 sm:$0x3]
      %s1718 = scalar_lea.vmem [#allocation2], 1
      %v1719 = vld [vmem:[%s1718] ss:$8 sm:$0x3]
      %s1720 = scalar_lea.vmem [#allocation2], 2
      %v1721 = vld [vmem:[%s1720] ss:$8 sm:$0x3]
      %s1722 = scalar_lea.vmem [#allocation2], 3
      %v1723 = vld [vmem:[%s1722] ss:$8 sm:$0x3]
      %s1724 = scalar_lea.vmem [#allocation2], 4
      %v1725 = vld [vmem:[%s1724] ss:$8 sm:$0x3]
      %s1726 = scalar_lea.vmem [#allocation2], 5
      %v1727 = vld [vmem:[%s1726] ss:$8 sm:$0x3]
      %s1728 = scalar_lea.vmem [#allocation2], 6
      %v1729 = vld [vmem:[%s1728] ss:$8 sm:$0x3]
      %s1730 = scalar_lea.vmem [#allocation2], 7
      %v1731 = vld [vmem:[%s1730] ss:$8 sm:$0x3]
      %v1732 = vld [vmem:[%s228] sm:$0xff]
      %v1733 = vld [vmem:[%s228 + $0x8] sm:$0xff]
      %v1734 = vld [vmem:[%s228 + $0x10] sm:$0xff]
      %v1735 = vld [vmem:[%s228 + $0x18] sm:$0xff]
      %1744 = vrot.lane.b32.xlu0 %v1717, 124
      %v1745 = vpop.permute.xlu0 %1744
      %1746 = vrot.lane.b32.xlu0 %v1719, 124
      %v1747 = vpop.permute.xlu0 %1746
      %1748 = vrot.lane.b32.xlu0 %v1721, 124
      %v1749 = vpop.permute.xlu0 %1748
      %1750 = vrot.lane.b32.xlu0 %v1723, 124
      %v1751 = vpop.permute.xlu0 %1750
      %1752 = vrot.lane.b32.xlu0 %v1725, 124
      %v1753 = vpop.permute.xlu0 %1752
      %1754 = vrot.lane.b32.xlu0 %v1727, 124
      %v1755 = vpop.permute.xlu0 %1754
      %1756 = vrot.lane.b32.xlu0 %v1729, 124
      %v1757 = vpop.permute.xlu0 %1756
      %1758 = vrot.lane.b32.xlu0 %v1731, 124
      %v1759 = vpop.permute.xlu0 %1758
      %1768 = vrot.lane.b32.xlu0 %v1717, 120
      %v1769 = vpop.permute.xlu0 %1768
      %1770 = vrot.lane.b32.xlu0 %v1719, 120
      %v1771 = vpop.permute.xlu0 %1770
      %1772 = vrot.lane.b32.xlu0 %v1721, 120
      %v1773 = vpop.permute.xlu0 %1772
      %1774 = vrot.lane.b32.xlu0 %v1723, 120
      %v1775 = vpop.permute.xlu0 %1774
      %1776 = vrot.lane.b32.xlu0 %v1725, 120
      %v1777 = vpop.permute.xlu0 %1776
      %1778 = vrot.lane.b32.xlu0 %v1727, 120
      %v1779 = vpop.permute.xlu0 %1778
      %1780 = vrot.lane.b32.xlu0 %v1729, 120
      %v1781 = vpop.permute.xlu0 %1780
      %1782 = vrot.lane.b32.xlu0 %v1731, 120
      %v1783 = vpop.permute.xlu0 %1782
      %1792 = vrot.lane.b32.xlu0 %v1717, 116
      %v1793 = vpop.permute.xlu0 %1792
      %1794 = vrot.lane.b32.xlu0 %v1719, 116
      %v1795 = vpop.permute.xlu0 %1794
      %1796 = vrot.lane.b32.xlu0 %v1721, 116
      %v1797 = vpop.permute.xlu0 %1796
      %1798 = vrot.lane.b32.xlu0 %v1723, 116
      %v1799 = vpop.permute.xlu0 %1798
      %1800 = vrot.lane.b32.xlu0 %v1725, 116
      %v1801 = vpop.permute.xlu0 %1800
      %1802 = vrot.lane.b32.xlu0 %v1727, 116
      %v1803 = vpop.permute.xlu0 %1802
      %1804 = vrot.lane.b32.xlu0 %v1729, 116
      %v1805 = vpop.permute.xlu0 %1804
      %1806 = vrot.lane.b32.xlu0 %v1731, 116
      %v1807 = vpop.permute.xlu0 %1806
      %v1816 = vmul.f32 %v1717, 0.5
      %v1817 = vmul.f32 %v1719, 0.5
      %v1818 = vmul.f32 %v1721, 0.5
      %v1819 = vmul.f32 %v1723, 0.5
      %v1820 = vmul.f32 %v1725, 0.5
      %v1821 = vmul.f32 %v1727, 0.5
      %v1822 = vmul.f32 %v1729, 0.5
      %v1823 = vmul.f32 %v1731, 0.5
      %v1824 = vmul.f32 %v1745, 0.5
      %v1825 = vmul.f32 %v1747, 0.5
      %v1826 = vmul.f32 %v1749, 0.5
      %v1827 = vmul.f32 %v1751, 0.5
      %v1828 = vmul.f32 %v1753, 0.5
      %v1829 = vmul.f32 %v1755, 0.5
      %v1830 = vmul.f32 %v1757, 0.5
      %v1831 = vmul.f32 %v1759, 0.5
      %v1832 = vmul.f32 %v1769, 0.5
      %v1833 = vmul.f32 %v1771, 0.5
      %v1834 = vmul.f32 %v1773, 0.5
      %v1835 = vmul.f32 %v1775, 0.5
      %v1836 = vmul.f32 %v1777, 0.5
      %v1837 = vmul.f32 %v1779, 0.5
      %v1838 = vmul.f32 %v1781, 0.5
      %v1839 = vmul.f32 %v1783, 0.5
      %v1840 = vmul.f32 %v1793, 0.5
      %v1841 = vmul.f32 %v1795, 0.5
      %v1842 = vmul.f32 %v1797, 0.5
      %v1843 = vmul.f32 %v1799, 0.5
      %v1844 = vmul.f32 %v1801, 0.5
      %v1845 = vmul.f32 %v1803, 0.5
      %v1846 = vmul.f32 %v1805, 0.5
      %v1847 = vmul.f32 %v1807, 0.5
      %v1852 = vrot.slane %v1732, 1
      %v1853 = vrot.slane %v1732, 2
      %v1854 = vrot.slane %v1732, 3
      %v1855 = vrot.slane %v1732, 4
      %v1856 = vrot.slane %v1732, 5
      %v1857 = vrot.slane %v1732, 6
      %v1858 = vrot.slane %v1732, 7
      %v1859 = vrot.slane %v1733, 1
      %v1860 = vrot.slane %v1733, 2
      %v1861 = vrot.slane %v1733, 3
      %v1862 = vrot.slane %v1733, 4
      %v1863 = vrot.slane %v1733, 5
      %v1864 = vrot.slane %v1733, 6
      %v1865 = vrot.slane %v1733, 7
      %v1866 = vrot.slane %v1734, 1
      %v1867 = vrot.slane %v1734, 2
      %v1868 = vrot.slane %v1734, 3
      %v1869 = vrot.slane %v1734, 4
      %v1870 = vrot.slane %v1734, 5
      %v1871 = vrot.slane %v1734, 6
      %v1872 = vrot.slane %v1734, 7
      %v1873 = vrot.slane %v1735, 1
      %v1874 = vrot.slane %v1735, 2
      %v1875 = vrot.slane %v1735, 3
      %v1876 = vrot.slane %v1735, 4
      %v1877 = vrot.slane %v1735, 5
      %v1878 = vrot.slane %v1735, 6
      %v1879 = vrot.slane %v1735, 7
      %v1908 = vsub.f32 %v1732, 1.0
      %v1909 = vsub.f32 %v1852, 1.0
      %v1910 = vsub.f32 %v1853, 1.0
      %v1911 = vsub.f32 %v1854, 1.0
      %v1912 = vsub.f32 %v1855, 1.0
      %v1913 = vsub.f32 %v1856, 1.0
      %v1914 = vsub.f32 %v1857, 1.0
      %v1915 = vsub.f32 %v1858, 1.0
      %v1916 = vsub.f32 %v1733, 1.0
      %v1917 = vsub.f32 %v1859, 1.0
      %v1918 = vsub.f32 %v1860, 1.0
      %v1919 = vsub.f32 %v1861, 1.0
      %v1920 = vsub.f32 %v1862, 1.0
      %v1921 = vsub.f32 %v1863, 1.0
      %v1922 = vsub.f32 %v1864, 1.0
      %v1923 = vsub.f32 %v1865, 1.0
      %v1924 = vsub.f32 %v1734, 1.0
      %v1925 = vsub.f32 %v1866, 1.0
      %v1926 = vsub.f32 %v1867, 1.0
      %v1927 = vsub.f32 %v1868, 1.0
      %v1928 = vsub.f32 %v1869, 1.0
      %v1929 = vsub.f32 %v1870, 1.0
      %v1930 = vsub.f32 %v1871, 1.0
      %v1931 = vsub.f32 %v1872, 1.0
      %v1932 = vsub.f32 %v1735, 1.0
      %v1933 = vsub.f32 %v1873, 1.0
      %v1934 = vsub.f32 %v1874, 1.0
      %v1935 = vsub.f32 %v1875, 1.0
      %v1936 = vsub.f32 %v1876, 1.0
      %v1937 = vsub.f32 %v1877, 1.0
      %v1938 = vsub.f32 %v1878, 1.0
      %v1939 = vsub.f32 %v1879, 1.0
      %v1940 = vmul.f32 %v1908, 1e+09
      %v1941 = vmul.f32 %v1909, 1e+09
      %v1942 = vmul.f32 %v1910, 1e+09
      %v1943 = vmul.f32 %v1911, 1e+09
      %v1944 = vmul.f32 %v1912, 1e+09
      %v1945 = vmul.f32 %v1913, 1e+09
      %v1946 = vmul.f32 %v1914, 1e+09
      %v1947 = vmul.f32 %v1915, 1e+09
      %v1948 = vmul.f32 %v1916, 1e+09
      %v1949 = vmul.f32 %v1917, 1e+09
      %v1950 = vmul.f32 %v1918, 1e+09
      %v1951 = vmul.f32 %v1919, 1e+09
      %v1952 = vmul.f32 %v1920, 1e+09
      %v1953 = vmul.f32 %v1921, 1e+09
      %v1954 = vmul.f32 %v1922, 1e+09
      %v1955 = vmul.f32 %v1923, 1e+09
      %v1956 = vmul.f32 %v1924, 1e+09
      %v1957 = vmul.f32 %v1925, 1e+09
      %v1958 = vmul.f32 %v1926, 1e+09
      %v1959 = vmul.f32 %v1927, 1e+09
      %v1960 = vmul.f32 %v1928, 1e+09
      %v1961 = vmul.f32 %v1929, 1e+09
      %v1962 = vmul.f32 %v1930, 1e+09
      %v1963 = vmul.f32 %v1931, 1e+09
      %v1964 = vmul.f32 %v1932, 1e+09
      %v1965 = vmul.f32 %v1933, 1e+09
      %v1966 = vmul.f32 %v1934, 1e+09
      %v1967 = vmul.f32 %v1935, 1e+09
      %v1968 = vmul.f32 %v1936, 1e+09
      %v1969 = vmul.f32 %v1937, 1e+09
      %v1970 = vmul.f32 %v1938, 1e+09
      %v1971 = vmul.f32 %v1939, 1e+09
      %v2004 = vperm.slane %v1940, 0
      %v2005 = vperm.slane %v1941, 0
      %v2006 = vperm.slane %v1942, 0
      %v2007 = vperm.slane %v1943, 0
      %v2008 = vperm.slane %v1944, 0
      %v2009 = vperm.slane %v1945, 0
      %v2010 = vperm.slane %v1946, 0
      %v2011 = vperm.slane %v1947, 0
      %v2012 = vperm.slane %v1948, 0
      %v2013 = vperm.slane %v1949, 0
      %v2014 = vperm.slane %v1950, 0
      %v2015 = vperm.slane %v1951, 0
      %v2016 = vperm.slane %v1952, 0
      %v2017 = vperm.slane %v1953, 0
      %v2018 = vperm.slane %v1954, 0
      %v2019 = vperm.slane %v1955, 0
      %v2020 = vperm.slane %v1956, 0
      %v2021 = vperm.slane %v1957, 0
      %v2022 = vperm.slane %v1958, 0
      %v2023 = vperm.slane %v1959, 0
      %v2024 = vperm.slane %v1960, 0
      %v2025 = vperm.slane %v1961, 0
      %v2026 = vperm.slane %v1962, 0
      %v2027 = vperm.slane %v1963, 0
      %v2028 = vperm.slane %v1964, 0
      %v2029 = vperm.slane %v1965, 0
      %v2030 = vperm.slane %v1966, 0
      %v2031 = vperm.slane %v1967, 0
      %v2032 = vperm.slane %v1968, 0
      %v2033 = vperm.slane %v1969, 0
      %v2034 = vperm.slane %v1970, 0
      %v2035 = vperm.slane %v1971, 0
      %2068 = vrot.lane.b32.xlu0 %v1717, 112
      %v2069 = vpop.permute.xlu0 %2068
      %v2071 = vsel %vm504, %v1816, 0
      %v2073 = vsel %vm504, %v2069, 0
      %2075 = vmatpush.xpose.msra.mxu0 0.0
      %2076 = vmatpush.xpose.msra.mxu0 0.0
      %2077 = vmatpush.xpose.msra.mxu0 0.0
      %2078 = vmatpush.xpose.msra.mxu0 0.0
      %2079 = vmatpush.xpose.msra.mxu0 0.0
      %2080 = vmatpush.xpose.msra.mxu0 0.0
      %2081 = vmatpush.xpose.msra.mxu0 0.0
      %2082 = vmatpush.xpose.msra.mxu0 0.0
      %2083 = vmatpush.xpose.msra.mxu0 0.0
      %2084 = vmatpush.xpose.msra.mxu0 0.0
      %2085 = vmatpush.xpose.msra.mxu0 0.0
      %2086 = vmatpush.xpose.msra.mxu0 0.0
      %2087 = vmatpush.xpose.msra.mxu0 0.0
      %2088 = vmatpush.xpose.msra.mxu0 0.0
      %2089 = vmatpush.xpose.msra.mxu0 0.0
      %2090 = vmatpush.xpose.msra.mxu0 %v2073
      %2091 = vmatmul.f32.gmra.mxu0 %v2071
      %v2092 = vpop.f32.mrf.mxu0
      %v2093 = vadd.f32 %v2004, %v2092
      %2094 = vdwg.mxu0
      %2095 = vrot.lane.b32.xlu0 %v1719, 112
      %v2096 = vpop.permute.xlu0 %2095
      %v2098 = vsel %vm504, %v1817, 0
      %v2100 = vsel %vm504, %v2096, 0
      %2102 = vmatpush.xpose.msra.mxu0 0.0
      %2103 = vmatpush.xpose.msra.mxu0 0.0
      %2104 = vmatpush.xpose.msra.mxu0 0.0
      %2105 = vmatpush.xpose.msra.mxu0 0.0
      %2106 = vmatpush.xpose.msra.mxu0 0.0
      %2107 = vmatpush.xpose.msra.mxu0 0.0
      %2108 = vmatpush.xpose.msra.mxu0 0.0
      %2109 = vmatpush.xpose.msra.mxu0 0.0
      %2110 = vmatpush.xpose.msra.mxu0 0.0
      %2111 = vmatpush.xpose.msra.mxu0 0.0
      %2112 = vmatpush.xpose.msra.mxu0 0.0
      %2113 = vmatpush.xpose.msra.mxu0 0.0
      %2114 = vmatpush.xpose.msra.mxu0 0.0
      %2115 = vmatpush.xpose.msra.mxu0 0.0
      %2116 = vmatpush.xpose.msra.mxu0 0.0
      %2117 = vmatpush.xpose.msra.mxu0 %v2100
      %2118 = vmatmul.f32.gmra.mxu0 %v2098
      %v2119 = vpop.f32.mrf.mxu0
      %v2120 = vadd.f32 %v2005, %v2119
      %2121 = vdwg.mxu0
      %2122 = vrot.lane.b32.xlu0 %v1721, 112
      %v2123 = vpop.permute.xlu0 %2122
      %v2125 = vsel %vm504, %v1818, 0
      %v2127 = vsel %vm504, %v2123, 0
      %2129 = vmatpush.xpose.msra.mxu0 0.0
      %2130 = vmatpush.xpose.msra.mxu0 0.0
      %2131 = vmatpush.xpose.msra.mxu0 0.0
      %2132 = vmatpush.xpose.msra.mxu0 0.0
      %2133 = vmatpush.xpose.msra.mxu0 0.0
      %2134 = vmatpush.xpose.msra.mxu0 0.0
      %2135 = vmatpush.xpose.msra.mxu0 0.0
      %2136 = vmatpush.xpose.msra.mxu0 0.0
      %2137 = vmatpush.xpose.msra.mxu0 0.0
      %2138 = vmatpush.xpose.msra.mxu0 0.0
      %2139 = vmatpush.xpose.msra.mxu0 0.0
      %2140 = vmatpush.xpose.msra.mxu0 0.0
      %2141 = vmatpush.xpose.msra.mxu0 0.0
      %2142 = vmatpush.xpose.msra.mxu0 0.0
      %2143 = vmatpush.xpose.msra.mxu0 0.0
      %2144 = vmatpush.xpose.msra.mxu0 %v2127
      %2145 = vmatmul.f32.gmra.mxu0 %v2125
      %v2146 = vpop.f32.mrf.mxu0
      %v2147 = vadd.f32 %v2006, %v2146
      %2148 = vdwg.mxu0
      %2149 = vrot.lane.b32.xlu0 %v1723, 112
      %v2150 = vpop.permute.xlu0 %2149
      %v2152 = vsel %vm504, %v1819, 0
      %v2154 = vsel %vm504, %v2150, 0
      %2156 = vmatpush.xpose.msra.mxu0 0.0
      %2157 = vmatpush.xpose.msra.mxu0 0.0
      %2158 = vmatpush.xpose.msra.mxu0 0.0
      %2159 = vmatpush.xpose.msra.mxu0 0.0
      %2160 = vmatpush.xpose.msra.mxu0 0.0
      %2161 = vmatpush.xpose.msra.mxu0 0.0
      %2162 = vmatpush.xpose.msra.mxu0 0.0
      %2163 = vmatpush.xpose.msra.mxu0 0.0
      %2164 = vmatpush.xpose.msra.mxu0 0.0
      %2165 = vmatpush.xpose.msra.mxu0 0.0
      %2166 = vmatpush.xpose.msra.mxu0 0.0
      %2167 = vmatpush.xpose.msra.mxu0 0.0
      %2168 = vmatpush.xpose.msra.mxu0 0.0
      %2169 = vmatpush.xpose.msra.mxu0 0.0
      %2170 = vmatpush.xpose.msra.mxu0 0.0
      %2171 = vmatpush.xpose.msra.mxu0 %v2154
      %2172 = vmatmul.f32.gmra.mxu0 %v2152
      %v2173 = vpop.f32.mrf.mxu0
      %v2174 = vadd.f32 %v2007, %v2173
      %2175 = vdwg.mxu0
      %2176 = vrot.lane.b32.xlu0 %v1725, 112
      %v2177 = vpop.permute.xlu0 %2176
      %v2179 = vsel %vm504, %v1820, 0
      %v2181 = vsel %vm504, %v2177, 0
      %2183 = vmatpush.xpose.msra.mxu0 0.0
      %2184 = vmatpush.xpose.msra.mxu0 0.0
      %2185 = vmatpush.xpose.msra.mxu0 0.0
      %2186 = vmatpush.xpose.msra.mxu0 0.0
      %2187 = vmatpush.xpose.msra.mxu0 0.0
      %2188 = vmatpush.xpose.msra.mxu0 0.0
      %2189 = vmatpush.xpose.msra.mxu0 0.0
      %2190 = vmatpush.xpose.msra.mxu0 0.0
      %2191 = vmatpush.xpose.msra.mxu0 0.0
      %2192 = vmatpush.xpose.msra.mxu0 0.0
      %2193 = vmatpush.xpose.msra.mxu0 0.0
      %2194 = vmatpush.xpose.msra.mxu0 0.0
      %2195 = vmatpush.xpose.msra.mxu0 0.0
      %2196 = vmatpush.xpose.msra.mxu0 0.0
      %2197 = vmatpush.xpose.msra.mxu0 0.0
      %2198 = vmatpush.xpose.msra.mxu0 %v2181
      %2199 = vmatmul.f32.gmra.mxu0 %v2179
      %v2200 = vpop.f32.mrf.mxu0
      %v2201 = vadd.f32 %v2008, %v2200
      %2202 = vdwg.mxu0
      %2203 = vrot.lane.b32.xlu0 %v1727, 112
      %v2204 = vpop.permute.xlu0 %2203
      %v2206 = vsel %vm504, %v1821, 0
      %v2208 = vsel %vm504, %v2204, 0
      %2210 = vmatpush.xpose.msra.mxu0 0.0
      %2211 = vmatpush.xpose.msra.mxu0 0.0
      %2212 = vmatpush.xpose.msra.mxu0 0.0
      %2213 = vmatpush.xpose.msra.mxu0 0.0
      %2214 = vmatpush.xpose.msra.mxu0 0.0
      %2215 = vmatpush.xpose.msra.mxu0 0.0
      %2216 = vmatpush.xpose.msra.mxu0 0.0
      %2217 = vmatpush.xpose.msra.mxu0 0.0
      %2218 = vmatpush.xpose.msra.mxu0 0.0
      %2219 = vmatpush.xpose.msra.mxu0 0.0
      %2220 = vmatpush.xpose.msra.mxu0 0.0
      %2221 = vmatpush.xpose.msra.mxu0 0.0
      %2222 = vmatpush.xpose.msra.mxu0 0.0
      %2223 = vmatpush.xpose.msra.mxu0 0.0
      %2224 = vmatpush.xpose.msra.mxu0 0.0
      %2225 = vmatpush.xpose.msra.mxu0 %v2208
      %2226 = vmatmul.f32.gmra.mxu0 %v2206
      %v2227 = vpop.f32.mrf.mxu0
      %v2228 = vadd.f32 %v2009, %v2227
      %2229 = vdwg.mxu0
      %2230 = vrot.lane.b32.xlu0 %v1729, 112
      %v2231 = vpop.permute.xlu0 %2230
      %v2233 = vsel %vm504, %v1822, 0
      %v2235 = vsel %vm504, %v2231, 0
      %2237 = vmatpush.xpose.msra.mxu0 0.0
      %2238 = vmatpush.xpose.msra.mxu0 0.0
      %2239 = vmatpush.xpose.msra.mxu0 0.0
      %2240 = vmatpush.xpose.msra.mxu0 0.0
      %2241 = vmatpush.xpose.msra.mxu0 0.0
      %2242 = vmatpush.xpose.msra.mxu0 0.0
      %2243 = vmatpush.xpose.msra.mxu0 0.0
      %2244 = vmatpush.xpose.msra.mxu0 0.0
      %2245 = vmatpush.xpose.msra.mxu0 0.0
      %2246 = vmatpush.xpose.msra.mxu0 0.0
      %2247 = vmatpush.xpose.msra.mxu0 0.0
      %2248 = vmatpush.xpose.msra.mxu0 0.0
      %2249 = vmatpush.xpose.msra.mxu0 0.0
      %2250 = vmatpush.xpose.msra.mxu0 0.0
      %2251 = vmatpush.xpose.msra.mxu0 0.0
      %2252 = vmatpush.xpose.msra.mxu0 %v2235
      %2253 = vmatmul.f32.gmra.mxu0 %v2233
      %v2254 = vpop.f32.mrf.mxu0
      %v2255 = vadd.f32 %v2010, %v2254
      %2256 = vdwg.mxu0
      %2257 = vrot.lane.b32.xlu0 %v1731, 112
      %v2258 = vpop.permute.xlu0 %2257
      %v2260 = vsel %vm504, %v1823, 0
      %v2262 = vsel %vm504, %v2258, 0
      %2264 = vmatpush.xpose.msra.mxu0 0.0
      %2265 = vmatpush.xpose.msra.mxu0 0.0
      %2266 = vmatpush.xpose.msra.mxu0 0.0
      %2267 = vmatpush.xpose.msra.mxu0 0.0
      %2268 = vmatpush.xpose.msra.mxu0 0.0
      %2269 = vmatpush.xpose.msra.mxu0 0.0
      %2270 = vmatpush.xpose.msra.mxu0 0.0
      %2271 = vmatpush.xpose.msra.mxu0 0.0
      %2272 = vmatpush.xpose.msra.mxu0 0.0
      %2273 = vmatpush.xpose.msra.mxu0 0.0
      %2274 = vmatpush.xpose.msra.mxu0 0.0
      %2275 = vmatpush.xpose.msra.mxu0 0.0
      %2276 = vmatpush.xpose.msra.mxu0 0.0
      %2277 = vmatpush.xpose.msra.mxu0 0.0
      %2278 = vmatpush.xpose.msra.mxu0 0.0
      %2279 = vmatpush.xpose.msra.mxu0 %v2262
      %2280 = vmatmul.f32.gmra.mxu0 %v2260
      %v2281 = vpop.f32.mrf.mxu0
      %v2282 = vadd.f32 %v2011, %v2281
      %2283 = vdwg.mxu0
      %2284 = vrot.lane.b32.xlu0 %v1745, 112
      %v2285 = vpop.permute.xlu0 %2284
      %v2287 = vsel %vm504, %v1824, 0
      %v2289 = vsel %vm504, %v2285, 0
      %2291 = vmatpush.xpose.msra.mxu0 0.0
      %2292 = vmatpush.xpose.msra.mxu0 0.0
      %2293 = vmatpush.xpose.msra.mxu0 0.0
      %2294 = vmatpush.xpose.msra.mxu0 0.0
      %2295 = vmatpush.xpose.msra.mxu0 0.0
      %2296 = vmatpush.xpose.msra.mxu0 0.0
      %2297 = vmatpush.xpose.msra.mxu0 0.0
      %2298 = vmatpush.xpose.msra.mxu0 0.0
      %2299 = vmatpush.xpose.msra.mxu0 0.0
      %2300 = vmatpush.xpose.msra.mxu0 0.0
      %2301 = vmatpush.xpose.msra.mxu0 0.0
      %2302 = vmatpush.xpose.msra.mxu0 0.0
      %2303 = vmatpush.xpose.msra.mxu0 0.0
      %2304 = vmatpush.xpose.msra.mxu0 0.0
      %2305 = vmatpush.xpose.msra.mxu0 0.0
      %2306 = vmatpush.xpose.msra.mxu0 %v2289
      %2307 = vmatmul.f32.gmra.mxu0 %v2287
      %v2308 = vpop.f32.mrf.mxu0
      %v2309 = vadd.f32 %v2012, %v2308
      %2310 = vdwg.mxu0
      %2311 = vrot.lane.b32.xlu0 %v1747, 112
      %v2312 = vpop.permute.xlu0 %2311
      %v2314 = vsel %vm504, %v1825, 0
      %v2316 = vsel %vm504, %v2312, 0
      %2318 = vmatpush.xpose.msra.mxu0 0.0
      %2319 = vmatpush.xpose.msra.mxu0 0.0
      %2320 = vmatpush.xpose.msra.mxu0 0.0
      %2321 = vmatpush.xpose.msra.mxu0 0.0
      %2322 = vmatpush.xpose.msra.mxu0 0.0
      %2323 = vmatpush.xpose.msra.mxu0 0.0
      %2324 = vmatpush.xpose.msra.mxu0 0.0
      %2325 = vmatpush.xpose.msra.mxu0 0.0
      %2326 = vmatpush.xpose.msra.mxu0 0.0
      %2327 = vmatpush.xpose.msra.mxu0 0.0
      %2328 = vmatpush.xpose.msra.mxu0 0.0
      %2329 = vmatpush.xpose.msra.mxu0 0.0
      %2330 = vmatpush.xpose.msra.mxu0 0.0
      %2331 = vmatpush.xpose.msra.mxu0 0.0
      %2332 = vmatpush.xpose.msra.mxu0 0.0
      %2333 = vmatpush.xpose.msra.mxu0 %v2316
      %2334 = vmatmul.f32.gmra.mxu0 %v2314
      %v2335 = vpop.f32.mrf.mxu0
      %v2336 = vadd.f32 %v2013, %v2335
      %2337 = vdwg.mxu0
      %2338 = vrot.lane.b32.xlu0 %v1749, 112
      %v2339 = vpop.permute.xlu0 %2338
      %v2341 = vsel %vm504, %v1826, 0
      %v2343 = vsel %vm504, %v2339, 0
      %2345 = vmatpush.xpose.msra.mxu0 0.0
      %2346 = vmatpush.xpose.msra.mxu0 0.0
      %2347 = vmatpush.xpose.msra.mxu0 0.0
      %2348 = vmatpush.xpose.msra.mxu0 0.0
      %2349 = vmatpush.xpose.msra.mxu0 0.0
      %2350 = vmatpush.xpose.msra.mxu0 0.0
      %2351 = vmatpush.xpose.msra.mxu0 0.0
      %2352 = vmatpush.xpose.msra.mxu0 0.0
      %2353 = vmatpush.xpose.msra.mxu0 0.0
      %2354 = vmatpush.xpose.msra.mxu0 0.0
      %2355 = vmatpush.xpose.msra.mxu0 0.0
      %2356 = vmatpush.xpose.msra.mxu0 0.0
      %2357 = vmatpush.xpose.msra.mxu0 0.0
      %2358 = vmatpush.xpose.msra.mxu0 0.0
      %2359 = vmatpush.xpose.msra.mxu0 0.0
      %2360 = vmatpush.xpose.msra.mxu0 %v2343
      %2361 = vmatmul.f32.gmra.mxu0 %v2341
      %v2362 = vpop.f32.mrf.mxu0
      %v2363 = vadd.f32 %v2014, %v2362
      %2364 = vdwg.mxu0
      %2365 = vrot.lane.b32.xlu0 %v1751, 112
      %v2366 = vpop.permute.xlu0 %2365
      %v2368 = vsel %vm504, %v1827, 0
      %v2370 = vsel %vm504, %v2366, 0
      %2372 = vmatpush.xpose.msra.mxu0 0.0
      %2373 = vmatpush.xpose.msra.mxu0 0.0
      %2374 = vmatpush.xpose.msra.mxu0 0.0
      %2375 = vmatpush.xpose.msra.mxu0 0.0
      %2376 = vmatpush.xpose.msra.mxu0 0.0
      %2377 = vmatpush.xpose.msra.mxu0 0.0
      %2378 = vmatpush.xpose.msra.mxu0 0.0
      %2379 = vmatpush.xpose.msra.mxu0 0.0
      %2380 = vmatpush.xpose.msra.mxu0 0.0
      %2381 = vmatpush.xpose.msra.mxu0 0.0
      %2382 = vmatpush.xpose.msra.mxu0 0.0
      %2383 = vmatpush.xpose.msra.mxu0 0.0
      %2384 = vmatpush.xpose.msra.mxu0 0.0
      %2385 = vmatpush.xpose.msra.mxu0 0.0
      %2386 = vmatpush.xpose.msra.mxu0 0.0
      %2387 = vmatpush.xpose.msra.mxu0 %v2370
      %2388 = vmatmul.f32.gmra.mxu0 %v2368
      %v2389 = vpop.f32.mrf.mxu0
      %v2390 = vadd.f32 %v2015, %v2389
      %2391 = vdwg.mxu0
      %2392 = vrot.lane.b32.xlu0 %v1753, 112
      %v2393 = vpop.permute.xlu0 %2392
      %v2395 = vsel %vm504, %v1828, 0
      %v2397 = vsel %vm504, %v2393, 0
      %2399 = vmatpush.xpose.msra.mxu0 0.0
      %2400 = vmatpush.xpose.msra.mxu0 0.0
      %2401 = vmatpush.xpose.msra.mxu0 0.0
      %2402 = vmatpush.xpose.msra.mxu0 0.0
      %2403 = vmatpush.xpose.msra.mxu0 0.0
      %2404 = vmatpush.xpose.msra.mxu0 0.0
      %2405 = vmatpush.xpose.msra.mxu0 0.0
      %2406 = vmatpush.xpose.msra.mxu0 0.0
      %2407 = vmatpush.xpose.msra.mxu0 0.0
      %2408 = vmatpush.xpose.msra.mxu0 0.0
      %2409 = vmatpush.xpose.msra.mxu0 0.0
      %2410 = vmatpush.xpose.msra.mxu0 0.0
      %2411 = vmatpush.xpose.msra.mxu0 0.0
      %2412 = vmatpush.xpose.msra.mxu0 0.0
      %2413 = vmatpush.xpose.msra.mxu0 0.0
      %2414 = vmatpush.xpose.msra.mxu0 %v2397
      %2415 = vmatmul.f32.gmra.mxu0 %v2395
      %v2416 = vpop.f32.mrf.mxu0
      %v2417 = vadd.f32 %v2016, %v2416
      %2418 = vdwg.mxu0
      %2419 = vrot.lane.b32.xlu0 %v1755, 112
      %v2420 = vpop.permute.xlu0 %2419
      %v2422 = vsel %vm504, %v1829, 0
      %v2424 = vsel %vm504, %v2420, 0
      %2426 = vmatpush.xpose.msra.mxu0 0.0
      %2427 = vmatpush.xpose.msra.mxu0 0.0
      %2428 = vmatpush.xpose.msra.mxu0 0.0
      %2429 = vmatpush.xpose.msra.mxu0 0.0
      %2430 = vmatpush.xpose.msra.mxu0 0.0
      %2431 = vmatpush.xpose.msra.mxu0 0.0
      %2432 = vmatpush.xpose.msra.mxu0 0.0
      %2433 = vmatpush.xpose.msra.mxu0 0.0
      %2434 = vmatpush.xpose.msra.mxu0 0.0
      %2435 = vmatpush.xpose.msra.mxu0 0.0
      %2436 = vmatpush.xpose.msra.mxu0 0.0
      %2437 = vmatpush.xpose.msra.mxu0 0.0
      %2438 = vmatpush.xpose.msra.mxu0 0.0
      %2439 = vmatpush.xpose.msra.mxu0 0.0
      %2440 = vmatpush.xpose.msra.mxu0 0.0
      %2441 = vmatpush.xpose.msra.mxu0 %v2424
      %2442 = vmatmul.f32.gmra.mxu0 %v2422
      %v2443 = vpop.f32.mrf.mxu0
      %v2444 = vadd.f32 %v2017, %v2443
      %2445 = vdwg.mxu0
      %2446 = vrot.lane.b32.xlu0 %v1757, 112
      %v2447 = vpop.permute.xlu0 %2446
      %v2449 = vsel %vm504, %v1830, 0
      %v2451 = vsel %vm504, %v2447, 0
      %2453 = vmatpush.xpose.msra.mxu0 0.0
      %2454 = vmatpush.xpose.msra.mxu0 0.0
      %2455 = vmatpush.xpose.msra.mxu0 0.0
      %2456 = vmatpush.xpose.msra.mxu0 0.0
      %2457 = vmatpush.xpose.msra.mxu0 0.0
      %2458 = vmatpush.xpose.msra.mxu0 0.0
      %2459 = vmatpush.xpose.msra.mxu0 0.0
      %2460 = vmatpush.xpose.msra.mxu0 0.0
      %2461 = vmatpush.xpose.msra.mxu0 0.0
      %2462 = vmatpush.xpose.msra.mxu0 0.0
      %2463 = vmatpush.xpose.msra.mxu0 0.0
      %2464 = vmatpush.xpose.msra.mxu0 0.0
      %2465 = vmatpush.xpose.msra.mxu0 0.0
      %2466 = vmatpush.xpose.msra.mxu0 0.0
      %2467 = vmatpush.xpose.msra.mxu0 0.0
      %2468 = vmatpush.xpose.msra.mxu0 %v2451
      %2469 = vmatmul.f32.gmra.mxu0 %v2449
      %v2470 = vpop.f32.mrf.mxu0
      %v2471 = vadd.f32 %v2018, %v2470
      %2472 = vdwg.mxu0
      %2473 = vrot.lane.b32.xlu0 %v1759, 112
      %v2474 = vpop.permute.xlu0 %2473
      %v2476 = vsel %vm504, %v1831, 0
      %v2478 = vsel %vm504, %v2474, 0
      %2480 = vmatpush.xpose.msra.mxu0 0.0
      %2481 = vmatpush.xpose.msra.mxu0 0.0
      %2482 = vmatpush.xpose.msra.mxu0 0.0
      %2483 = vmatpush.xpose.msra.mxu0 0.0
      %2484 = vmatpush.xpose.msra.mxu0 0.0
      %2485 = vmatpush.xpose.msra.mxu0 0.0
      %2486 = vmatpush.xpose.msra.mxu0 0.0
      %2487 = vmatpush.xpose.msra.mxu0 0.0
      %2488 = vmatpush.xpose.msra.mxu0 0.0
      %2489 = vmatpush.xpose.msra.mxu0 0.0
      %2490 = vmatpush.xpose.msra.mxu0 0.0
      %2491 = vmatpush.xpose.msra.mxu0 0.0
      %2492 = vmatpush.xpose.msra.mxu0 0.0
      %2493 = vmatpush.xpose.msra.mxu0 0.0
      %2494 = vmatpush.xpose.msra.mxu0 0.0
      %2495 = vmatpush.xpose.msra.mxu0 %v2478
      %2496 = vmatmul.f32.gmra.mxu0 %v2476
      %v2497 = vpop.f32.mrf.mxu0
      %v2498 = vadd.f32 %v2019, %v2497
      %2499 = vdwg.mxu0
      %2500 = vrot.lane.b32.xlu0 %v1769, 112
      %v2501 = vpop.permute.xlu0 %2500
      %v2503 = vsel %vm504, %v1832, 0
      %v2505 = vsel %vm504, %v2501, 0
      %2507 = vmatpush.xpose.msra.mxu0 0.0
      %2508 = vmatpush.xpose.msra.mxu0 0.0
      %2509 = vmatpush.xpose.msra.mxu0 0.0
      %2510 = vmatpush.xpose.msra.mxu0 0.0
      %2511 = vmatpush.xpose.msra.mxu0 0.0
      %2512 = vmatpush.xpose.msra.mxu0 0.0
      %2513 = vmatpush.xpose.msra.mxu0 0.0
      %2514 = vmatpush.xpose.msra.mxu0 0.0
      %2515 = vmatpush.xpose.msra.mxu0 0.0
      %2516 = vmatpush.xpose.msra.mxu0 0.0
      %2517 = vmatpush.xpose.msra.mxu0 0.0
      %2518 = vmatpush.xpose.msra.mxu0 0.0
      %2519 = vmatpush.xpose.msra.mxu0 0.0
      %2520 = vmatpush.xpose.msra.mxu0 0.0
      %2521 = vmatpush.xpose.msra.mxu0 0.0
      %2522 = vmatpush.xpose.msra.mxu0 %v2505
      %2523 = vmatmul.f32.gmra.mxu0 %v2503
      %v2524 = vpop.f32.mrf.mxu0
      %v2525 = vadd.f32 %v2020, %v2524
      %2526 = vdwg.mxu0
      %2527 = vrot.lane.b32.xlu0 %v1771, 112
      %v2528 = vpop.permute.xlu0 %2527
      %v2530 = vsel %vm504, %v1833, 0
      %v2532 = vsel %vm504, %v2528, 0
      %2534 = vmatpush.xpose.msra.mxu0 0.0
      %2535 = vmatpush.xpose.msra.mxu0 0.0
      %2536 = vmatpush.xpose.msra.mxu0 0.0
      %2537 = vmatpush.xpose.msra.mxu0 0.0
      %2538 = vmatpush.xpose.msra.mxu0 0.0
      %2539 = vmatpush.xpose.msra.mxu0 0.0
      %2540 = vmatpush.xpose.msra.mxu0 0.0
      %2541 = vmatpush.xpose.msra.mxu0 0.0
      %2542 = vmatpush.xpose.msra.mxu0 0.0
      %2543 = vmatpush.xpose.msra.mxu0 0.0
      %2544 = vmatpush.xpose.msra.mxu0 0.0
      %2545 = vmatpush.xpose.msra.mxu0 0.0
      %2546 = vmatpush.xpose.msra.mxu0 0.0
      %2547 = vmatpush.xpose.msra.mxu0 0.0
      %2548 = vmatpush.xpose.msra.mxu0 0.0
      %2549 = vmatpush.xpose.msra.mxu0 %v2532
      %2550 = vmatmul.f32.gmra.mxu0 %v2530
      %v2551 = vpop.f32.mrf.mxu0
      %v2552 = vadd.f32 %v2021, %v2551
      %2553 = vdwg.mxu0
      %2554 = vrot.lane.b32.xlu0 %v1773, 112
      %v2555 = vpop.permute.xlu0 %2554
      %v2557 = vsel %vm504, %v1834, 0
      %v2559 = vsel %vm504, %v2555, 0
      %2561 = vmatpush.xpose.msra.mxu0 0.0
      %2562 = vmatpush.xpose.msra.mxu0 0.0
      %2563 = vmatpush.xpose.msra.mxu0 0.0
      %2564 = vmatpush.xpose.msra.mxu0 0.0
      %2565 = vmatpush.xpose.msra.mxu0 0.0
      %2566 = vmatpush.xpose.msra.mxu0 0.0
      %2567 = vmatpush.xpose.msra.mxu0 0.0
      %2568 = vmatpush.xpose.msra.mxu0 0.0
      %2569 = vmatpush.xpose.msra.mxu0 0.0
      %2570 = vmatpush.xpose.msra.mxu0 0.0
      %2571 = vmatpush.xpose.msra.mxu0 0.0
      %2572 = vmatpush.xpose.msra.mxu0 0.0
      %2573 = vmatpush.xpose.msra.mxu0 0.0
      %2574 = vmatpush.xpose.msra.mxu0 0.0
      %2575 = vmatpush.xpose.msra.mxu0 0.0
      %2576 = vmatpush.xpose.msra.mxu0 %v2559
      %2577 = vmatmul.f32.gmra.mxu0 %v2557
      %v2578 = vpop.f32.mrf.mxu0
      %v2579 = vadd.f32 %v2022, %v2578
      %2580 = vdwg.mxu0
      %2581 = vrot.lane.b32.xlu0 %v1775, 112
      %v2582 = vpop.permute.xlu0 %2581
      %v2584 = vsel %vm504, %v1835, 0
      %v2586 = vsel %vm504, %v2582, 0
      %2588 = vmatpush.xpose.msra.mxu0 0.0
      %2589 = vmatpush.xpose.msra.mxu0 0.0
      %2590 = vmatpush.xpose.msra.mxu0 0.0
      %2591 = vmatpush.xpose.msra.mxu0 0.0
      %2592 = vmatpush.xpose.msra.mxu0 0.0
      %2593 = vmatpush.xpose.msra.mxu0 0.0
      %2594 = vmatpush.xpose.msra.mxu0 0.0
      %2595 = vmatpush.xpose.msra.mxu0 0.0
      %2596 = vmatpush.xpose.msra.mxu0 0.0
      %2597 = vmatpush.xpose.msra.mxu0 0.0
      %2598 = vmatpush.xpose.msra.mxu0 0.0
      %2599 = vmatpush.xpose.msra.mxu0 0.0
      %2600 = vmatpush.xpose.msra.mxu0 0.0
      %2601 = vmatpush.xpose.msra.mxu0 0.0
      %2602 = vmatpush.xpose.msra.mxu0 0.0
      %2603 = vmatpush.xpose.msra.mxu0 %v2586
      %2604 = vmatmul.f32.gmra.mxu0 %v2584
      %v2605 = vpop.f32.mrf.mxu0
      %v2606 = vadd.f32 %v2023, %v2605
      %2607 = vdwg.mxu0
      %2608 = vrot.lane.b32.xlu0 %v1777, 112
      %v2609 = vpop.permute.xlu0 %2608
      %v2611 = vsel %vm504, %v1836, 0
      %v2613 = vsel %vm504, %v2609, 0
      %2615 = vmatpush.xpose.msra.mxu0 0.0
      %2616 = vmatpush.xpose.msra.mxu0 0.0
      %2617 = vmatpush.xpose.msra.mxu0 0.0
      %2618 = vmatpush.xpose.msra.mxu0 0.0
      %2619 = vmatpush.xpose.msra.mxu0 0.0
      %2620 = vmatpush.xpose.msra.mxu0 0.0
      %2621 = vmatpush.xpose.msra.mxu0 0.0
      %2622 = vmatpush.xpose.msra.mxu0 0.0
      %2623 = vmatpush.xpose.msra.mxu0 0.0
      %2624 = vmatpush.xpose.msra.mxu0 0.0
      %2625 = vmatpush.xpose.msra.mxu0 0.0
      %2626 = vmatpush.xpose.msra.mxu0 0.0
      %2627 = vmatpush.xpose.msra.mxu0 0.0
      %2628 = vmatpush.xpose.msra.mxu0 0.0
      %2629 = vmatpush.xpose.msra.mxu0 0.0
      %2630 = vmatpush.xpose.msra.mxu0 %v2613
      %2631 = vmatmul.f32.gmra.mxu0 %v2611
      %v2632 = vpop.f32.mrf.mxu0
      %v2633 = vadd.f32 %v2024, %v2632
      %2634 = vdwg.mxu0
      %2635 = vrot.lane.b32.xlu0 %v1779, 112
      %v2636 = vpop.permute.xlu0 %2635
      %v2638 = vsel %vm504, %v1837, 0
      %v2640 = vsel %vm504, %v2636, 0
      %2642 = vmatpush.xpose.msra.mxu0 0.0
      %2643 = vmatpush.xpose.msra.mxu0 0.0
      %2644 = vmatpush.xpose.msra.mxu0 0.0
      %2645 = vmatpush.xpose.msra.mxu0 0.0
      %2646 = vmatpush.xpose.msra.mxu0 0.0
      %2647 = vmatpush.xpose.msra.mxu0 0.0
      %2648 = vmatpush.xpose.msra.mxu0 0.0
      %2649 = vmatpush.xpose.msra.mxu0 0.0
      %2650 = vmatpush.xpose.msra.mxu0 0.0
      %2651 = vmatpush.xpose.msra.mxu0 0.0
      %2652 = vmatpush.xpose.msra.mxu0 0.0
      %2653 = vmatpush.xpose.msra.mxu0 0.0
      %2654 = vmatpush.xpose.msra.mxu0 0.0
      %2655 = vmatpush.xpose.msra.mxu0 0.0
      %2656 = vmatpush.xpose.msra.mxu0 0.0
      %2657 = vmatpush.xpose.msra.mxu0 %v2640
      %2658 = vmatmul.f32.gmra.mxu0 %v2638
      %v2659 = vpop.f32.mrf.mxu0
      %v2660 = vadd.f32 %v2025, %v2659
      %2661 = vdwg.mxu0
      %2662 = vrot.lane.b32.xlu0 %v1781, 112
      %v2663 = vpop.permute.xlu0 %2662
      %v2665 = vsel %vm504, %v1838, 0
      %v2667 = vsel %vm504, %v2663, 0
      %2669 = vmatpush.xpose.msra.mxu0 0.0
      %2670 = vmatpush.xpose.msra.mxu0 0.0
      %2671 = vmatpush.xpose.msra.mxu0 0.0
      %2672 = vmatpush.xpose.msra.mxu0 0.0
      %2673 = vmatpush.xpose.msra.mxu0 0.0
      %2674 = vmatpush.xpose.msra.mxu0 0.0
      %2675 = vmatpush.xpose.msra.mxu0 0.0
      %2676 = vmatpush.xpose.msra.mxu0 0.0
      %2677 = vmatpush.xpose.msra.mxu0 0.0
      %2678 = vmatpush.xpose.msra.mxu0 0.0
      %2679 = vmatpush.xpose.msra.mxu0 0.0
      %2680 = vmatpush.xpose.msra.mxu0 0.0
      %2681 = vmatpush.xpose.msra.mxu0 0.0
      %2682 = vmatpush.xpose.msra.mxu0 0.0
      %2683 = vmatpush.xpose.msra.mxu0 0.0
      %2684 = vmatpush.xpose.msra.mxu0 %v2667
      %2685 = vmatmul.f32.gmra.mxu0 %v2665
      %v2686 = vpop.f32.mrf.mxu0
      %v2687 = vadd.f32 %v2026, %v2686
      %2688 = vdwg.mxu0
      %2689 = vrot.lane.b32.xlu0 %v1783, 112
      %v2690 = vpop.permute.xlu0 %2689
      %v2692 = vsel %vm504, %v1839, 0
      %v2694 = vsel %vm504, %v2690, 0
      %2696 = vmatpush.xpose.msra.mxu0 0.0
      %2697 = vmatpush.xpose.msra.mxu0 0.0
      %2698 = vmatpush.xpose.msra.mxu0 0.0
      %2699 = vmatpush.xpose.msra.mxu0 0.0
      %2700 = vmatpush.xpose.msra.mxu0 0.0
      %2701 = vmatpush.xpose.msra.mxu0 0.0
      %2702 = vmatpush.xpose.msra.mxu0 0.0
      %2703 = vmatpush.xpose.msra.mxu0 0.0
      %2704 = vmatpush.xpose.msra.mxu0 0.0
      %2705 = vmatpush.xpose.msra.mxu0 0.0
      %2706 = vmatpush.xpose.msra.mxu0 0.0
      %2707 = vmatpush.xpose.msra.mxu0 0.0
      %2708 = vmatpush.xpose.msra.mxu0 0.0
      %2709 = vmatpush.xpose.msra.mxu0 0.0
      %2710 = vmatpush.xpose.msra.mxu0 0.0
      %2711 = vmatpush.xpose.msra.mxu0 %v2694
      %2712 = vmatmul.f32.gmra.mxu0 %v2692
      %v2713 = vpop.f32.mrf.mxu0
      %v2714 = vadd.f32 %v2027, %v2713
      %2715 = vdwg.mxu0
      %2716 = vrot.lane.b32.xlu0 %v1793, 112
      %v2717 = vpop.permute.xlu0 %2716
      %v2719 = vsel %vm504, %v1840, 0
      %v2721 = vsel %vm504, %v2717, 0
      %2723 = vmatpush.xpose.msra.mxu0 0.0
      %2724 = vmatpush.xpose.msra.mxu0 0.0
      %2725 = vmatpush.xpose.msra.mxu0 0.0
      %2726 = vmatpush.xpose.msra.mxu0 0.0
      %2727 = vmatpush.xpose.msra.mxu0 0.0
      %2728 = vmatpush.xpose.msra.mxu0 0.0
      %2729 = vmatpush.xpose.msra.mxu0 0.0
      %2730 = vmatpush.xpose.msra.mxu0 0.0
      %2731 = vmatpush.xpose.msra.mxu0 0.0
      %2732 = vmatpush.xpose.msra.mxu0 0.0
      %2733 = vmatpush.xpose.msra.mxu0 0.0
      %2734 = vmatpush.xpose.msra.mxu0 0.0
      %2735 = vmatpush.xpose.msra.mxu0 0.0
      %2736 = vmatpush.xpose.msra.mxu0 0.0
      %2737 = vmatpush.xpose.msra.mxu0 0.0
      %2738 = vmatpush.xpose.msra.mxu0 %v2721
      %2739 = vmatmul.f32.gmra.mxu0 %v2719
      %v2740 = vpop.f32.mrf.mxu0
      %v2741 = vadd.f32 %v2028, %v2740
      %2742 = vdwg.mxu0
      %2743 = vrot.lane.b32.xlu0 %v1795, 112
      %v2744 = vpop.permute.xlu0 %2743
      %v2746 = vsel %vm504, %v1841, 0
      %v2748 = vsel %vm504, %v2744, 0
      %2750 = vmatpush.xpose.msra.mxu0 0.0
      %2751 = vmatpush.xpose.msra.mxu0 0.0
      %2752 = vmatpush.xpose.msra.mxu0 0.0
      %2753 = vmatpush.xpose.msra.mxu0 0.0
      %2754 = vmatpush.xpose.msra.mxu0 0.0
      %2755 = vmatpush.xpose.msra.mxu0 0.0
      %2756 = vmatpush.xpose.msra.mxu0 0.0
      %2757 = vmatpush.xpose.msra.mxu0 0.0
      %2758 = vmatpush.xpose.msra.mxu0 0.0
      %2759 = vmatpush.xpose.msra.mxu0 0.0
      %2760 = vmatpush.xpose.msra.mxu0 0.0
      %2761 = vmatpush.xpose.msra.mxu0 0.0
      %2762 = vmatpush.xpose.msra.mxu0 0.0
      %2763 = vmatpush.xpose.msra.mxu0 0.0
      %2764 = vmatpush.xpose.msra.mxu0 0.0
      %2765 = vmatpush.xpose.msra.mxu0 %v2748
      %2766 = vmatmul.f32.gmra.mxu0 %v2746
      %v2767 = vpop.f32.mrf.mxu0
      %v2768 = vadd.f32 %v2029, %v2767
      %2769 = vdwg.mxu0
      %2770 = vrot.lane.b32.xlu0 %v1797, 112
      %v2771 = vpop.permute.xlu0 %2770
      %v2773 = vsel %vm504, %v1842, 0
      %v2775 = vsel %vm504, %v2771, 0
      %2777 = vmatpush.xpose.msra.mxu0 0.0
      %2778 = vmatpush.xpose.msra.mxu0 0.0
      %2779 = vmatpush.xpose.msra.mxu0 0.0
      %2780 = vmatpush.xpose.msra.mxu0 0.0
      %2781 = vmatpush.xpose.msra.mxu0 0.0
      %2782 = vmatpush.xpose.msra.mxu0 0.0
      %2783 = vmatpush.xpose.msra.mxu0 0.0
      %2784 = vmatpush.xpose.msra.mxu0 0.0
      %2785 = vmatpush.xpose.msra.mxu0 0.0
      %2786 = vmatpush.xpose.msra.mxu0 0.0
      %2787 = vmatpush.xpose.msra.mxu0 0.0
      %2788 = vmatpush.xpose.msra.mxu0 0.0
      %2789 = vmatpush.xpose.msra.mxu0 0.0
      %2790 = vmatpush.xpose.msra.mxu0 0.0
      %2791 = vmatpush.xpose.msra.mxu0 0.0
      %2792 = vmatpush.xpose.msra.mxu0 %v2775
      %2793 = vmatmul.f32.gmra.mxu0 %v2773
      %v2794 = vpop.f32.mrf.mxu0
      %v2795 = vadd.f32 %v2030, %v2794
      %2796 = vdwg.mxu0
      %2797 = vrot.lane.b32.xlu0 %v1799, 112
      %v2798 = vpop.permute.xlu0 %2797
      %v2800 = vsel %vm504, %v1843, 0
      %v2802 = vsel %vm504, %v2798, 0
      %2804 = vmatpush.xpose.msra.mxu0 0.0
      %2805 = vmatpush.xpose.msra.mxu0 0.0
      %2806 = vmatpush.xpose.msra.mxu0 0.0
      %2807 = vmatpush.xpose.msra.mxu0 0.0
      %2808 = vmatpush.xpose.msra.mxu0 0.0
      %2809 = vmatpush.xpose.msra.mxu0 0.0
      %2810 = vmatpush.xpose.msra.mxu0 0.0
      %2811 = vmatpush.xpose.msra.mxu0 0.0
      %2812 = vmatpush.xpose.msra.mxu0 0.0
      %2813 = vmatpush.xpose.msra.mxu0 0.0
      %2814 = vmatpush.xpose.msra.mxu0 0.0
      %2815 = vmatpush.xpose.msra.mxu0 0.0
      %2816 = vmatpush.xpose.msra.mxu0 0.0
      %2817 = vmatpush.xpose.msra.mxu0 0.0
      %2818 = vmatpush.xpose.msra.mxu0 0.0
      %2819 = vmatpush.xpose.msra.mxu0 %v2802
      %2820 = vmatmul.f32.gmra.mxu0 %v2800
      %v2821 = vpop.f32.mrf.mxu0
      %v2822 = vadd.f32 %v2031, %v2821
      %2823 = vdwg.mxu0
      %2824 = vrot.lane.b32.xlu0 %v1801, 112
      %v2825 = vpop.permute.xlu0 %2824
      %v2827 = vsel %vm504, %v1844, 0
      %v2829 = vsel %vm504, %v2825, 0
      %2831 = vmatpush.xpose.msra.mxu0 0.0
      %2832 = vmatpush.xpose.msra.mxu0 0.0
      %2833 = vmatpush.xpose.msra.mxu0 0.0
      %2834 = vmatpush.xpose.msra.mxu0 0.0
      %2835 = vmatpush.xpose.msra.mxu0 0.0
      %2836 = vmatpush.xpose.msra.mxu0 0.0
      %2837 = vmatpush.xpose.msra.mxu0 0.0
      %2838 = vmatpush.xpose.msra.mxu0 0.0
      %2839 = vmatpush.xpose.msra.mxu0 0.0
      %2840 = vmatpush.xpose.msra.mxu0 0.0
      %2841 = vmatpush.xpose.msra.mxu0 0.0
      %2842 = vmatpush.xpose.msra.mxu0 0.0
      %2843 = vmatpush.xpose.msra.mxu0 0.0
      %2844 = vmatpush.xpose.msra.mxu0 0.0
      %2845 = vmatpush.xpose.msra.mxu0 0.0
      %2846 = vmatpush.xpose.msra.mxu0 %v2829
      %2847 = vmatmul.f32.gmra.mxu0 %v2827
      %v2848 = vpop.f32.mrf.mxu0
      %v2849 = vadd.f32 %v2032, %v2848
      %2850 = vdwg.mxu0
      %2851 = vrot.lane.b32.xlu0 %v1803, 112
      %v2852 = vpop.permute.xlu0 %2851
      %v2854 = vsel %vm504, %v1845, 0
      %v2856 = vsel %vm504, %v2852, 0
      %2858 = vmatpush.xpose.msra.mxu0 0.0
      %2859 = vmatpush.xpose.msra.mxu0 0.0
      %2860 = vmatpush.xpose.msra.mxu0 0.0
      %2861 = vmatpush.xpose.msra.mxu0 0.0
      %2862 = vmatpush.xpose.msra.mxu0 0.0
      %2863 = vmatpush.xpose.msra.mxu0 0.0
      %2864 = vmatpush.xpose.msra.mxu0 0.0
      %2865 = vmatpush.xpose.msra.mxu0 0.0
      %2866 = vmatpush.xpose.msra.mxu0 0.0
      %2867 = vmatpush.xpose.msra.mxu0 0.0
      %2868 = vmatpush.xpose.msra.mxu0 0.0
      %2869 = vmatpush.xpose.msra.mxu0 0.0
      %2870 = vmatpush.xpose.msra.mxu0 0.0
      %2871 = vmatpush.xpose.msra.mxu0 0.0
      %2872 = vmatpush.xpose.msra.mxu0 0.0
      %2873 = vmatpush.xpose.msra.mxu0 %v2856
      %2874 = vmatmul.f32.gmra.mxu0 %v2854
      %v2875 = vpop.f32.mrf.mxu0
      %v2876 = vadd.f32 %v2033, %v2875
      %2877 = vdwg.mxu0
      %2878 = vrot.lane.b32.xlu0 %v1805, 112
      %v2879 = vpop.permute.xlu0 %2878
      %v2881 = vsel %vm504, %v1846, 0
      %v2883 = vsel %vm504, %v2879, 0
      %2885 = vmatpush.xpose.msra.mxu0 0.0
      %2886 = vmatpush.xpose.msra.mxu0 0.0
      %2887 = vmatpush.xpose.msra.mxu0 0.0
      %2888 = vmatpush.xpose.msra.mxu0 0.0
      %2889 = vmatpush.xpose.msra.mxu0 0.0
      %2890 = vmatpush.xpose.msra.mxu0 0.0
      %2891 = vmatpush.xpose.msra.mxu0 0.0
      %2892 = vmatpush.xpose.msra.mxu0 0.0
      %2893 = vmatpush.xpose.msra.mxu0 0.0
      %2894 = vmatpush.xpose.msra.mxu0 0.0
      %2895 = vmatpush.xpose.msra.mxu0 0.0
      %2896 = vmatpush.xpose.msra.mxu0 0.0
      %2897 = vmatpush.xpose.msra.mxu0 0.0
      %2898 = vmatpush.xpose.msra.mxu0 0.0
      %2899 = vmatpush.xpose.msra.mxu0 0.0
      %2900 = vmatpush.xpose.msra.mxu0 %v2883
      %2901 = vmatmul.f32.gmra.mxu0 %v2881
      %v2902 = vpop.f32.mrf.mxu0
      %v2903 = vadd.f32 %v2034, %v2902
      %2904 = vdwg.mxu0
      %2905 = vrot.lane.b32.xlu0 %v1807, 112
      %v2906 = vpop.permute.xlu0 %2905
      %v2908 = vsel %vm504, %v1847, 0
      %v2910 = vsel %vm504, %v2906, 0
      %2912 = vmatpush.xpose.msra.mxu0 0.0
      %2913 = vmatpush.xpose.msra.mxu0 0.0
      %2914 = vmatpush.xpose.msra.mxu0 0.0
      %2915 = vmatpush.xpose.msra.mxu0 0.0
      %2916 = vmatpush.xpose.msra.mxu0 0.0
      %2917 = vmatpush.xpose.msra.mxu0 0.0
      %2918 = vmatpush.xpose.msra.mxu0 0.0
      %2919 = vmatpush.xpose.msra.mxu0 0.0
      %2920 = vmatpush.xpose.msra.mxu0 0.0
      %2921 = vmatpush.xpose.msra.mxu0 0.0
      %2922 = vmatpush.xpose.msra.mxu0 0.0
      %2923 = vmatpush.xpose.msra.mxu0 0.0
      %2924 = vmatpush.xpose.msra.mxu0 0.0
      %2925 = vmatpush.xpose.msra.mxu0 0.0
      %2926 = vmatpush.xpose.msra.mxu0 0.0
      %2927 = vmatpush.xpose.msra.mxu0 %v2910
      %2928 = vmatmul.f32.gmra.mxu0 %v2908
      %v2929 = vpop.f32.mrf.mxu0
      %v2930 = vadd.f32 %v2035, %v2929
      %2931 = vdwg.mxu0
      %vm2932 = vcmask 9216
      %v2933 = vsel %vm2932, %v2093, -inf
      %2934 = vmax.xlane.f32.xlu0 %v2933
      %v2935 = vpop.xlane.xlu0 %2934
      %v2936 = vsel %vm2932, %v2120, -inf
      %2937 = vmax.xlane.f32.xlu0 %v2936
      %v2938 = vpop.xlane.xlu0 %2937
      %v2939 = vsel %vm2932, %v2147, -inf
      %2940 = vmax.xlane.f32.xlu0 %v2939
      %v2941 = vpop.xlane.xlu0 %2940
      %v2942 = vsel %vm2932, %v2174, -inf
      %2943 = vmax.xlane.f32.xlu0 %v2942
      %v2944 = vpop.xlane.xlu0 %2943
      %v2945 = vsel %vm2932, %v2201, -inf
      %2946 = vmax.xlane.f32.xlu0 %v2945
      %v2947 = vpop.xlane.xlu0 %2946
      %v2948 = vsel %vm2932, %v2228, -inf
      %2949 = vmax.xlane.f32.xlu0 %v2948
      %v2950 = vpop.xlane.xlu0 %2949
      %v2951 = vsel %vm2932, %v2255, -inf
      %2952 = vmax.xlane.f32.xlu0 %v2951
      %v2953 = vpop.xlane.xlu0 %2952
      %v2954 = vsel %vm2932, %v2282, -inf
      %2955 = vmax.xlane.f32.xlu0 %v2954
      %v2956 = vpop.xlane.xlu0 %2955
      %v2957 = vsel %vm2932, %v2309, -inf
      %2958 = vmax.xlane.f32.xlu0 %v2957
      %v2959 = vpop.xlane.xlu0 %2958
      %v2960 = vsel %vm2932, %v2336, -inf
      %2961 = vmax.xlane.f32.xlu0 %v2960
      %v2962 = vpop.xlane.xlu0 %2961
      %v2963 = vsel %vm2932, %v2363, -inf
      %2964 = vmax.xlane.f32.xlu0 %v2963
      %v2965 = vpop.xlane.xlu0 %2964
      %v2966 = vsel %vm2932, %v2390, -inf
      %2967 = vmax.xlane.f32.xlu0 %v2966
      %v2968 = vpop.xlane.xlu0 %2967
      %v2969 = vsel %vm2932, %v2417, -inf
      %2970 = vmax.xlane.f32.xlu0 %v2969
      %v2971 = vpop.xlane.xlu0 %2970
      %v2972 = vsel %vm2932, %v2444, -inf
      %2973 = vmax.xlane.f32.xlu0 %v2972
      %v2974 = vpop.xlane.xlu0 %2973
      %v2975 = vsel %vm2932, %v2471, -inf
      %2976 = vmax.xlane.f32.xlu0 %v2975
      %v2977 = vpop.xlane.xlu0 %2976
      %v2978 = vsel %vm2932, %v2498, -inf
      %2979 = vmax.xlane.f32.xlu0 %v2978
      %v2980 = vpop.xlane.xlu0 %2979
      %v2981 = vsel %vm2932, %v2525, -inf
      %2982 = vmax.xlane.f32.xlu0 %v2981
      %v2983 = vpop.xlane.xlu0 %2982
      %v2984 = vsel %vm2932, %v2552, -inf
      %2985 = vmax.xlane.f32.xlu0 %v2984
      %v2986 = vpop.xlane.xlu0 %2985
      %v2987 = vsel %vm2932, %v2579, -inf
      %2988 = vmax.xlane.f32.xlu0 %v2987
      %v2989 = vpop.xlane.xlu0 %2988
      %v2990 = vsel %vm2932, %v2606, -inf
      %2991 = vmax.xlane.f32.xlu0 %v2990
      %v2992 = vpop.xlane.xlu0 %2991
      %v2993 = vsel %vm2932, %v2633, -inf
      %2994 = vmax.xlane.f32.xlu0 %v2993
      %v2995 = vpop.xlane.xlu0 %2994
      %v2996 = vsel %vm2932, %v2660, -inf
      %2997 = vmax.xlane.f32.xlu0 %v2996
      %v2998 = vpop.xlane.xlu0 %2997
      %v2999 = vsel %vm2932, %v2687, -inf
      %3000 = vmax.xlane.f32.xlu0 %v2999
      %v3001 = vpop.xlane.xlu0 %3000
      %v3002 = vsel %vm2932, %v2714, -inf
      %3003 = vmax.xlane.f32.xlu0 %v3002
      %v3004 = vpop.xlane.xlu0 %3003
      %v3005 = vsel %vm2932, %v2741, -inf
      %3006 = vmax.xlane.f32.xlu0 %v3005
      %v3007 = vpop.xlane.xlu0 %3006
      %v3008 = vsel %vm2932, %v2768, -inf
      %3009 = vmax.xlane.f32.xlu0 %v3008
      %v3010 = vpop.xlane.xlu0 %3009
      %v3011 = vsel %vm2932, %v2795, -inf
      %3012 = vmax.xlane.f32.xlu0 %v3011
      %v3013 = vpop.xlane.xlu0 %3012
      %v3014 = vsel %vm2932, %v2822, -inf
      %3015 = vmax.xlane.f32.xlu0 %v3014
      %v3016 = vpop.xlane.xlu0 %3015
      %v3017 = vsel %vm2932, %v2849, -inf
      %3018 = vmax.xlane.f32.xlu0 %v3017
      %v3019 = vpop.xlane.xlu0 %3018
      %v3020 = vsel %vm2932, %v2876, -inf
      %3021 = vmax.xlane.f32.xlu0 %v3020
      %v3022 = vpop.xlane.xlu0 %3021
      %v3023 = vsel %vm2932, %v2903, -inf
      %3024 = vmax.xlane.f32.xlu0 %v3023
      %v3025 = vpop.xlane.xlu0 %3024
      %v3026 = vsel %vm2932, %v2930, -inf
      %3027 = vmax.xlane.f32.xlu0 %v3026
      %v3028 = vpop.xlane.xlu0 %3027
      %v3029 = vsub.f32 %v2093, %v2935
      %v3030 = vsub.f32 %v2120, %v2938
      %v3031 = vsub.f32 %v2147, %v2941
      %v3032 = vsub.f32 %v2174, %v2944
      %v3033 = vsub.f32 %v2201, %v2947
      %v3034 = vsub.f32 %v2228, %v2950
      %v3035 = vsub.f32 %v2255, %v2953
      %v3036 = vsub.f32 %v2282, %v2956
      %v3037 = vsub.f32 %v2309, %v2959
      %v3038 = vsub.f32 %v2336, %v2962
      %v3039 = vsub.f32 %v2363, %v2965
      %v3040 = vsub.f32 %v2390, %v2968
      %v3041 = vsub.f32 %v2417, %v2971
      %v3042 = vsub.f32 %v2444, %v2974
      %v3043 = vsub.f32 %v2471, %v2977
      %v3044 = vsub.f32 %v2498, %v2980
      %v3045 = vsub.f32 %v2525, %v2983
      %v3046 = vsub.f32 %v2552, %v2986
      %v3047 = vsub.f32 %v2579, %v2989
      %v3048 = vsub.f32 %v2606, %v2992
      %v3049 = vsub.f32 %v2633, %v2995
      %v3050 = vsub.f32 %v2660, %v2998
      %v3051 = vsub.f32 %v2687, %v3001
      %v3052 = vsub.f32 %v2714, %v3004
      %v3053 = vsub.f32 %v2741, %v3007
      %v3054 = vsub.f32 %v2768, %v3010
      %v3055 = vsub.f32 %v2795, %v3013
      %v3056 = vsub.f32 %v2822, %v3016
      %v3057 = vsub.f32 %v2849, %v3019
      %v3058 = vsub.f32 %v2876, %v3022
      %v3059 = vsub.f32 %v2903, %v3025
      %v3060 = vsub.f32 %v2930, %v3028
      %v3061 = vmul.f32 %v3029, 1.442695
      %v3062 = vpow.pop %v3061
      %v3063 = vmul.f32 %v3030, 1.442695
      %v3064 = vpow.pop %v3063
      %v3065 = vmul.f32 %v3031, 1.442695
      %v3066 = vpow.pop %v3065
      %v3067 = vmul.f32 %v3032, 1.442695
      %v3068 = vpow.pop %v3067
      %v3069 = vmul.f32 %v3033, 1.442695
      %v3070 = vpow.pop %v3069
      %v3071 = vmul.f32 %v3034, 1.442695
      %v3072 = vpow.pop %v3071
      %v3073 = vmul.f32 %v3035, 1.442695
      %v3074 = vpow.pop %v3073
      %v3075 = vmul.f32 %v3036, 1.442695
      %v3076 = vpow.pop %v3075
      %v3077 = vmul.f32 %v3037, 1.442695
      %v3078 = vpow.pop %v3077
      %v3079 = vmul.f32 %v3038, 1.442695
      %v3080 = vpow.pop %v3079
      %v3081 = vmul.f32 %v3039, 1.442695
      %v3082 = vpow.pop %v3081
      %v3083 = vmul.f32 %v3040, 1.442695
      %v3084 = vpow.pop %v3083
      %v3085 = vmul.f32 %v3041, 1.442695
      %v3086 = vpow.pop %v3085
      %v3087 = vmul.f32 %v3042, 1.442695
      %v3088 = vpow.pop %v3087
      %v3089 = vmul.f32 %v3043, 1.442695
      %v3090 = vpow.pop %v3089
      %v3091 = vmul.f32 %v3044, 1.442695
      %v3092 = vpow.pop %v3091
      %v3093 = vmul.f32 %v3045, 1.442695
      %v3094 = vpow.pop %v3093
      %v3095 = vmul.f32 %v3046, 1.442695
      %v3096 = vpow.pop %v3095
      %v3097 = vmul.f32 %v3047, 1.442695
      %v3098 = vpow.pop %v3097
      %v3099 = vmul.f32 %v3048, 1.442695
      %v3100 = vpow.pop %v3099
      %v3101 = vmul.f32 %v3049, 1.442695
      %v3102 = vpow.pop %v3101
      %v3103 = vmul.f32 %v3050, 1.442695
      %v3104 = vpow.pop %v3103
      %v3105 = vmul.f32 %v3051, 1.442695
      %v3106 = vpow.pop %v3105
      %v3107 = vmul.f32 %v3052, 1.442695
      %v3108 = vpow.pop %v3107
      %v3109 = vmul.f32 %v3053, 1.442695
      %v3110 = vpow.pop %v3109
      %v3111 = vmul.f32 %v3054, 1.442695
      %v3112 = vpow.pop %v3111
      %v3113 = vmul.f32 %v3055, 1.442695
      %v3114 = vpow.pop %v3113
      %v3115 = vmul.f32 %v3056, 1.442695
      %v3116 = vpow.pop %v3115
      %v3117 = vmul.f32 %v3057, 1.442695
      %v3118 = vpow.pop %v3117
      %v3119 = vmul.f32 %v3058, 1.442695
      %v3120 = vpow.pop %v3119
      %v3121 = vmul.f32 %v3059, 1.442695
      %v3122 = vpow.pop %v3121
      %v3123 = vmul.f32 %v3060, 1.442695
      %v3124 = vpow.pop %v3123
      %v3125 = vsel %vm2932, %v3062, 0.0
      %3126 = vadd.xlane.f32.xlu0 %v3125
      %v3127 = vpop.xlane.xlu0 %3126
      %v3128 = vsel %vm2932, %v3064, 0.0
      %3129 = vadd.xlane.f32.xlu0 %v3128
      %v3130 = vpop.xlane.xlu0 %3129
      %v3131 = vsel %vm2932, %v3066, 0.0
      %3132 = vadd.xlane.f32.xlu0 %v3131
      %v3133 = vpop.xlane.xlu0 %3132
      %v3134 = vsel %vm2932, %v3068, 0.0
      %3135 = vadd.xlane.f32.xlu0 %v3134
      %v3136 = vpop.xlane.xlu0 %3135
      %v3137 = vsel %vm2932, %v3070, 0.0
      %3138 = vadd.xlane.f32.xlu0 %v3137
      %v3139 = vpop.xlane.xlu0 %3138
      %v3140 = vsel %vm2932, %v3072, 0.0
      %3141 = vadd.xlane.f32.xlu0 %v3140
      %v3142 = vpop.xlane.xlu0 %3141
      %v3143 = vsel %vm2932, %v3074, 0.0
      %3144 = vadd.xlane.f32.xlu0 %v3143
      %v3145 = vpop.xlane.xlu0 %3144
      %v3146 = vsel %vm2932, %v3076, 0.0
      %3147 = vadd.xlane.f32.xlu0 %v3146
      %v3148 = vpop.xlane.xlu0 %3147
      %v3149 = vsel %vm2932, %v3078, 0.0
      %3150 = vadd.xlane.f32.xlu0 %v3149
      %v3151 = vpop.xlane.xlu0 %3150
      %v3152 = vsel %vm2932, %v3080, 0.0
      %3153 = vadd.xlane.f32.xlu0 %v3152
      %v3154 = vpop.xlane.xlu0 %3153
      %v3155 = vsel %vm2932, %v3082, 0.0
      %3156 = vadd.xlane.f32.xlu0 %v3155
      %v3157 = vpop.xlane.xlu0 %3156
      %v3158 = vsel %vm2932, %v3084, 0.0
      %3159 = vadd.xlane.f32.xlu0 %v3158
      %v3160 = vpop.xlane.xlu0 %3159
      %v3161 = vsel %vm2932, %v3086, 0.0
      %3162 = vadd.xlane.f32.xlu0 %v3161
      %v3163 = vpop.xlane.xlu0 %3162
      %v3164 = vsel %vm2932, %v3088, 0.0
      %3165 = vadd.xlane.f32.xlu0 %v3164
      %v3166 = vpop.xlane.xlu0 %3165
      %v3167 = vsel %vm2932, %v3090, 0.0
      %3168 = vadd.xlane.f32.xlu0 %v3167
      %v3169 = vpop.xlane.xlu0 %3168
      %v3170 = vsel %vm2932, %v3092, 0.0
      %3171 = vadd.xlane.f32.xlu0 %v3170
      %v3172 = vpop.xlane.xlu0 %3171
      %v3173 = vsel %vm2932, %v3094, 0.0
      %3174 = vadd.xlane.f32.xlu0 %v3173
      %v3175 = vpop.xlane.xlu0 %3174
      %v3176 = vsel %vm2932, %v3096, 0.0
      %3177 = vadd.xlane.f32.xlu0 %v3176
      %v3178 = vpop.xlane.xlu0 %3177
      %v3179 = vsel %vm2932, %v3098, 0.0
      %3180 = vadd.xlane.f32.xlu0 %v3179
      %v3181 = vpop.xlane.xlu0 %3180
      %v3182 = vsel %vm2932, %v3100, 0.0
      %3183 = vadd.xlane.f32.xlu0 %v3182
      %v3184 = vpop.xlane.xlu0 %3183
      %v3185 = vsel %vm2932, %v3102, 0.0
      %3186 = vadd.xlane.f32.xlu0 %v3185
      %v3187 = vpop.xlane.xlu0 %3186
      %v3188 = vsel %vm2932, %v3104, 0.0
      %3189 = vadd.xlane.f32.xlu0 %v3188
      %v3190 = vpop.xlane.xlu0 %3189
      %v3191 = vsel %vm2932, %v3106, 0.0
      %3192 = vadd.xlane.f32.xlu0 %v3191
      %v3193 = vpop.xlane.xlu0 %3192
      %v3194 = vsel %vm2932, %v3108, 0.0
      %3195 = vadd.xlane.f32.xlu0 %v3194
      %v3196 = vpop.xlane.xlu0 %3195
      %v3197 = vsel %vm2932, %v3110, 0.0
      %3198 = vadd.xlane.f32.xlu0 %v3197
      %v3199 = vpop.xlane.xlu0 %3198
      %v3200 = vsel %vm2932, %v3112, 0.0
      %3201 = vadd.xlane.f32.xlu0 %v3200
      %v3202 = vpop.xlane.xlu0 %3201
      %v3203 = vsel %vm2932, %v3114, 0.0
      %3204 = vadd.xlane.f32.xlu0 %v3203
      %v3205 = vpop.xlane.xlu0 %3204
      %v3206 = vsel %vm2932, %v3116, 0.0
      %3207 = vadd.xlane.f32.xlu0 %v3206
      %v3208 = vpop.xlane.xlu0 %3207
      %v3209 = vsel %vm2932, %v3118, 0.0
      %3210 = vadd.xlane.f32.xlu0 %v3209
      %v3211 = vpop.xlane.xlu0 %3210
      %v3212 = vsel %vm2932, %v3120, 0.0
      %3213 = vadd.xlane.f32.xlu0 %v3212
      %v3214 = vpop.xlane.xlu0 %3213
      %v3215 = vsel %vm2932, %v3122, 0.0
      %3216 = vadd.xlane.f32.xlu0 %v3215
      %v3217 = vpop.xlane.xlu0 %3216
      %v3218 = vsel %vm2932, %v3124, 0.0
      %3219 = vadd.xlane.f32.xlu0 %v3218
      %v3220 = vpop.xlane.xlu0 %3219
      %v3221 = vrcp.pop %v3127
      %v3222 = vrcp.pop %v3130
      %v3223 = vrcp.pop %v3133
      %v3224 = vrcp.pop %v3136
      %v3225 = vrcp.pop %v3139
      %v3226 = vrcp.pop %v3142
      %v3227 = vrcp.pop %v3145
      %v3228 = vrcp.pop %v3148
      %v3229 = vrcp.pop %v3151
      %v3230 = vrcp.pop %v3154
      %v3231 = vrcp.pop %v3157
      %v3232 = vrcp.pop %v3160
      %v3233 = vrcp.pop %v3163
      %v3234 = vrcp.pop %v3166
      %v3235 = vrcp.pop %v3169
      %v3236 = vrcp.pop %v3172
      %v3237 = vrcp.pop %v3175
      %v3238 = vrcp.pop %v3178
      %v3239 = vrcp.pop %v3181
      %v3240 = vrcp.pop %v3184
      %v3241 = vrcp.pop %v3187
      %v3242 = vrcp.pop %v3190
      %v3243 = vrcp.pop %v3193
      %v3244 = vrcp.pop %v3196
      %v3245 = vrcp.pop %v3199
      %v3246 = vrcp.pop %v3202
      %v3247 = vrcp.pop %v3205
      %v3248 = vrcp.pop %v3208
      %v3249 = vrcp.pop %v3211
      %v3250 = vrcp.pop %v3214
      %v3251 = vrcp.pop %v3217
      %v3252 = vrcp.pop %v3220
      %v3253 = vmul.f32 %v3062, %v3221
      %v3254 = vmul.f32 %v3064, %v3222
      %v3255 = vmul.f32 %v3066, %v3223
      %v3256 = vmul.f32 %v3068, %v3224
      %v3257 = vmul.f32 %v3070, %v3225
      %v3258 = vmul.f32 %v3072, %v3226
      %v3259 = vmul.f32 %v3074, %v3227
      %v3260 = vmul.f32 %v3076, %v3228
      %v3261 = vmul.f32 %v3078, %v3229
      %v3262 = vmul.f32 %v3080, %v3230
      %v3263 = vmul.f32 %v3082, %v3231
      %v3264 = vmul.f32 %v3084, %v3232
      %v3265 = vmul.f32 %v3086, %v3233
      %v3266 = vmul.f32 %v3088, %v3234
      %v3267 = vmul.f32 %v3090, %v3235
      %v3268 = vmul.f32 %v3092, %v3236
      %v3269 = vmul.f32 %v3094, %v3237
      %v3270 = vmul.f32 %v3096, %v3238
      %v3271 = vmul.f32 %v3098, %v3239
      %v3272 = vmul.f32 %v3100, %v3240
      %v3273 = vmul.f32 %v3102, %v3241
      %v3274 = vmul.f32 %v3104, %v3242
      %v3275 = vmul.f32 %v3106, %v3243
      %v3276 = vmul.f32 %v3108, %v3244
      %v3277 = vmul.f32 %v3110, %v3245
      %v3278 = vmul.f32 %v3112, %v3246
      %v3279 = vmul.f32 %v3114, %v3247
      %v3280 = vmul.f32 %v3116, %v3248
      %v3281 = vmul.f32 %v3118, %v3249
      %v3282 = vmul.f32 %v3120, %v3250
      %v3283 = vmul.f32 %v3122, %v3251
      %v3284 = vmul.f32 %v3124, %v3252
      %3285 = vrot.lane.b32.xlu0 %v1717, 96
      %v3286 = vpop.permute.xlu0 %3285
      %vm3287 = vcmask 15360
      %v3289 = vsel %vm3287, %v3253, 0
      %vm3291 = vcmask 1041408
      %v3292 = vsel %vm3291, %v3286, 0
      %3294 = vmatpush.msra.mxu0 0.0
      %3295 = vmatpush.msra.mxu0 0.0
      %3296 = vmatpush.msra.mxu0 0.0
      %3297 = vmatpush.msra.mxu0 0.0
      %3298 = vmatpush.msra.mxu0 0.0
      %3299 = vmatpush.msra.mxu0 0.0
      %3300 = vmatpush.msra.mxu0 0.0
      %3301 = vmatpush.msra.mxu0 0.0
      %3302 = vmatpush.msra.mxu0 0.0
      %3303 = vmatpush.msra.mxu0 0.0
      %3304 = vmatpush.msra.mxu0 0.0
      %3305 = vmatpush.msra.mxu0 0.0
      %3306 = vmatpush.msra.mxu0 0.0
      %3307 = vmatpush.msra.mxu0 0.0
      %3308 = vmatpush.msra.mxu0 0.0
      %3309 = vmatpush.msra.mxu0 %v3292
      %3310 = vmatmul.f32.gmra.mxu0 %v3289
      %v3311 = vpop.f32.mrf.mxu0
      %v3312 = vadd.f32 0.0, %v3311
      %3313 = vdwg.mxu0
      %3314 = vrot.lane.b32.xlu0 %v1719, 96
      %v3315 = vpop.permute.xlu0 %3314
      %v3317 = vsel %vm3287, %v3254, 0
      %v3319 = vsel %vm3291, %v3315, 0
      %3321 = vmatpush.msra.mxu0 0.0
      %3322 = vmatpush.msra.mxu0 0.0
      %3323 = vmatpush.msra.mxu0 0.0
      %3324 = vmatpush.msra.mxu0 0.0
      %3325 = vmatpush.msra.mxu0 0.0
      %3326 = vmatpush.msra.mxu0 0.0
      %3327 = vmatpush.msra.mxu0 0.0
      %3328 = vmatpush.msra.mxu0 0.0
      %3329 = vmatpush.msra.mxu0 0.0
      %3330 = vmatpush.msra.mxu0 0.0
      %3331 = vmatpush.msra.mxu0 0.0
      %3332 = vmatpush.msra.mxu0 0.0
      %3333 = vmatpush.msra.mxu0 0.0
      %3334 = vmatpush.msra.mxu0 0.0
      %3335 = vmatpush.msra.mxu0 0.0
      %3336 = vmatpush.msra.mxu0 %v3319
      %3337 = vmatmul.f32.gmra.mxu0 %v3317
      %v3338 = vpop.f32.mrf.mxu0
      %v3339 = vadd.f32 0.0, %v3338
      %3340 = vdwg.mxu0
      %3341 = vrot.lane.b32.xlu0 %v1721, 96
      %v3342 = vpop.permute.xlu0 %3341
      %v3344 = vsel %vm3287, %v3255, 0
      %v3346 = vsel %vm3291, %v3342, 0
      %3348 = vmatpush.msra.mxu0 0.0
      %3349 = vmatpush.msra.mxu0 0.0
      %3350 = vmatpush.msra.mxu0 0.0
      %3351 = vmatpush.msra.mxu0 0.0
      %3352 = vmatpush.msra.mxu0 0.0
      %3353 = vmatpush.msra.mxu0 0.0
      %3354 = vmatpush.msra.mxu0 0.0
      %3355 = vmatpush.msra.mxu0 0.0
      %3356 = vmatpush.msra.mxu0 0.0
      %3357 = vmatpush.msra.mxu0 0.0
      %3358 = vmatpush.msra.mxu0 0.0
      %3359 = vmatpush.msra.mxu0 0.0
      %3360 = vmatpush.msra.mxu0 0.0
      %3361 = vmatpush.msra.mxu0 0.0
      %3362 = vmatpush.msra.mxu0 0.0
      %3363 = vmatpush.msra.mxu0 %v3346
      %3364 = vmatmul.f32.gmra.mxu0 %v3344
      %v3365 = vpop.f32.mrf.mxu0
      %v3366 = vadd.f32 0.0, %v3365
      %3367 = vdwg.mxu0
      %3368 = vrot.lane.b32.xlu0 %v1723, 96
      %v3369 = vpop.permute.xlu0 %3368
      %v3371 = vsel %vm3287, %v3256, 0
      %v3373 = vsel %vm3291, %v3369, 0
      %3375 = vmatpush.msra.mxu0 0.0
      %3376 = vmatpush.msra.mxu0 0.0
      %3377 = vmatpush.msra.mxu0 0.0
      %3378 = vmatpush.msra.mxu0 0.0
      %3379 = vmatpush.msra.mxu0 0.0
      %3380 = vmatpush.msra.mxu0 0.0
      %3381 = vmatpush.msra.mxu0 0.0
      %3382 = vmatpush.msra.mxu0 0.0
      %3383 = vmatpush.msra.mxu0 0.0
      %3384 = vmatpush.msra.mxu0 0.0
      %3385 = vmatpush.msra.mxu0 0.0
      %3386 = vmatpush.msra.mxu0 0.0
      %3387 = vmatpush.msra.mxu0 0.0
      %3388 = vmatpush.msra.mxu0 0.0
      %3389 = vmatpush.msra.mxu0 0.0
      %3390 = vmatpush.msra.mxu0 %v3373
      %3391 = vmatmul.f32.gmra.mxu0 %v3371
      %v3392 = vpop.f32.mrf.mxu0
      %v3393 = vadd.f32 0.0, %v3392
      %3394 = vdwg.mxu0
      %3395 = vrot.lane.b32.xlu0 %v1725, 96
      %v3396 = vpop.permute.xlu0 %3395
      %v3398 = vsel %vm3287, %v3257, 0
      %v3400 = vsel %vm3291, %v3396, 0
      %3402 = vmatpush.msra.mxu0 0.0
      %3403 = vmatpush.msra.mxu0 0.0
      %3404 = vmatpush.msra.mxu0 0.0
      %3405 = vmatpush.msra.mxu0 0.0
      %3406 = vmatpush.msra.mxu0 0.0
      %3407 = vmatpush.msra.mxu0 0.0
      %3408 = vmatpush.msra.mxu0 0.0
      %3409 = vmatpush.msra.mxu0 0.0
      %3410 = vmatpush.msra.mxu0 0.0
      %3411 = vmatpush.msra.mxu0 0.0
      %3412 = vmatpush.msra.mxu0 0.0
      %3413 = vmatpush.msra.mxu0 0.0
      %3414 = vmatpush.msra.mxu0 0.0
      %3415 = vmatpush.msra.mxu0 0.0
      %3416 = vmatpush.msra.mxu0 0.0
      %3417 = vmatpush.msra.mxu0 %v3400
      %3418 = vmatmul.f32.gmra.mxu0 %v3398
      %v3419 = vpop.f32.mrf.mxu0
      %v3420 = vadd.f32 0.0, %v3419
      %3421 = vdwg.mxu0
      %3422 = vrot.lane.b32.xlu0 %v1727, 96
      %v3423 = vpop.permute.xlu0 %3422
      %v3425 = vsel %vm3287, %v3258, 0
      %v3427 = vsel %vm3291, %v3423, 0
      %3429 = vmatpush.msra.mxu0 0.0
      %3430 = vmatpush.msra.mxu0 0.0
      %3431 = vmatpush.msra.mxu0 0.0
      %3432 = vmatpush.msra.mxu0 0.0
      %3433 = vmatpush.msra.mxu0 0.0
      %3434 = vmatpush.msra.mxu0 0.0
      %3435 = vmatpush.msra.mxu0 0.0
      %3436 = vmatpush.msra.mxu0 0.0
      %3437 = vmatpush.msra.mxu0 0.0
      %3438 = vmatpush.msra.mxu0 0.0
      %3439 = vmatpush.msra.mxu0 0.0
      %3440 = vmatpush.msra.mxu0 0.0
      %3441 = vmatpush.msra.mxu0 0.0
      %3442 = vmatpush.msra.mxu0 0.0
      %3443 = vmatpush.msra.mxu0 0.0
      %3444 = vmatpush.msra.mxu0 %v3427
      %3445 = vmatmul.f32.gmra.mxu0 %v3425
      %v3446 = vpop.f32.mrf.mxu0
      %v3447 = vadd.f32 0.0, %v3446
      %3448 = vdwg.mxu0
      %3449 = vrot.lane.b32.xlu0 %v1729, 96
      %v3450 = vpop.permute.xlu0 %3449
      %v3452 = vsel %vm3287, %v3259, 0
      %v3454 = vsel %vm3291, %v3450, 0
      %3456 = vmatpush.msra.mxu0 0.0
      %3457 = vmatpush.msra.mxu0 0.0
      %3458 = vmatpush.msra.mxu0 0.0
      %3459 = vmatpush.msra.mxu0 0.0
      %3460 = vmatpush.msra.mxu0 0.0
      %3461 = vmatpush.msra.mxu0 0.0
      %3462 = vmatpush.msra.mxu0 0.0
      %3463 = vmatpush.msra.mxu0 0.0
      %3464 = vmatpush.msra.mxu0 0.0
      %3465 = vmatpush.msra.mxu0 0.0
      %3466 = vmatpush.msra.mxu0 0.0
      %3467 = vmatpush.msra.mxu0 0.0
      %3468 = vmatpush.msra.mxu0 0.0
      %3469 = vmatpush.msra.mxu0 0.0
      %3470 = vmatpush.msra.mxu0 0.0
      %3471 = vmatpush.msra.mxu0 %v3454
      %3472 = vmatmul.f32.gmra.mxu0 %v3452
      %v3473 = vpop.f32.mrf.mxu0
      %v3474 = vadd.f32 0.0, %v3473
      %3475 = vdwg.mxu0
      %3476 = vrot.lane.b32.xlu0 %v1731, 96
      %v3477 = vpop.permute.xlu0 %3476
      %v3479 = vsel %vm3287, %v3260, 0
      %v3481 = vsel %vm3291, %v3477, 0
      %3483 = vmatpush.msra.mxu0 0.0
      %3484 = vmatpush.msra.mxu0 0.0
      %3485 = vmatpush.msra.mxu0 0.0
      %3486 = vmatpush.msra.mxu0 0.0
      %3487 = vmatpush.msra.mxu0 0.0
      %3488 = vmatpush.msra.mxu0 0.0
      %3489 = vmatpush.msra.mxu0 0.0
      %3490 = vmatpush.msra.mxu0 0.0
      %3491 = vmatpush.msra.mxu0 0.0
      %3492 = vmatpush.msra.mxu0 0.0
      %3493 = vmatpush.msra.mxu0 0.0
      %3494 = vmatpush.msra.mxu0 0.0
      %3495 = vmatpush.msra.mxu0 0.0
      %3496 = vmatpush.msra.mxu0 0.0
      %3497 = vmatpush.msra.mxu0 0.0
      %3498 = vmatpush.msra.mxu0 %v3481
      %3499 = vmatmul.f32.gmra.mxu0 %v3479
      %v3500 = vpop.f32.mrf.mxu0
      %v3501 = vadd.f32 0.0, %v3500
      %3502 = vdwg.mxu0
      %3503 = vrot.lane.b32.xlu0 %v1745, 96
      %v3504 = vpop.permute.xlu0 %3503
      %v3506 = vsel %vm3287, %v3261, 0
      %v3508 = vsel %vm3291, %v3504, 0
      %3510 = vmatpush.msra.mxu0 0.0
      %3511 = vmatpush.msra.mxu0 0.0
      %3512 = vmatpush.msra.mxu0 0.0
      %3513 = vmatpush.msra.mxu0 0.0
      %3514 = vmatpush.msra.mxu0 0.0
      %3515 = vmatpush.msra.mxu0 0.0
      %3516 = vmatpush.msra.mxu0 0.0
      %3517 = vmatpush.msra.mxu0 0.0
      %3518 = vmatpush.msra.mxu0 0.0
      %3519 = vmatpush.msra.mxu0 0.0
      %3520 = vmatpush.msra.mxu0 0.0
      %3521 = vmatpush.msra.mxu0 0.0
      %3522 = vmatpush.msra.mxu0 0.0
      %3523 = vmatpush.msra.mxu0 0.0
      %3524 = vmatpush.msra.mxu0 0.0
      %3525 = vmatpush.msra.mxu0 %v3508
      %3526 = vmatmul.f32.gmra.mxu0 %v3506
      %v3527 = vpop.f32.mrf.mxu0
      %v3528 = vadd.f32 0.0, %v3527
      %3529 = vdwg.mxu0
      %3530 = vrot.lane.b32.xlu0 %v1747, 96
      %v3531 = vpop.permute.xlu0 %3530
      %v3533 = vsel %vm3287, %v3262, 0
      %v3535 = vsel %vm3291, %v3531, 0
      %3537 = vmatpush.msra.mxu0 0.0
      %3538 = vmatpush.msra.mxu0 0.0
      %3539 = vmatpush.msra.mxu0 0.0
      %3540 = vmatpush.msra.mxu0 0.0
      %3541 = vmatpush.msra.mxu0 0.0
      %3542 = vmatpush.msra.mxu0 0.0
      %3543 = vmatpush.msra.mxu0 0.0
      %3544 = vmatpush.msra.mxu0 0.0
      %3545 = vmatpush.msra.mxu0 0.0
      %3546 = vmatpush.msra.mxu0 0.0
      %3547 = vmatpush.msra.mxu0 0.0
      %3548 = vmatpush.msra.mxu0 0.0
      %3549 = vmatpush.msra.mxu0 0.0
      %3550 = vmatpush.msra.mxu0 0.0
      %3551 = vmatpush.msra.mxu0 0.0
      %3552 = vmatpush.msra.mxu0 %v3535
      %3553 = vmatmul.f32.gmra.mxu0 %v3533
      %v3554 = vpop.f32.mrf.mxu0
      %v3555 = vadd.f32 0.0, %v3554
      %3556 = vdwg.mxu0
      %3557 = vrot.lane.b32.xlu0 %v1749, 96
      %v3558 = vpop.permute.xlu0 %3557
      %v3560 = vsel %vm3287, %v3263, 0
      %v3562 = vsel %vm3291, %v3558, 0
      %3564 = vmatpush.msra.mxu0 0.0
      %3565 = vmatpush.msra.mxu0 0.0
      %3566 = vmatpush.msra.mxu0 0.0
      %3567 = vmatpush.msra.mxu0 0.0
      %3568 = vmatpush.msra.mxu0 0.0
      %3569 = vmatpush.msra.mxu0 0.0
      %3570 = vmatpush.msra.mxu0 0.0
      %3571 = vmatpush.msra.mxu0 0.0
      %3572 = vmatpush.msra.mxu0 0.0
      %3573 = vmatpush.msra.mxu0 0.0
      %3574 = vmatpush.msra.mxu0 0.0
      %3575 = vmatpush.msra.mxu0 0.0
      %3576 = vmatpush.msra.mxu0 0.0
      %3577 = vmatpush.msra.mxu0 0.0
      %3578 = vmatpush.msra.mxu0 0.0
      %3579 = vmatpush.msra.mxu0 %v3562
      %3580 = vmatmul.f32.gmra.mxu0 %v3560
      %v3581 = vpop.f32.mrf.mxu0
      %v3582 = vadd.f32 0.0, %v3581
      %3583 = vdwg.mxu0
      %3584 = vrot.lane.b32.xlu0 %v1751, 96
      %v3585 = vpop.permute.xlu0 %3584
      %v3587 = vsel %vm3287, %v3264, 0
      %v3589 = vsel %vm3291, %v3585, 0
      %3591 = vmatpush.msra.mxu0 0.0
      %3592 = vmatpush.msra.mxu0 0.0
      %3593 = vmatpush.msra.mxu0 0.0
      %3594 = vmatpush.msra.mxu0 0.0
      %3595 = vmatpush.msra.mxu0 0.0
      %3596 = vmatpush.msra.mxu0 0.0
      %3597 = vmatpush.msra.mxu0 0.0
      %3598 = vmatpush.msra.mxu0 0.0
      %3599 = vmatpush.msra.mxu0 0.0
      %3600 = vmatpush.msra.mxu0 0.0
      %3601 = vmatpush.msra.mxu0 0.0
      %3602 = vmatpush.msra.mxu0 0.0
      %3603 = vmatpush.msra.mxu0 0.0
      %3604 = vmatpush.msra.mxu0 0.0
      %3605 = vmatpush.msra.mxu0 0.0
      %3606 = vmatpush.msra.mxu0 %v3589
      %3607 = vmatmul.f32.gmra.mxu0 %v3587
      %v3608 = vpop.f32.mrf.mxu0
      %v3609 = vadd.f32 0.0, %v3608
      %3610 = vdwg.mxu0
      %3611 = vrot.lane.b32.xlu0 %v1753, 96
      %v3612 = vpop.permute.xlu0 %3611
      %v3614 = vsel %vm3287, %v3265, 0
      %v3616 = vsel %vm3291, %v3612, 0
      %3618 = vmatpush.msra.mxu0 0.0
      %3619 = vmatpush.msra.mxu0 0.0
      %3620 = vmatpush.msra.mxu0 0.0
      %3621 = vmatpush.msra.mxu0 0.0
      %3622 = vmatpush.msra.mxu0 0.0
      %3623 = vmatpush.msra.mxu0 0.0
      %3624 = vmatpush.msra.mxu0 0.0
      %3625 = vmatpush.msra.mxu0 0.0
      %3626 = vmatpush.msra.mxu0 0.0
      %3627 = vmatpush.msra.mxu0 0.0
      %3628 = vmatpush.msra.mxu0 0.0
      %3629 = vmatpush.msra.mxu0 0.0
      %3630 = vmatpush.msra.mxu0 0.0
      %3631 = vmatpush.msra.mxu0 0.0
      %3632 = vmatpush.msra.mxu0 0.0
      %3633 = vmatpush.msra.mxu0 %v3616
      %3634 = vmatmul.f32.gmra.mxu0 %v3614
      %v3635 = vpop.f32.mrf.mxu0
      %v3636 = vadd.f32 0.0, %v3635
      %3637 = vdwg.mxu0
      %3638 = vrot.lane.b32.xlu0 %v1755, 96
      %v3639 = vpop.permute.xlu0 %3638
      %v3641 = vsel %vm3287, %v3266, 0
      %v3643 = vsel %vm3291, %v3639, 0
      %3645 = vmatpush.msra.mxu0 0.0
      %3646 = vmatpush.msra.mxu0 0.0
      %3647 = vmatpush.msra.mxu0 0.0
      %3648 = vmatpush.msra.mxu0 0.0
      %3649 = vmatpush.msra.mxu0 0.0
      %3650 = vmatpush.msra.mxu0 0.0
      %3651 = vmatpush.msra.mxu0 0.0
      %3652 = vmatpush.msra.mxu0 0.0
      %3653 = vmatpush.msra.mxu0 0.0
      %3654 = vmatpush.msra.mxu0 0.0
      %3655 = vmatpush.msra.mxu0 0.0
      %3656 = vmatpush.msra.mxu0 0.0
      %3657 = vmatpush.msra.mxu0 0.0
      %3658 = vmatpush.msra.mxu0 0.0
      %3659 = vmatpush.msra.mxu0 0.0
      %3660 = vmatpush.msra.mxu0 %v3643
      %3661 = vmatmul.f32.gmra.mxu0 %v3641
      %v3662 = vpop.f32.mrf.mxu0
      %v3663 = vadd.f32 0.0, %v3662
      %3664 = vdwg.mxu0
      %3665 = vrot.lane.b32.xlu0 %v1757, 96
      %v3666 = vpop.permute.xlu0 %3665
      %v3668 = vsel %vm3287, %v3267, 0
      %v3670 = vsel %vm3291, %v3666, 0
      %3672 = vmatpush.msra.mxu0 0.0
      %3673 = vmatpush.msra.mxu0 0.0
      %3674 = vmatpush.msra.mxu0 0.0
      %3675 = vmatpush.msra.mxu0 0.0
      %3676 = vmatpush.msra.mxu0 0.0
      %3677 = vmatpush.msra.mxu0 0.0
      %3678 = vmatpush.msra.mxu0 0.0
      %3679 = vmatpush.msra.mxu0 0.0
      %3680 = vmatpush.msra.mxu0 0.0
      %3681 = vmatpush.msra.mxu0 0.0
      %3682 = vmatpush.msra.mxu0 0.0
      %3683 = vmatpush.msra.mxu0 0.0
      %3684 = vmatpush.msra.mxu0 0.0
      %3685 = vmatpush.msra.mxu0 0.0
      %3686 = vmatpush.msra.mxu0 0.0
      %3687 = vmatpush.msra.mxu0 %v3670
      %3688 = vmatmul.f32.gmra.mxu0 %v3668
      %v3689 = vpop.f32.mrf.mxu0
      %v3690 = vadd.f32 0.0, %v3689
      %3691 = vdwg.mxu0
      %3692 = vrot.lane.b32.xlu0 %v1759, 96
      %v3693 = vpop.permute.xlu0 %3692
      %v3695 = vsel %vm3287, %v3268, 0
      %v3697 = vsel %vm3291, %v3693, 0
      %3699 = vmatpush.msra.mxu0 0.0
      %3700 = vmatpush.msra.mxu0 0.0
      %3701 = vmatpush.msra.mxu0 0.0
      %3702 = vmatpush.msra.mxu0 0.0
      %3703 = vmatpush.msra.mxu0 0.0
      %3704 = vmatpush.msra.mxu0 0.0
      %3705 = vmatpush.msra.mxu0 0.0
      %3706 = vmatpush.msra.mxu0 0.0
      %3707 = vmatpush.msra.mxu0 0.0
      %3708 = vmatpush.msra.mxu0 0.0
      %3709 = vmatpush.msra.mxu0 0.0
      %3710 = vmatpush.msra.mxu0 0.0
      %3711 = vmatpush.msra.mxu0 0.0
      %3712 = vmatpush.msra.mxu0 0.0
      %3713 = vmatpush.msra.mxu0 0.0
      %3714 = vmatpush.msra.mxu0 %v3697
      %3715 = vmatmul.f32.gmra.mxu0 %v3695
      %v3716 = vpop.f32.mrf.mxu0
      %v3717 = vadd.f32 0.0, %v3716
      %3718 = vdwg.mxu0
      %3719 = vrot.lane.b32.xlu0 %v1769, 96
      %v3720 = vpop.permute.xlu0 %3719
      %v3722 = vsel %vm3287, %v3269, 0
      %v3724 = vsel %vm3291, %v3720, 0
      %3726 = vmatpush.msra.mxu0 0.0
      %3727 = vmatpush.msra.mxu0 0.0
      %3728 = vmatpush.msra.mxu0 0.0
      %3729 = vmatpush.msra.mxu0 0.0
      %3730 = vmatpush.msra.mxu0 0.0
      %3731 = vmatpush.msra.mxu0 0.0
      %3732 = vmatpush.msra.mxu0 0.0
      %3733 = vmatpush.msra.mxu0 0.0
      %3734 = vmatpush.msra.mxu0 0.0
      %3735 = vmatpush.msra.mxu0 0.0
      %3736 = vmatpush.msra.mxu0 0.0
      %3737 = vmatpush.msra.mxu0 0.0
      %3738 = vmatpush.msra.mxu0 0.0
      %3739 = vmatpush.msra.mxu0 0.0
      %3740 = vmatpush.msra.mxu0 0.0
      %3741 = vmatpush.msra.mxu0 %v3724
      %3742 = vmatmul.f32.gmra.mxu0 %v3722
      %v3743 = vpop.f32.mrf.mxu0
      %v3744 = vadd.f32 0.0, %v3743
      %3745 = vdwg.mxu0
      %3746 = vrot.lane.b32.xlu0 %v1771, 96
      %v3747 = vpop.permute.xlu0 %3746
      %v3749 = vsel %vm3287, %v3270, 0
      %v3751 = vsel %vm3291, %v3747, 0
      %3753 = vmatpush.msra.mxu0 0.0
      %3754 = vmatpush.msra.mxu0 0.0
      %3755 = vmatpush.msra.mxu0 0.0
      %3756 = vmatpush.msra.mxu0 0.0
      %3757 = vmatpush.msra.mxu0 0.0
      %3758 = vmatpush.msra.mxu0 0.0
      %3759 = vmatpush.msra.mxu0 0.0
      %3760 = vmatpush.msra.mxu0 0.0
      %3761 = vmatpush.msra.mxu0 0.0
      %3762 = vmatpush.msra.mxu0 0.0
      %3763 = vmatpush.msra.mxu0 0.0
      %3764 = vmatpush.msra.mxu0 0.0
      %3765 = vmatpush.msra.mxu0 0.0
      %3766 = vmatpush.msra.mxu0 0.0
      %3767 = vmatpush.msra.mxu0 0.0
      %3768 = vmatpush.msra.mxu0 %v3751
      %3769 = vmatmul.f32.gmra.mxu0 %v3749
      %v3770 = vpop.f32.mrf.mxu0
      %v3771 = vadd.f32 0.0, %v3770
      %3772 = vdwg.mxu0
      %3773 = vrot.lane.b32.xlu0 %v1773, 96
      %v3774 = vpop.permute.xlu0 %3773
      %v3776 = vsel %vm3287, %v3271, 0
      %v3778 = vsel %vm3291, %v3774, 0
      %3780 = vmatpush.msra.mxu0 0.0
      %3781 = vmatpush.msra.mxu0 0.0
      %3782 = vmatpush.msra.mxu0 0.0
      %3783 = vmatpush.msra.mxu0 0.0
      %3784 = vmatpush.msra.mxu0 0.0
      %3785 = vmatpush.msra.mxu0 0.0
      %3786 = vmatpush.msra.mxu0 0.0
      %3787 = vmatpush.msra.mxu0 0.0
      %3788 = vmatpush.msra.mxu0 0.0
      %3789 = vmatpush.msra.mxu0 0.0
      %3790 = vmatpush.msra.mxu0 0.0
      %3791 = vmatpush.msra.mxu0 0.0
      %3792 = vmatpush.msra.mxu0 0.0
      %3793 = vmatpush.msra.mxu0 0.0
      %3794 = vmatpush.msra.mxu0 0.0
      %3795 = vmatpush.msra.mxu0 %v3778
      %3796 = vmatmul.f32.gmra.mxu0 %v3776
      %v3797 = vpop.f32.mrf.mxu0
      %v3798 = vadd.f32 0.0, %v3797
      %3799 = vdwg.mxu0
      %3800 = vrot.lane.b32.xlu0 %v1775, 96
      %v3801 = vpop.permute.xlu0 %3800
      %v3803 = vsel %vm3287, %v3272, 0
      %v3805 = vsel %vm3291, %v3801, 0
      %3807 = vmatpush.msra.mxu0 0.0
      %3808 = vmatpush.msra.mxu0 0.0
      %3809 = vmatpush.msra.mxu0 0.0
      %3810 = vmatpush.msra.mxu0 0.0
      %3811 = vmatpush.msra.mxu0 0.0
      %3812 = vmatpush.msra.mxu0 0.0
      %3813 = vmatpush.msra.mxu0 0.0
      %3814 = vmatpush.msra.mxu0 0.0
      %3815 = vmatpush.msra.mxu0 0.0
      %3816 = vmatpush.msra.mxu0 0.0
      %3817 = vmatpush.msra.mxu0 0.0
      %3818 = vmatpush.msra.mxu0 0.0
      %3819 = vmatpush.msra.mxu0 0.0
      %3820 = vmatpush.msra.mxu0 0.0
      %3821 = vmatpush.msra.mxu0 0.0
      %3822 = vmatpush.msra.mxu0 %v3805
      %3823 = vmatmul.f32.gmra.mxu0 %v3803
      %v3824 = vpop.f32.mrf.mxu0
      %v3825 = vadd.f32 0.0, %v3824
      %3826 = vdwg.mxu0
      %3827 = vrot.lane.b32.xlu0 %v1777, 96
      %v3828 = vpop.permute.xlu0 %3827
      %v3830 = vsel %vm3287, %v3273, 0
      %v3832 = vsel %vm3291, %v3828, 0
      %3834 = vmatpush.msra.mxu0 0.0
      %3835 = vmatpush.msra.mxu0 0.0
      %3836 = vmatpush.msra.mxu0 0.0
      %3837 = vmatpush.msra.mxu0 0.0
      %3838 = vmatpush.msra.mxu0 0.0
      %3839 = vmatpush.msra.mxu0 0.0
      %3840 = vmatpush.msra.mxu0 0.0
      %3841 = vmatpush.msra.mxu0 0.0
      %3842 = vmatpush.msra.mxu0 0.0
      %3843 = vmatpush.msra.mxu0 0.0
      %3844 = vmatpush.msra.mxu0 0.0
      %3845 = vmatpush.msra.mxu0 0.0
      %3846 = vmatpush.msra.mxu0 0.0
      %3847 = vmatpush.msra.mxu0 0.0
      %3848 = vmatpush.msra.mxu0 0.0
      %3849 = vmatpush.msra.mxu0 %v3832
      %3850 = vmatmul.f32.gmra.mxu0 %v3830
      %v3851 = vpop.f32.mrf.mxu0
      %v3852 = vadd.f32 0.0, %v3851
      %3853 = vdwg.mxu0
      %3854 = vrot.lane.b32.xlu0 %v1779, 96
      %v3855 = vpop.permute.xlu0 %3854
      %v3857 = vsel %vm3287, %v3274, 0
      %v3859 = vsel %vm3291, %v3855, 0
      %3861 = vmatpush.msra.mxu0 0.0
      %3862 = vmatpush.msra.mxu0 0.0
      %3863 = vmatpush.msra.mxu0 0.0
      %3864 = vmatpush.msra.mxu0 0.0
      %3865 = vmatpush.msra.mxu0 0.0
      %3866 = vmatpush.msra.mxu0 0.0
      %3867 = vmatpush.msra.mxu0 0.0
      %3868 = vmatpush.msra.mxu0 0.0
      %3869 = vmatpush.msra.mxu0 0.0
      %3870 = vmatpush.msra.mxu0 0.0
      %3871 = vmatpush.msra.mxu0 0.0
      %3872 = vmatpush.msra.mxu0 0.0
      %3873 = vmatpush.msra.mxu0 0.0
      %3874 = vmatpush.msra.mxu0 0.0
      %3875 = vmatpush.msra.mxu0 0.0
      %3876 = vmatpush.msra.mxu0 %v3859
      %3877 = vmatmul.f32.gmra.mxu0 %v3857
      %v3878 = vpop.f32.mrf.mxu0
      %v3879 = vadd.f32 0.0, %v3878
      %3880 = vdwg.mxu0
      %3881 = vrot.lane.b32.xlu0 %v1781, 96
      %v3882 = vpop.permute.xlu0 %3881
      %v3884 = vsel %vm3287, %v3275, 0
      %v3886 = vsel %vm3291, %v3882, 0
      %3888 = vmatpush.msra.mxu0 0.0
      %3889 = vmatpush.msra.mxu0 0.0
      %3890 = vmatpush.msra.mxu0 0.0
      %3891 = vmatpush.msra.mxu0 0.0
      %3892 = vmatpush.msra.mxu0 0.0
      %3893 = vmatpush.msra.mxu0 0.0
      %3894 = vmatpush.msra.mxu0 0.0
      %3895 = vmatpush.msra.mxu0 0.0
      %3896 = vmatpush.msra.mxu0 0.0
      %3897 = vmatpush.msra.mxu0 0.0
      %3898 = vmatpush.msra.mxu0 0.0
      %3899 = vmatpush.msra.mxu0 0.0
      %3900 = vmatpush.msra.mxu0 0.0
      %3901 = vmatpush.msra.mxu0 0.0
      %3902 = vmatpush.msra.mxu0 0.0
      %3903 = vmatpush.msra.mxu0 %v3886
      %3904 = vmatmul.f32.gmra.mxu0 %v3884
      %v3905 = vpop.f32.mrf.mxu0
      %v3906 = vadd.f32 0.0, %v3905
      %3907 = vdwg.mxu0
      %3908 = vrot.lane.b32.xlu0 %v1783, 96
      %v3909 = vpop.permute.xlu0 %3908
      %v3911 = vsel %vm3287, %v3276, 0
      %v3913 = vsel %vm3291, %v3909, 0
      %3915 = vmatpush.msra.mxu0 0.0
      %3916 = vmatpush.msra.mxu0 0.0
      %3917 = vmatpush.msra.mxu0 0.0
      %3918 = vmatpush.msra.mxu0 0.0
      %3919 = vmatpush.msra.mxu0 0.0
      %3920 = vmatpush.msra.mxu0 0.0
      %3921 = vmatpush.msra.mxu0 0.0
      %3922 = vmatpush.msra.mxu0 0.0
      %3923 = vmatpush.msra.mxu0 0.0
      %3924 = vmatpush.msra.mxu0 0.0
      %3925 = vmatpush.msra.mxu0 0.0
      %3926 = vmatpush.msra.mxu0 0.0
      %3927 = vmatpush.msra.mxu0 0.0
      %3928 = vmatpush.msra.mxu0 0.0
      %3929 = vmatpush.msra.mxu0 0.0
      %3930 = vmatpush.msra.mxu0 %v3913
      %3931 = vmatmul.f32.gmra.mxu0 %v3911
      %v3932 = vpop.f32.mrf.mxu0
      %v3933 = vadd.f32 0.0, %v3932
      %3934 = vdwg.mxu0
      %3935 = vrot.lane.b32.xlu0 %v1793, 96
      %v3936 = vpop.permute.xlu0 %3935
      %v3938 = vsel %vm3287, %v3277, 0
      %v3940 = vsel %vm3291, %v3936, 0
      %3942 = vmatpush.msra.mxu0 0.0
      %3943 = vmatpush.msra.mxu0 0.0
      %3944 = vmatpush.msra.mxu0 0.0
      %3945 = vmatpush.msra.mxu0 0.0
      %3946 = vmatpush.msra.mxu0 0.0
      %3947 = vmatpush.msra.mxu0 0.0
      %3948 = vmatpush.msra.mxu0 0.0
      %3949 = vmatpush.msra.mxu0 0.0
      %3950 = vmatpush.msra.mxu0 0.0
      %3951 = vmatpush.msra.mxu0 0.0
      %3952 = vmatpush.msra.mxu0 0.0
      %3953 = vmatpush.msra.mxu0 0.0
      %3954 = vmatpush.msra.mxu0 0.0
      %3955 = vmatpush.msra.mxu0 0.0
      %3956 = vmatpush.msra.mxu0 0.0
      %3957 = vmatpush.msra.mxu0 %v3940
      %3958 = vmatmul.f32.gmra.mxu0 %v3938
      %v3959 = vpop.f32.mrf.mxu0
      %v3960 = vadd.f32 0.0, %v3959
      %3961 = vdwg.mxu0
      %3962 = vrot.lane.b32.xlu0 %v1795, 96
      %v3963 = vpop.permute.xlu0 %3962
      %v3965 = vsel %vm3287, %v3278, 0
      %v3967 = vsel %vm3291, %v3963, 0
      %3969 = vmatpush.msra.mxu0 0.0
      %3970 = vmatpush.msra.mxu0 0.0
      %3971 = vmatpush.msra.mxu0 0.0
      %3972 = vmatpush.msra.mxu0 0.0
      %3973 = vmatpush.msra.mxu0 0.0
      %3974 = vmatpush.msra.mxu0 0.0
      %3975 = vmatpush.msra.mxu0 0.0
      %3976 = vmatpush.msra.mxu0 0.0
      %3977 = vmatpush.msra.mxu0 0.0
      %3978 = vmatpush.msra.mxu0 0.0
      %3979 = vmatpush.msra.mxu0 0.0
      %3980 = vmatpush.msra.mxu0 0.0
      %3981 = vmatpush.msra.mxu0 0.0
      %3982 = vmatpush.msra.mxu0 0.0
      %3983 = vmatpush.msra.mxu0 0.0
      %3984 = vmatpush.msra.mxu0 %v3967
      %3985 = vmatmul.f32.gmra.mxu0 %v3965
      %v3986 = vpop.f32.mrf.mxu0
      %v3987 = vadd.f32 0.0, %v3986
      %3988 = vdwg.mxu0
      %3989 = vrot.lane.b32.xlu0 %v1797, 96
      %v3990 = vpop.permute.xlu0 %3989
      %v3992 = vsel %vm3287, %v3279, 0
      %v3994 = vsel %vm3291, %v3990, 0
      %3996 = vmatpush.msra.mxu0 0.0
      %3997 = vmatpush.msra.mxu0 0.0
      %3998 = vmatpush.msra.mxu0 0.0
      %3999 = vmatpush.msra.mxu0 0.0
      %4000 = vmatpush.msra.mxu0 0.0
      %4001 = vmatpush.msra.mxu0 0.0
      %4002 = vmatpush.msra.mxu0 0.0
      %4003 = vmatpush.msra.mxu0 0.0
      %4004 = vmatpush.msra.mxu0 0.0
      %4005 = vmatpush.msra.mxu0 0.0
      %4006 = vmatpush.msra.mxu0 0.0
      %4007 = vmatpush.msra.mxu0 0.0
      %4008 = vmatpush.msra.mxu0 0.0
      %4009 = vmatpush.msra.mxu0 0.0
      %4010 = vmatpush.msra.mxu0 0.0
      %4011 = vmatpush.msra.mxu0 %v3994
      %4012 = vmatmul.f32.gmra.mxu0 %v3992
      %v4013 = vpop.f32.mrf.mxu0
      %v4014 = vadd.f32 0.0, %v4013
      %4015 = vdwg.mxu0
      %4016 = vrot.lane.b32.xlu0 %v1799, 96
      %v4017 = vpop.permute.xlu0 %4016
      %v4019 = vsel %vm3287, %v3280, 0
      %v4021 = vsel %vm3291, %v4017, 0
      %4023 = vmatpush.msra.mxu0 0.0
      %4024 = vmatpush.msra.mxu0 0.0
      %4025 = vmatpush.msra.mxu0 0.0
      %4026 = vmatpush.msra.mxu0 0.0
      %4027 = vmatpush.msra.mxu0 0.0
      %4028 = vmatpush.msra.mxu0 0.0
      %4029 = vmatpush.msra.mxu0 0.0
      %4030 = vmatpush.msra.mxu0 0.0
      %4031 = vmatpush.msra.mxu0 0.0
      %4032 = vmatpush.msra.mxu0 0.0
      %4033 = vmatpush.msra.mxu0 0.0
      %4034 = vmatpush.msra.mxu0 0.0
      %4035 = vmatpush.msra.mxu0 0.0
      %4036 = vmatpush.msra.mxu0 0.0
      %4037 = vmatpush.msra.mxu0 0.0
      %4038 = vmatpush.msra.mxu0 %v4021
      %4039 = vmatmul.f32.gmra.mxu0 %v4019
      %v4040 = vpop.f32.mrf.mxu0
      %v4041 = vadd.f32 0.0, %v4040
      %4042 = vdwg.mxu0
      %4043 = vrot.lane.b32.xlu0 %v1801, 96
      %v4044 = vpop.permute.xlu0 %4043
      %v4046 = vsel %vm3287, %v3281, 0
      %v4048 = vsel %vm3291, %v4044, 0
      %4050 = vmatpush.msra.mxu0 0.0
      %4051 = vmatpush.msra.mxu0 0.0
      %4052 = vmatpush.msra.mxu0 0.0
      %4053 = vmatpush.msra.mxu0 0.0
      %4054 = vmatpush.msra.mxu0 0.0
      %4055 = vmatpush.msra.mxu0 0.0
      %4056 = vmatpush.msra.mxu0 0.0
      %4057 = vmatpush.msra.mxu0 0.0
      %4058 = vmatpush.msra.mxu0 0.0
      %4059 = vmatpush.msra.mxu0 0.0
      %4060 = vmatpush.msra.mxu0 0.0
      %4061 = vmatpush.msra.mxu0 0.0
      %4062 = vmatpush.msra.mxu0 0.0
      %4063 = vmatpush.msra.mxu0 0.0
      %4064 = vmatpush.msra.mxu0 0.0
      %4065 = vmatpush.msra.mxu0 %v4048
      %4066 = vmatmul.f32.gmra.mxu0 %v4046
      %v4067 = vpop.f32.mrf.mxu0
      %v4068 = vadd.f32 0.0, %v4067
      %4069 = vdwg.mxu0
      %4070 = vrot.lane.b32.xlu0 %v1803, 96
      %v4071 = vpop.permute.xlu0 %4070
      %v4073 = vsel %vm3287, %v3282, 0
      %v4075 = vsel %vm3291, %v4071, 0
      %4077 = vmatpush.msra.mxu0 0.0
      %4078 = vmatpush.msra.mxu0 0.0
      %4079 = vmatpush.msra.mxu0 0.0
      %4080 = vmatpush.msra.mxu0 0.0
      %4081 = vmatpush.msra.mxu0 0.0
      %4082 = vmatpush.msra.mxu0 0.0
      %4083 = vmatpush.msra.mxu0 0.0
      %4084 = vmatpush.msra.mxu0 0.0
      %4085 = vmatpush.msra.mxu0 0.0
      %4086 = vmatpush.msra.mxu0 0.0
      %4087 = vmatpush.msra.mxu0 0.0
      %4088 = vmatpush.msra.mxu0 0.0
      %4089 = vmatpush.msra.mxu0 0.0
      %4090 = vmatpush.msra.mxu0 0.0
      %4091 = vmatpush.msra.mxu0 0.0
      %4092 = vmatpush.msra.mxu0 %v4075
      %4093 = vmatmul.f32.gmra.mxu0 %v4073
      %v4094 = vpop.f32.mrf.mxu0
      %v4095 = vadd.f32 0.0, %v4094
      %4096 = vdwg.mxu0
      %4097 = vrot.lane.b32.xlu0 %v1805, 96
      %v4098 = vpop.permute.xlu0 %4097
      %v4100 = vsel %vm3287, %v3283, 0
      %v4102 = vsel %vm3291, %v4098, 0
      %4104 = vmatpush.msra.mxu0 0.0
      %4105 = vmatpush.msra.mxu0 0.0
      %4106 = vmatpush.msra.mxu0 0.0
      %4107 = vmatpush.msra.mxu0 0.0
      %4108 = vmatpush.msra.mxu0 0.0
      %4109 = vmatpush.msra.mxu0 0.0
      %4110 = vmatpush.msra.mxu0 0.0
      %4111 = vmatpush.msra.mxu0 0.0
      %4112 = vmatpush.msra.mxu0 0.0
      %4113 = vmatpush.msra.mxu0 0.0
      %4114 = vmatpush.msra.mxu0 0.0
      %4115 = vmatpush.msra.mxu0 0.0
      %4116 = vmatpush.msra.mxu0 0.0
      %4117 = vmatpush.msra.mxu0 0.0
      %4118 = vmatpush.msra.mxu0 0.0
      %4119 = vmatpush.msra.mxu0 %v4102
      %4120 = vmatmul.f32.gmra.mxu0 %v4100
      %v4121 = vpop.f32.mrf.mxu0
      %v4122 = vadd.f32 0.0, %v4121
      %4123 = vdwg.mxu0
      %4124 = vrot.lane.b32.xlu0 %v1807, 96
      %v4125 = vpop.permute.xlu0 %4124
      %v4127 = vsel %vm3287, %v3284, 0
      %v4129 = vsel %vm3291, %v4125, 0
      %4131 = vmatpush.msra.mxu0 0.0
      %4132 = vmatpush.msra.mxu0 0.0
      %4133 = vmatpush.msra.mxu0 0.0
      %4134 = vmatpush.msra.mxu0 0.0
      %4135 = vmatpush.msra.mxu0 0.0
      %4136 = vmatpush.msra.mxu0 0.0
      %4137 = vmatpush.msra.mxu0 0.0
      %4138 = vmatpush.msra.mxu0 0.0
      %4139 = vmatpush.msra.mxu0 0.0
      %4140 = vmatpush.msra.mxu0 0.0
      %4141 = vmatpush.msra.mxu0 0.0
      %4142 = vmatpush.msra.mxu0 0.0
      %4143 = vmatpush.msra.mxu0 0.0
      %4144 = vmatpush.msra.mxu0 0.0
      %4145 = vmatpush.msra.mxu0 0.0
      %4146 = vmatpush.msra.mxu0 %v4129
      %4147 = vmatmul.f32.gmra.mxu0 %v4127
      %v4148 = vpop.f32.mrf.mxu0
      %v4149 = vadd.f32 0.0, %v4148
      %4150 = vdwg.mxu0
      %v4151 = vsel %vm3287, %v1732, 0.0
      %4152 = vadd.xlane.f32.xlu0 %v4151
      %v4153 = vpop.xlane.xlu0 %4152
      %v4154 = vsel %vm3287, %v1733, 0.0
      %4155 = vadd.xlane.f32.xlu0 %v4154
      %v4156 = vpop.xlane.xlu0 %4155
      %v4157 = vsel %vm3287, %v1734, 0.0
      %4158 = vadd.xlane.f32.xlu0 %v4157
      %v4159 = vpop.xlane.xlu0 %4158
      %v4160 = vsel %vm3287, %v1735, 0.0
      %4161 = vadd.xlane.f32.xlu0 %v4160
      %v4162 = vpop.xlane.xlu0 %4161
      %vm4163 = vcmp.gt.f32.partialorder %v4153, 0.0
      %vm4164 = vcmp.gt.f32.partialorder %v4156, 0.0
      %vm4165 = vcmp.gt.f32.partialorder %v4159, 0.0
      %vm4166 = vcmp.gt.f32.partialorder %v4162, 0.0
      %v4167 = vsel %vm4163, 1, 0
      %v4168 = vsel %vm4164, 1, 0
      %v4169 = vsel %vm4165, 1, 0
      %v4170 = vsel %vm4166, 1, 0
      %v4171 = vcvt.s32.f32 %v4167
      %v4172 = vcvt.s32.f32 %v4168
      %v4173 = vcvt.s32.f32 %v4169
      %v4174 = vcvt.s32.f32 %v4170
      %v4179 = vperm.slane %v4171, 0
      %v4180 = vperm.slane %v4171, 1
      %v4181 = vperm.slane %v4171, 2
      %v4182 = vperm.slane %v4171, 3
      %v4183 = vperm.slane %v4171, 4
      %v4184 = vperm.slane %v4171, 5
      %v4185 = vperm.slane %v4171, 6
      %v4186 = vperm.slane %v4171, 7
      %v4187 = vperm.slane %v4172, 0
      %v4188 = vperm.slane %v4172, 1
      %v4189 = vperm.slane %v4172, 2
      %v4190 = vperm.slane %v4172, 3
      %v4191 = vperm.slane %v4172, 4
      %v4192 = vperm.slane %v4172, 5
      %v4193 = vperm.slane %v4172, 6
      %v4194 = vperm.slane %v4172, 7
      %v4195 = vperm.slane %v4173, 0
      %v4196 = vperm.slane %v4173, 1
      %v4197 = vperm.slane %v4173, 2
      %v4198 = vperm.slane %v4173, 3
      %v4199 = vperm.slane %v4173, 4
      %v4200 = vperm.slane %v4173, 5
      %v4201 = vperm.slane %v4173, 6
      %v4202 = vperm.slane %v4173, 7
      %v4203 = vperm.slane %v4174, 0
      %v4204 = vperm.slane %v4174, 1
      %v4205 = vperm.slane %v4174, 2
      %v4206 = vperm.slane %v4174, 3
      %v4207 = vperm.slane %v4174, 4
      %v4208 = vperm.slane %v4174, 5
      %v4209 = vperm.slane %v4174, 6
      %v4210 = vperm.slane %v4174, 7
      %v4243 = vmul.f32 %v3312, %v4179
      %v4244 = vmul.f32 %v3339, %v4180
      %v4245 = vmul.f32 %v3366, %v4181
      %v4246 = vmul.f32 %v3393, %v4182
      %v4247 = vmul.f32 %v3420, %v4183
      %v4248 = vmul.f32 %v3447, %v4184
      %v4249 = vmul.f32 %v3474, %v4185
      %v4250 = vmul.f32 %v3501, %v4186
      %v4251 = vmul.f32 %v3528, %v4187
      %v4252 = vmul.f32 %v3555, %v4188
      %v4253 = vmul.f32 %v3582, %v4189
      %v4254 = vmul.f32 %v3609, %v4190
      %v4255 = vmul.f32 %v3636, %v4191
      %v4256 = vmul.f32 %v3663, %v4192
      %v4257 = vmul.f32 %v3690, %v4193
      %v4258 = vmul.f32 %v3717, %v4194
      %v4259 = vmul.f32 %v3744, %v4195
      %v4260 = vmul.f32 %v3771, %v4196
      %v4261 = vmul.f32 %v3798, %v4197
      %v4262 = vmul.f32 %v3825, %v4198
      %v4263 = vmul.f32 %v3852, %v4199
      %v4264 = vmul.f32 %v3879, %v4200
      %v4265 = vmul.f32 %v3906, %v4201
      %v4266 = vmul.f32 %v3933, %v4202
      %v4267 = vmul.f32 %v3960, %v4203
      %v4268 = vmul.f32 %v3987, %v4204
      %v4269 = vmul.f32 %v4014, %v4205
      %v4270 = vmul.f32 %v4041, %v4206
      %v4271 = vmul.f32 %v4068, %v4207
      %v4272 = vmul.f32 %v4095, %v4208
      %v4273 = vmul.f32 %v4122, %v4209
      %v4274 = vmul.f32 %v4149, %v4210
      %4283 = vrot.lane.b32.xlu0 %v4251, 4
      %v4284 = vpop.permute.xlu0 %4283
      %4285 = vrot.lane.b32.xlu0 %v4252, 4
      %v4286 = vpop.permute.xlu0 %4285
      %4287 = vrot.lane.b32.xlu0 %v4253, 4
      %v4288 = vpop.permute.xlu0 %4287
      %4289 = vrot.lane.b32.xlu0 %v4254, 4
      %v4290 = vpop.permute.xlu0 %4289
      %4291 = vrot.lane.b32.xlu0 %v4255, 4
      %v4292 = vpop.permute.xlu0 %4291
      %4293 = vrot.lane.b32.xlu0 %v4256, 4
      %v4294 = vpop.permute.xlu0 %4293
      %4295 = vrot.lane.b32.xlu0 %v4257, 4
      %v4296 = vpop.permute.xlu0 %4295
      %4297 = vrot.lane.b32.xlu0 %v4258, 4
      %v4298 = vpop.permute.xlu0 %4297
      %4315 = vrot.lane.b32.xlu0 %v4259, 8
      %v4316 = vpop.permute.xlu0 %4315
      %4317 = vrot.lane.b32.xlu0 %v4260, 8
      %v4318 = vpop.permute.xlu0 %4317
      %4319 = vrot.lane.b32.xlu0 %v4261, 8
      %v4320 = vpop.permute.xlu0 %4319
      %4321 = vrot.lane.b32.xlu0 %v4262, 8
      %v4322 = vpop.permute.xlu0 %4321
      %4323 = vrot.lane.b32.xlu0 %v4263, 8
      %v4324 = vpop.permute.xlu0 %4323
      %4325 = vrot.lane.b32.xlu0 %v4264, 8
      %v4326 = vpop.permute.xlu0 %4325
      %4327 = vrot.lane.b32.xlu0 %v4265, 8
      %v4328 = vpop.permute.xlu0 %4327
      %4329 = vrot.lane.b32.xlu0 %v4266, 8
      %v4330 = vpop.permute.xlu0 %4329
      %4347 = vrot.lane.b32.xlu0 %v4267, 12
      %v4348 = vpop.permute.xlu0 %4347
      %4349 = vrot.lane.b32.xlu0 %v4268, 12
      %v4350 = vpop.permute.xlu0 %4349
      %4351 = vrot.lane.b32.xlu0 %v4269, 12
      %v4352 = vpop.permute.xlu0 %4351
      %4353 = vrot.lane.b32.xlu0 %v4270, 12
      %v4354 = vpop.permute.xlu0 %4353
      %4355 = vrot.lane.b32.xlu0 %v4271, 12
      %v4356 = vpop.permute.xlu0 %4355
      %4357 = vrot.lane.b32.xlu0 %v4272, 12
      %v4358 = vpop.permute.xlu0 %4357
      %4359 = vrot.lane.b32.xlu0 %v4273, 12
      %v4360 = vpop.permute.xlu0 %4359
      %4361 = vrot.lane.b32.xlu0 %v4274, 12
      %v4362 = vpop.permute.xlu0 %4361
      %v4371 = vsel %vm504, %v4243, %v4284
      %v4372 = vsel %vm504, %v4244, %v4286
      %v4373 = vsel %vm504, %v4245, %v4288
      %v4374 = vsel %vm504, %v4246, %v4290
      %v4375 = vsel %vm504, %v4247, %v4292
      %v4376 = vsel %vm504, %v4248, %v4294
      %v4377 = vsel %vm504, %v4249, %v4296
      %v4378 = vsel %vm504, %v4250, %v4298
      %v4379 = vsel %vm927, %v4371, %v4316
      %v4380 = vsel %vm927, %v4372, %v4318
      %v4381 = vsel %vm927, %v4373, %v4320
      %v4382 = vsel %vm927, %v4374, %v4322
      %v4383 = vsel %vm927, %v4375, %v4324
      %v4384 = vsel %vm927, %v4376, %v4326
      %v4385 = vsel %vm927, %v4377, %v4328
      %v4386 = vsel %vm927, %v4378, %v4330
      %v4387 = vsel %vm1559, %v4379, %v4348
      %v4388 = vsel %vm1559, %v4380, %v4350
      %v4389 = vsel %vm1559, %v4381, %v4352
      %v4390 = vsel %vm1559, %v4382, %v4354
      %v4391 = vsel %vm1559, %v4383, %v4356
      %v4392 = vsel %vm1559, %v4384, %v4358
      %v4393 = vsel %vm1559, %v4385, %v4360
      %v4394 = vsel %vm1559, %v4386, %v4362
      %v4395 = vmul.f32 %v4387, 0.5
      %v4396 = vmul.f32 %v4388, 0.5
      %v4397 = vmul.f32 %v4389, 0.5
      %v4398 = vmul.f32 %v4390, 0.5
      %v4399 = vmul.f32 %v4391, 0.5
      %v4400 = vmul.f32 %v4392, 0.5
      %v4401 = vmul.f32 %v4393, 0.5
      %v4402 = vmul.f32 %v4394, 0.5
      %v4403 = vmul.f32 %v4387, 0.70710677
      %v4404 = vmul.f32 %v4388, 0.70710677
      %v4405 = vmul.f32 %v4389, 0.70710677
      %v4406 = vmul.f32 %v4390, 0.70710677
      %v4407 = vmul.f32 %v4391, 0.70710677
      %v4408 = vmul.f32 %v4392, 0.70710677
      %v4409 = vmul.f32 %v4393, 0.70710677
      %v4410 = vmul.f32 %v4394, 0.70710677
      %vm4411 = vcmp.lt.f32.partialorder %v4403, 0.0
      %vm4412 = vcmp.lt.f32.partialorder %v4404, 0.0
      %vm4413 = vcmp.lt.f32.partialorder %v4405, 0.0
      %vm4414 = vcmp.lt.f32.partialorder %v4406, 0.0
      %vm4415 = vcmp.lt.f32.partialorder %v4407, 0.0
      %vm4416 = vcmp.lt.f32.partialorder %v4408, 0.0
      %vm4417 = vcmp.lt.f32.partialorder %v4409, 0.0
      %vm4418 = vcmp.lt.f32.partialorder %v4410, 0.0
      %v4419 = vsel %vm4411, -1.0, 1.0
      %v4420 = vsel %vm4412, -1.0, 1.0
      %v4421 = vsel %vm4413, -1.0, 1.0
      %v4422 = vsel %vm4414, -1.0, 1.0
      %v4423 = vsel %vm4415, -1.0, 1.0
      %v4424 = vsel %vm4416, -1.0, 1.0
      %v4425 = vsel %vm4417, -1.0, 1.0
      %v4426 = vsel %vm4418, -1.0, 1.0
      %v4427 = vand.u32 2147483647, %v4403
      %v4428 = vand.u32 2147483647, %v4404
      %v4429 = vand.u32 2147483647, %v4405
      %v4430 = vand.u32 2147483647, %v4406
      %v4431 = vand.u32 2147483647, %v4407
      %v4432 = vand.u32 2147483647, %v4408
      %v4433 = vand.u32 2147483647, %v4409
      %v4434 = vand.u32 2147483647, %v4410
      %v4435 = vmul.f32 %v4427, 0.3275911
      %v4436 = vmul.f32 %v4428, 0.3275911
      %v4437 = vmul.f32 %v4429, 0.3275911
      %v4438 = vmul.f32 %v4430, 0.3275911
      %v4439 = vmul.f32 %v4431, 0.3275911
      %v4440 = vmul.f32 %v4432, 0.3275911
      %v4441 = vmul.f32 %v4433, 0.3275911
      %v4442 = vmul.f32 %v4434, 0.3275911
      %v4443 = vadd.f32 %v4435, 1.0
      %v4444 = vadd.f32 %v4436, 1.0
      %v4445 = vadd.f32 %v4437, 1.0
      %v4446 = vadd.f32 %v4438, 1.0
      %v4447 = vadd.f32 %v4439, 1.0
      %v4448 = vadd.f32 %v4440, 1.0
      %v4449 = vadd.f32 %v4441, 1.0
      %v4450 = vadd.f32 %v4442, 1.0
      %v4451 = vrcp.pop %v4443
      %v4452 = vmul.f32 %v4443, %v4451
      %v4453 = vsub.f32 1.0, %v4452
      %v4454 = vmul.f32 %v4451, %v4453
      %v4455 = vadd.f32 %v4451, %v4454
      %vm4456 = vweird.f32 %v4443
      %vm4457 = vweird.f32 %v4451
      %vm4458 = vmor %vm4456, %vm4457
      %v4459 = vsel %vm4458, %v4451, %v4455
      %v4460 = vand.u32 2147483647, %v4443
      %vm4461 = vcmp.eq.f32.partialorder %v4460, 8.507059e+37
      %v4462 = vand.u32 %v4443, 2147483648
      %v4463 = vor.u32 1.1754944e-38, %v4462
      %v4464 = vsel %vm4461, %v4463, %v4459
      %v4465 = vmul.f32 1.0, %v4464
      %v4466 = vrcp.pop %v4444
      %v4467 = vmul.f32 %v4444, %v4466
      %v4468 = vsub.f32 1.0, %v4467
      %v4469 = vmul.f32 %v4466, %v4468
      %v4470 = vadd.f32 %v4466, %v4469
      %vm4471 = vweird.f32 %v4444
      %vm4472 = vweird.f32 %v4466
      %vm4473 = vmor %vm4471, %vm4472
      %v4474 = vsel %vm4473, %v4466, %v4470
      %v4475 = vand.u32 2147483647, %v4444
      %vm4476 = vcmp.eq.f32.partialorder %v4475, 8.507059e+37
      %v4477 = vand.u32 %v4444, 2147483648
      %v4478 = vor.u32 1.1754944e-38, %v4477
      %v4479 = vsel %vm4476, %v4478, %v4474
      %v4480 = vmul.f32 1.0, %v4479
      %v4481 = vrcp.pop %v4445
      %v4482 = vmul.f32 %v4445, %v4481
      %v4483 = vsub.f32 1.0, %v4482
      %v4484 = vmul.f32 %v4481, %v4483
      %v4485 = vadd.f32 %v4481, %v4484
      %vm4486 = vweird.f32 %v4445
      %vm4487 = vweird.f32 %v4481
      %vm4488 = vmor %vm4486, %vm4487
      %v4489 = vsel %vm4488, %v4481, %v4485
      %v4490 = vand.u32 2147483647, %v4445
      %vm4491 = vcmp.eq.f32.partialorder %v4490, 8.507059e+37
      %v4492 = vand.u32 %v4445, 2147483648
      %v4493 = vor.u32 1.1754944e-38, %v4492
      %v4494 = vsel %vm4491, %v4493, %v4489
      %v4495 = vmul.f32 1.0, %v4494
      %v4496 = vrcp.pop %v4446
      %v4497 = vmul.f32 %v4446, %v4496
      %v4498 = vsub.f32 1.0, %v4497
      %v4499 = vmul.f32 %v4496, %v4498
      %v4500 = vadd.f32 %v4496, %v4499
      %vm4501 = vweird.f32 %v4446
      %vm4502 = vweird.f32 %v4496
      %vm4503 = vmor %vm4501, %vm4502
      %v4504 = vsel %vm4503, %v4496, %v4500
      %v4505 = vand.u32 2147483647, %v4446
      %vm4506 = vcmp.eq.f32.partialorder %v4505, 8.507059e+37
      %v4507 = vand.u32 %v4446, 2147483648
      %v4508 = vor.u32 1.1754944e-38, %v4507
      %v4509 = vsel %vm4506, %v4508, %v4504
      %v4510 = vmul.f32 1.0, %v4509
      %v4511 = vrcp.pop %v4447
      %v4512 = vmul.f32 %v4447, %v4511
      %v4513 = vsub.f32 1.0, %v4512
      %v4514 = vmul.f32 %v4511, %v4513
      %v4515 = vadd.f32 %v4511, %v4514
      %vm4516 = vweird.f32 %v4447
      %vm4517 = vweird.f32 %v4511
      %vm4518 = vmor %vm4516, %vm4517
      %v4519 = vsel %vm4518, %v4511, %v4515
      %v4520 = vand.u32 2147483647, %v4447
      %vm4521 = vcmp.eq.f32.partialorder %v4520, 8.507059e+37
      %v4522 = vand.u32 %v4447, 2147483648
      %v4523 = vor.u32 1.1754944e-38, %v4522
      %v4524 = vsel %vm4521, %v4523, %v4519
      %v4525 = vmul.f32 1.0, %v4524
      %v4526 = vrcp.pop %v4448
      %v4527 = vmul.f32 %v4448, %v4526
      %v4528 = vsub.f32 1.0, %v4527
      %v4529 = vmul.f32 %v4526, %v4528
      %v4530 = vadd.f32 %v4526, %v4529
      %vm4531 = vweird.f32 %v4448
      %vm4532 = vweird.f32 %v4526
      %vm4533 = vmor %vm4531, %vm4532
      %v4534 = vsel %vm4533, %v4526, %v4530
      %v4535 = vand.u32 2147483647, %v4448
      %vm4536 = vcmp.eq.f32.partialorder %v4535, 8.507059e+37
      %v4537 = vand.u32 %v4448, 2147483648
      %v4538 = vor.u32 1.1754944e-38, %v4537
      %v4539 = vsel %vm4536, %v4538, %v4534
      %v4540 = vmul.f32 1.0, %v4539
      %v4541 = vrcp.pop %v4449
      %v4542 = vmul.f32 %v4449, %v4541
      %v4543 = vsub.f32 1.0, %v4542
      %v4544 = vmul.f32 %v4541, %v4543
      %v4545 = vadd.f32 %v4541, %v4544
      %vm4546 = vweird.f32 %v4449
      %vm4547 = vweird.f32 %v4541
      %vm4548 = vmor %vm4546, %vm4547
      %v4549 = vsel %vm4548, %v4541, %v4545
      %v4550 = vand.u32 2147483647, %v4449
      %vm4551 = vcmp.eq.f32.partialorder %v4550, 8.507059e+37
      %v4552 = vand.u32 %v4449, 2147483648
      %v4553 = vor.u32 1.1754944e-38, %v4552
      %v4554 = vsel %vm4551, %v4553, %v4549
      %v4555 = vmul.f32 1.0, %v4554
      %v4556 = vrcp.pop %v4450
      %v4557 = vmul.f32 %v4450, %v4556
      %v4558 = vsub.f32 1.0, %v4557
      %v4559 = vmul.f32 %v4556, %v4558
      %v4560 = vadd.f32 %v4556, %v4559
      %vm4561 = vweird.f32 %v4450
      %vm4562 = vweird.f32 %v4556
      %vm4563 = vmor %vm4561, %vm4562
      %v4564 = vsel %vm4563, %v4556, %v4560
      %v4565 = vand.u32 2147483647, %v4450
      %vm4566 = vcmp.eq.f32.partialorder %v4565, 8.507059e+37
      %v4567 = vand.u32 %v4450, 2147483648
      %v4568 = vor.u32 1.1754944e-38, %v4567
      %v4569 = vsel %vm4566, %v4568, %v4564
      %v4570 = vmul.f32 1.0, %v4569
      %v4571 = vmul.f32 %v4465, 1.0614054
      %v4572 = vmul.f32 %v4480, 1.0614054
      %v4573 = vmul.f32 %v4495, 1.0614054
      %v4574 = vmul.f32 %v4510, 1.0614054
      %v4575 = vmul.f32 %v4525, 1.0614054
      %v4576 = vmul.f32 %v4540, 1.0614054
      %v4577 = vmul.f32 %v4555, 1.0614054
      %v4578 = vmul.f32 %v4570, 1.0614054
      %v4579 = vadd.f32 %v4571, -1.4531521
      %v4580 = vadd.f32 %v4572, -1.4531521
      %v4581 = vadd.f32 %v4573, -1.4531521
      %v4582 = vadd.f32 %v4574, -1.4531521
      %v4583 = vadd.f32 %v4575, -1.4531521
      %v4584 = vadd.f32 %v4576, -1.4531521
      %v4585 = vadd.f32 %v4577, -1.4531521
      %v4586 = vadd.f32 %v4578, -1.4531521
      %v4587 = vmul.f32 %v4579, %v4465
      %v4588 = vmul.f32 %v4580, %v4480
      %v4589 = vmul.f32 %v4581, %v4495
      %v4590 = vmul.f32 %v4582, %v4510
      %v4591 = vmul.f32 %v4583, %v4525
      %v4592 = vmul.f32 %v4584, %v4540
      %v4593 = vmul.f32 %v4585, %v4555
      %v4594 = vmul.f32 %v4586, %v4570
      %v4595 = vadd.f32 %v4587, 1.4214138
      %v4596 = vadd.f32 %v4588, 1.4214138
      %v4597 = vadd.f32 %v4589, 1.4214138
      %v4598 = vadd.f32 %v4590, 1.4214138
      %v4599 = vadd.f32 %v4591, 1.4214138
      %v4600 = vadd.f32 %v4592, 1.4214138
      %v4601 = vadd.f32 %v4593, 1.4214138
      %v4602 = vadd.f32 %v4594, 1.4214138
      %v4603 = vmul.f32 %v4595, %v4465
      %v4604 = vmul.f32 %v4596, %v4480
      %v4605 = vmul.f32 %v4597, %v4495
      %v4606 = vmul.f32 %v4598, %v4510
      %v4607 = vmul.f32 %v4599, %v4525
      %v4608 = vmul.f32 %v4600, %v4540
      %v4609 = vmul.f32 %v4601, %v4555
      %v4610 = vmul.f32 %v4602, %v4570
      %v4611 = vadd.f32 %v4603, -0.28449672
      %v4612 = vadd.f32 %v4604, -0.28449672
      %v4613 = vadd.f32 %v4605, -0.28449672
      %v4614 = vadd.f32 %v4606, -0.28449672
      %v4615 = vadd.f32 %v4607, -0.28449672
      %v4616 = vadd.f32 %v4608, -0.28449672
      %v4617 = vadd.f32 %v4609, -0.28449672
      %v4618 = vadd.f32 %v4610, -0.28449672
      %v4619 = vmul.f32 %v4611, %v4465
      %v4620 = vmul.f32 %v4612, %v4480
      %v4621 = vmul.f32 %v4613, %v4495
      %v4622 = vmul.f32 %v4614, %v4510
      %v4623 = vmul.f32 %v4615, %v4525
      %v4624 = vmul.f32 %v4616, %v4540
      %v4625 = vmul.f32 %v4617, %v4555
      %v4626 = vmul.f32 %v4618, %v4570
      %v4627 = vadd.f32 %v4619, 0.2548296
      %v4628 = vadd.f32 %v4620, 0.2548296
      %v4629 = vadd.f32 %v4621, 0.2548296
      %v4630 = vadd.f32 %v4622, 0.2548296
      %v4631 = vadd.f32 %v4623, 0.2548296
      %v4632 = vadd.f32 %v4624, 0.2548296
      %v4633 = vadd.f32 %v4625, 0.2548296
      %v4634 = vadd.f32 %v4626, 0.2548296
      %v4635 = vmul.f32 %v4627, %v4465
      %v4636 = vmul.f32 %v4628, %v4480
      %v4637 = vmul.f32 %v4629, %v4495
      %v4638 = vmul.f32 %v4630, %v4510
      %v4639 = vmul.f32 %v4631, %v4525
      %v4640 = vmul.f32 %v4632, %v4540
      %v4641 = vmul.f32 %v4633, %v4555
      %v4642 = vmul.f32 %v4634, %v4570
      %v4643 = vsub.f32 0.0, %v4427
      %v4644 = vsub.f32 0.0, %v4428
      %v4645 = vsub.f32 0.0, %v4429
      %v4646 = vsub.f32 0.0, %v4430
      %v4647 = vsub.f32 0.0, %v4431
      %v4648 = vsub.f32 0.0, %v4432
      %v4649 = vsub.f32 0.0, %v4433
      %v4650 = vsub.f32 0.0, %v4434
      %v4651 = vmul.f32 %v4643, %v4427
      %v4652 = vmul.f32 %v4644, %v4428
      %v4653 = vmul.f32 %v4645, %v4429
      %v4654 = vmul.f32 %v4646, %v4430
      %v4655 = vmul.f32 %v4647, %v4431
      %v4656 = vmul.f32 %v4648, %v4432
      %v4657 = vmul.f32 %v4649, %v4433
      %v4658 = vmul.f32 %v4650, %v4434
      %v4659 = vmul.f32 %v4651, 1.442695
      %v4660 = vpow.pop %v4659
      %v4661 = vmul.f32 %v4652, 1.442695
      %v4662 = vpow.pop %v4661
      %v4663 = vmul.f32 %v4653, 1.442695
      %v4664 = vpow.pop %v4663
      %v4665 = vmul.f32 %v4654, 1.442695
      %v4666 = vpow.pop %v4665
      %v4667 = vmul.f32 %v4655, 1.442695
      %v4668 = vpow.pop %v4667
      %v4669 = vmul.f32 %v4656, 1.442695
      %v4670 = vpow.pop %v4669
      %v4671 = vmul.f32 %v4657, 1.442695
      %v4672 = vpow.pop %v4671
      %v4673 = vmul.f32 %v4658, 1.442695
      %v4674 = vpow.pop %v4673
      %v4675 = vmul.f32 %v4635, %v4660
      %v4676 = vmul.f32 %v4636, %v4662
      %v4677 = vmul.f32 %v4637, %v4664
      %v4678 = vmul.f32 %v4638, %v4666
      %v4679 = vmul.f32 %v4639, %v4668
      %v4680 = vmul.f32 %v4640, %v4670
      %v4681 = vmul.f32 %v4641, %v4672
      %v4682 = vmul.f32 %v4642, %v4674
      %v4683 = vsub.f32 1.0, %v4675
      %v4684 = vsub.f32 1.0, %v4676
      %v4685 = vsub.f32 1.0, %v4677
      %v4686 = vsub.f32 1.0, %v4678
      %v4687 = vsub.f32 1.0, %v4679
      %v4688 = vsub.f32 1.0, %v4680
      %v4689 = vsub.f32 1.0, %v4681
      %v4690 = vsub.f32 1.0, %v4682
      %v4691 = vmul.f32 %v4419, %v4683
      %v4692 = vmul.f32 %v4420, %v4684
      %v4693 = vmul.f32 %v4421, %v4685
      %v4694 = vmul.f32 %v4422, %v4686
      %v4695 = vmul.f32 %v4423, %v4687
      %v4696 = vmul.f32 %v4424, %v4688
      %v4697 = vmul.f32 %v4425, %v4689
      %v4698 = vmul.f32 %v4426, %v4690
      %v4699 = vadd.f32 %v4691, 1.0
      %v4700 = vadd.f32 %v4692, 1.0
      %v4701 = vadd.f32 %v4693, 1.0
      %v4702 = vadd.f32 %v4694, 1.0
      %v4703 = vadd.f32 %v4695, 1.0
      %v4704 = vadd.f32 %v4696, 1.0
      %v4705 = vadd.f32 %v4697, 1.0
      %v4706 = vadd.f32 %v4698, 1.0
      %v4707 = vmul.f32 %v4395, %v4699
      %v4708 = vmul.f32 %v4396, %v4700
      %v4709 = vmul.f32 %v4397, %v4701
      %v4710 = vmul.f32 %v4398, %v4702
      %v4711 = vmul.f32 %v4399, %v4703
      %v4712 = vmul.f32 %v4400, %v4704
      %v4713 = vmul.f32 %v4401, %v4705
      %v4714 = vmul.f32 %v4402, %v4706
      %v4715 = vld [vmem:[%s3 + $0xf0] sm:$0xff]
      %v4716 = vld [vmem:[%s3 + $0xf8] sm:$0xff]
      %v4717 = vld [vmem:[%s3 + $0x100] sm:$0x1]
      %v4718 = vperm.slane %v4717, 0
      %4727 = vst [vmem:[#allocation1] ss:$4 sm:$0xff] %v4707
      %s4728 = scalar_lea.vmem [#allocation1], 1
      %4729 = vst [vmem:[%s4728] ss:$4 sm:$0xff] %v4708
      %s4730 = scalar_lea.vmem [#allocation1], 2
      %4731 = vst [vmem:[%s4730] ss:$4 sm:$0xff] %v4709
      %s4732 = scalar_lea.vmem [#allocation1], 3
      %4733 = vst [vmem:[%s4732] ss:$4 sm:$0xff] %v4710
      %s4734 = scalar_lea.vmem [#allocation1], 32
      %4735 = vst [vmem:[%s4734] ss:$4 sm:$0xff] %v4711
      %s4736 = scalar_lea.vmem [#allocation1], 33
      %4737 = vst [vmem:[%s4736] ss:$4 sm:$0xff] %v4712
      %s4738 = scalar_lea.vmem [#allocation1], 34
      %4739 = vst [vmem:[%s4738] ss:$4 sm:$0xff] %v4713
      %s4740 = scalar_lea.vmem [#allocation1], 35
      %4741 = vst [vmem:[%s4740] ss:$4 sm:$0xff] %v4714
      %v4742 = vld.sshfl [vmem:[#allocation1] sm:$0xff pattern:$0x73625140]
      %v4743 = vld.sshfl [vmem:[#allocation1 + $0x20] sm:$0xff pattern:$0x73625140]
      %v4744 = vsel %vm999, %v4742, 0
      %v4746 = vsel %vm999, %v4743, 0
      %4748 = vmatpush.msra.mxu0 0.0
      %4749 = vmatpush.msra.mxu0 0.0
      %4750 = vmatpush.msra.mxu0 0.0
      %4751 = vmatpush.msra.mxu0 0.0
      %4752 = vmatpush.msra.mxu0 0.0
      %4753 = vmatpush.msra.mxu0 0.0
      %4754 = vmatpush.msra.mxu0 0.0
      %4755 = vmatpush.msra.mxu0 0.0
      %4756 = vmatpush.msra.mxu0 0.0
      %4757 = vmatpush.msra.mxu0 0.0
      %4758 = vmatpush.msra.mxu0 0.0
      %4759 = vmatpush.msra.mxu0 0.0
      %4760 = vmatpush.msra.mxu0 0.0
      %4761 = vmatpush.msra.mxu0 0.0
      %4762 = vmatpush.msra.mxu0 %v4716
      %4763 = vmatpush.msra.mxu0 %v4715
      %4764 = vmatmul.f32.gmra.mxu0 %v4744
      %v4765 = vpop.f32.mrf.mxu0
      %v4766 = vadd.f32 %v4718, %v4765
      %4767 = vmatmul.f32.gmra.mxu0 %v4746
      %v4768 = vpop.f32.mrf.mxu0
      %v4769 = vadd.f32 %v4718, %v4768
      %4770 = vdwg.mxu0
      %v4771 = vmul.f32 %v4766, %v391
      %v4772 = vmul.f32 %v4769, %v393
      %v4773 = vadd.f32 %v4771, %v1677
      %v4774 = vadd.f32 %v4772, %v1678
      %v4775 = vld [vmem:[%s3 + $0x108] sm:$0xff]
      %v4776 = vld [vmem:[%s3 + $0x110] sm:$0xff]
      %v4777 = vld [vmem:[%s3 + $0x118] sm:$0xff]
      %v4778 = vld [vmem:[%s3 + $0x120] sm:$0xff]
      %v4779 = vld [vmem:[%s3 + $0x128] sm:$0x1]
      %v4780 = vperm.slane %v4779, 0
      %v4782 = vsel %vm263, %v4773, 0
      %v4785 = vsel %vm263, %v4774, 0
      %4787 = vmatpush.msra.mxu0 0.0
      %4788 = vmatpush.msra.mxu0 0.0
      %4789 = vmatpush.msra.mxu0 0.0
      %4790 = vmatpush.msra.mxu0 0.0
      %4791 = vmatpush.msra.mxu0 0.0
      %4792 = vmatpush.msra.mxu0 0.0
      %4793 = vmatpush.msra.mxu0 0.0
      %4794 = vmatpush.msra.mxu0 0.0
      %4795 = vmatpush.msra.mxu0 0.0
      %4796 = vmatpush.msra.mxu0 0.0
      %4797 = vmatpush.msra.mxu0 0.0
      %4798 = vmatpush.msra.mxu0 0.0
      %4799 = vmatpush.msra.mxu0 %v4778
      %4800 = vmatpush.msra.mxu0 %v4777
      %4801 = vmatpush.msra.mxu0 %v4776
      %4802 = vmatpush.msra.mxu0 %v4775
      %4803 = vmatmul.f32.gmra.mxu0 %v4782
      %v4804 = vpop.f32.mrf.mxu0
      %v4805 = vadd.f32 %v4780, %v4804
      %4806 = vmatmul.f32.gmra.mxu0 %v4785
      %v4807 = vpop.f32.mrf.mxu0
      %v4808 = vadd.f32 %v4780, %v4807
      %4809 = vdwg.mxu0
      %v4812 = vadd.f32 %v4805, %v242
      %v4813 = vadd.f32 %v4808, %v244
      %v4814 = vmul.f32 %v4812, %v391
      %v4815 = vmul.f32 %v4813, %v393
      %v4817 = vrot.slane %v4814, 4
      %4818 = vrot.lane.b32.xlu0 %v4817, 32
      %v4819 = vpop.permute.xlu0 %4818
      %4822 = vrot.lane.b32.xlu0 %v4815, 64
      %v4823 = vpop.permute.xlu0 %4822
      %v4825 = vrot.slane %v4815, 4
      %4826 = vrot.lane.b32.xlu0 %v4825, 96
      %v4827 = vpop.permute.xlu0 %4826
      %v4829 = vsel %vm263, %v4814, %v4819
      %v4830 = vsel %vm266, %v4829, %v4823
      %vm4831 = vcmask 785408
      %v4832 = vsel %vm4831, %v4830, %v4827
      %4833 = vst [vmem:[%s232] sm:$0xf] %v4832
      %p4834 = scmp.lt.s32.totalorder %s15, 1
      %s4835 = scalar_select %p4834, %s15, 1
      %s4836 = smul.addr %s4835, 4
      %s4837 = scalar_lea.vmem %s4, %s4836
      // Predicated region
      $region37: #{ltc_block_forward.1} parent=35 // pred_check
        %p4838 = pneg %p132
      $region38: #{ltc_block_forward.1} parent=35 // pred_check_branch
        %4840 = sbr.rel (%p4838) target = $region40
      $region39: #{ltc_block_forward.1} parent=35 // pred_region
        _
      $region40: #{ltc_block_forward.1} parent=35 // pred_fallthru
        _
    $region36: #{ltc_block_forward.1} parent=5 // pred_fallthru
      _
    %p4841 = scmp.le.s32.totalorder 2, %s10
    // Predicated region
    $region41: #{ltc_block_forward.1} parent=5 // pred_check
      %p4842 = pneg %p4841
    $region42: #{ltc_block_forward.1} parent=5 // pred_check_branch
      %4844 = sbr.rel (%p4842) target = $region44
    $region43: #{ltc_block_forward.1} parent=5 // pred_region
      %s4845 = ssub.s32 %s10, 2
      // Predicated region
      $region45: #{ltc_block_forward.1} parent=43 // pred_check
        %p4846 = pneg %p138
      $region46: #{ltc_block_forward.1} parent=43 // pred_check_branch
        %4848 = sbr.rel (%p4846) target = $region48
      $region47: #{ltc_block_forward.1} parent=43 // pred_region
        %p4849 = scmp.lt.s32.totalorder %s16, 1
        %s4850 = scalar_select %p4849, %s16, 1
        %s4851 = smul.addr %s4850, 4
        %s4852 = scalar_lea.vmem %s4, %s4851
      $region48: #{ltc_block_forward.1} parent=43 // pred_fallthru
        _
    $region44: #{ltc_block_forward.1} parent=5 // pred_fallthru
      _
  $region6: #{ltc_block_forward.1} parent=0 // loop_footer
    %s14 = sadd.s32 1, %s10
  $region7: #{ltc_block_forward.1} parent=0 // loop_footer_branch
    %9 = sbr.rel target = $region3
  $region8: #{ltc_block_forward.1} parent=0 // loop_exit
    _

</llo_original>
